<compile_context>
chip_gen: v7x
topology: tpu7x:2x2x1
jax: 0.10.0
libtpu: 0.0.40
codegen_flags: <defaults>
</compile_context>

<pallas_src>
import functools

import jax
import jax.numpy as jnp
from jax import lax
from jax.experimental import pallas as pl
from jax.experimental.pallas import tpu as pltpu


def bottleneck_kernel(x_ref, w1_ref, b1_ref, w2_ref, b2_ref, w3_ref, b3_ref,
                      out_ref, pad_ref, *, dilation, tile_h):
    """One (batch, row-tile) output block per grid step.

    x_ref   : (1, H + 2d, W, Cin)   bf16 whole H-padded image (resident per n)
    w1_ref  : (Cin, Cmid)           bf16, BN1 scale folded in
    w2_ref  : (3, 3*Cmid, Cmid)     bf16, per-kh 3x3 conv weights, BN2 folded
    w3_ref  : (Cmid, Cout)          bf16, BN3 folded
    b*_ref  : (1, C)                f32 folded BN bias
    out_ref : (1, TH, W, Cout)      f32 output row tile
    pad_ref : VMEM (3, TH+2d, W, Cmid) bf16 scratch:
              plane 0/1/2 = h1 shifted by -d / 0 / +d columns (edge-masked).
    """
    d = dilation
    th = tile_h
    _, hp, w, cin = x_ref.shape
    cmid = w1_ref.shape[1]
    cout = w3_ref.shape[1]
    win = th + 2 * d

    t = pl.program_id(1)
    n_t = pl.num_programs(1)
    row0 = pl.multiple_of(t * th, th)          # window start in padded-H coords

    # ---- conv1 (1x1) + bias + ReLU over the (TH + 2d)-row halo window ------
    xwin = x_ref[0, pl.ds(row0, win), :, :]                    # (win, W, Cin) bf16
    h1 = jnp.dot(xwin.reshape(win * w, cin), w1_ref[...],
                 preferred_element_type=jnp.float32)
    h1 = jnp.maximum(h1 + b1_ref[...], 0.0)                    # (win*W, Cmid) f32

    # Pre-shifted column taps for the 3x3 conv: shift by +-d along W via a roll
    # on the flattened row index (XLU) + an edge mask (columns that would read
    # outside the image are zeroed).  All later scratch accesses are aligned.
    ridx = lax.broadcasted_iota(jnp.int32, (win * w, 1), 0)
    colpos = ridx % w
    h1_l = jnp.where(colpos >= d, pltpu.roll(h1, d, axis=0), 0.0)          # col c-d
    h1_r = jnp.where(colpos < w - d, pltpu.roll(h1, win * w - d, axis=0), 0.0)  # col c+d

    dt = pad_ref.dtype
    pad_ref[0] = h1_l.astype(dt).reshape(win, w, cmid)
    pad_ref[1] = h1.astype(dt).reshape(win, w, cmid)
    pad_ref[2] = h1_r.astype(dt).reshape(win, w, cmid)

    # Zero the d halo rows at the image top/bottom (the host-padded zero input
    # rows turn into relu(b1) != 0 after conv1, so they must be re-zeroed).
    zrow = jnp.zeros((3, d, w, cmid), dt)

    @pl.when(t == 0)                                           # image top edge
    def _():
        pad_ref[:, 0:d, :, :] = zrow

    @pl.when(t == n_t - 1)                                     # image bottom edge
    def _():
        pad_ref[:, th + d:win, :, :] = zrow

    # ---- conv2 (3x3, dilation=d): three K=3*Cmid matmuls, f32 accumulation ---
    def kh_taps(kh):
        return jnp.concatenate(
            [pad_ref[kw, kh * d:kh * d + th, :, :].reshape(th * w, cmid)
             for kw in range(3)], axis=-1)                     # (TH*W, 3*Cmid) bf16

    acc = jnp.dot(kh_taps(0), w2_ref[0], preferred_element_type=jnp.float32)
    acc = acc + jnp.dot(kh_taps(1), w2_ref[1], preferred_element_type=jnp.float32)
    acc = acc + jnp.dot(kh_taps(2), w2_ref[2], preferred_element_type=jnp.float32)
    h2 = jnp.maximum(acc + b2_ref[...], 0.0)                   # (TH*W, Cmid) f32

    # ---- conv3 (1x1) + bias, residual add + ReLU ----------------------------
    h3 = jnp.dot(h2.astype(jnp.bfloat16), w3_ref[...],
                 preferred_element_type=jnp.float32) + b3_ref[...]
    res = x_ref[0, pl.ds(row0 + d, th), :, :].reshape(th * w, cout)
    out_ref[0] = jnp.maximum(h3 + res.astype(jnp.float32), 0.0).reshape(th, w, cout)


def _vmem_limit_bytes():
    """Per-generation VMEM limit (~48 MiB on v7x, ~96 MiB on v5e/v6e)."""
    try:
        cap = int(pltpu.get_tpu_info().vmem_capacity_bytes)
    except Exception:
        cap = 0
    if cap <= 0:
        return 48 * 1024 * 1024
    return max(32 * 1024 * 1024, int(min(0.75 * cap, cap - 16 * 1024 * 1024)))


def _pick_tile_h(H, W, Cin, Cmid, Cout, dilation, vmem_limit_bytes):
    """Largest row-tile (divisor of H, >= dilation) whose per-step VMEM fits."""
    d = dilation
    budget = int(0.5 * vmem_limit_bytes)       # headroom for compiler scratch

    def step_bytes(th):
        win = th + 2 * d
        weights = (Cin * Cmid + 9 * Cmid * Cmid + Cmid * Cout) * 2 + (2 * Cmid + Cout) * 4
        resident_x = (H + 2 * d) * W * Cin * 2
        scratch = 3 * win * W * Cmid * 2                       # bf16 shifted planes
        h1_live = win * W * Cmid * 4 * 2                       # f32 h1 + shifted copy
        conv2_live = th * W * (3 * Cmid * 2 + Cmid * 4)        # taps + f32 acc
        out_live = th * W * Cout * (4 * 2 + 4 + 2)             # out(x2) + h3 + residual
        return weights + resident_x + scratch + h1_live + conv2_live + out_live

    cands = [t for t in range(1, H + 1) if H % t == 0 and t >= d]
    if not cands:
        return H
    for th in sorted(cands, reverse=True):
        if step_bytes(th) <= budget:
            return th
    return min(cands)


def _build_pallas_call(N, H, W, Cin, Cmid, Cout, dilation, tile_h,
                       vmem_limit, single_buffer):
    d = dilation
    Hp = H + 2 * d

    def spec(shape, index_map):
        if single_buffer:
            # Block index is constant across the row-tile axis: one buffer is enough.
            return pl.BlockSpec(shape, index_map, pipeline_mode=pl.Buffered(1))
        return pl.BlockSpec(shape, index_map)

    kern = functools.partial(bottleneck_kernel, dilation=d, tile_h=tile_h)

    flops = 2 * N * H * W * (Cin * Cmid + 9 * Cmid * Cmid + Cmid * Cout)
    bytes_accessed = (N * Hp * W * Cin * 2 + N * H * W * Cout * 4
                      + (Cin * Cmid + 9 * Cmid * Cmid + Cmid * Cout) * 2
                      + (2 * Cmid + Cout) * 4)

    return pl.pallas_call(
        kern,
        out_shape=jax.ShapeDtypeStruct((N, H, W, Cout), jnp.float32),
        grid=(N, H // tile_h),
        in_specs=[
            spec((1, Hp, W, Cin), lambda n, t: (n, 0, 0, 0)),
            spec((Cin, Cmid), lambda n, t: (0, 0)),
            spec((1, Cmid), lambda n, t: (0, 0)),
            spec((3, 3 * Cmid, Cmid), lambda n, t: (0, 0, 0)),
            spec((1, Cmid), lambda n, t: (0, 0)),
            spec((Cmid, Cout), lambda n, t: (0, 0)),
            spec((1, Cout), lambda n, t: (0, 0)),
        ],
        out_specs=pl.BlockSpec((1, tile_h, W, Cout), lambda n, t: (n, t, 0, 0)),
        scratch_shapes=[
            pltpu.VMEM((3, tile_h + 2 * d, W, Cmid), jnp.bfloat16),
        ],
        compiler_params=pltpu.CompilerParams(
            dimension_semantics=("parallel", "parallel"),
            vmem_limit_bytes=vmem_limit),
        cost_estimate=pl.CostEstimate(
            flops=flops, transcendentals=0, bytes_accessed=bytes_accessed),
    )


def bottleneck_forward_nhwc(x_nhwc, folded_params, *, dilation=1, tile_h=None):
    """Native NHWC entry point (keeps NCHW<->NHWC transposes out of the hot path)."""
    w1, b1, w2r, b2, w3, b3 = folded_params
    N, H, W, Cin = x_nhwc.shape
    Cmid = w1.shape[1]
    Cout = w3.shape[1]
    assert Cout == Cin, "downsample=None requires inplanes == planes * 4"
    d = int(dilation)
    assert W > d

    vmem_limit = _vmem_limit_bytes()
    if tile_h is None:
        tile_h = _pick_tile_h(H, W, Cin, Cmid, Cout, d, vmem_limit)
    # TODO(synk): support H not divisible by tile_h (pad H + mask the tail rows
    # against the true H via scalar prefetch) for DeepLab sizes 33/65/129.
    assert H % tile_h == 0 and tile_h >= d

    # Pad H once (bf16) so every row tile reads a uniform (TH + 2d)-row window.
    # TODO(synk): for very large feature maps on v7x, replace the resident
    # H-padded input block with per-row-tile manual DMA (memory_space=pl.ANY +
    # pltpu.make_async_copy) and drop this host-side pad by clamping the edge
    # windows in-kernel.
    x_pad = jnp.pad(x_nhwc.astype(jnp.bfloat16), ((0, 0), (d, d), (0, 0), (0, 0)))

    last_err = None
    for single_buffer in (True, False):
        try:
            call = _build_pallas_call(N, H, W, Cin, Cmid, Cout, d, tile_h,
                                      vmem_limit, single_buffer)
            return call(x_pad, w1, b1, w2r, b2, w3, b3)
        except Exception as e:        # fall back to default double buffering
            last_err = e
    raise last_err


def bottleneck_forward(x_nchw, folded_params, *, dilation=1, tile_h=None):
    """PyTorch-layout (NCHW) compatibility wrapper around the NHWC kernel."""
    x = jnp.transpose(x_nchw, (0, 2, 3, 1))
    y = bottleneck_forward_nhwc(x, folded_params, dilation=dilation, tile_h=tile_h)
    return jnp.transpose(y, (0, 3, 1, 2))


def fold_bn_into_weights(raw_params, dtype=jnp.bfloat16):
    """Fold BN scale into conv weights (bf16); keep only the bias for the kernel."""
    w1, s1, b1, w2, s2, b2, w3, s3, b3 = raw_params
    cmid = w2.shape[2]
    w1f = (w1 * s1).astype(dtype)                                   # (Cin, Cmid)
    w2f = (w2 * s2).reshape(3, 3 * cmid, w2.shape[3]).astype(dtype)  # (3, 3*Cmid, Cmid)
    w3f = (w3 * s3).astype(dtype)                                   # (Cmid, Cout)
    return (w1f, b1.astype(jnp.float32), w2f, b2.astype(jnp.float32),
            w3f, b3.astype(jnp.float32))


def bottleneck_reference(x_nchw, raw_params, *, dilation=1):
    """Pure-JAX f32 reference (lax convs) for validation."""
    w1, s1, b1, w2, s2, b2, w3, s3, b3 = raw_params
    dn = ("NHWC", "HWIO", "NHWC")
    x = jnp.transpose(x_nchw, (0, 2, 3, 1))
    h = jax.lax.conv_general_dilated(
        x, w1.reshape(1, 1, *w1.shape), (1, 1), "VALID", dimension_numbers=dn)
    h = jnp.maximum(h * s1 + b1, 0.0)
    h = jax.lax.conv_general_dilated(
        h, w2, (1, 1), [(dilation, dilation)] * 2,
        rhs_dilation=(dilation, dilation), dimension_numbers=dn)
    h = jnp.maximum(h * s2 + b2, 0.0)
    h = jax.lax.conv_general_dilated(
        h, w3.reshape(1, 1, *w3.shape), (1, 1), "VALID", dimension_numbers=dn)
    h = h * s3 + b3
    out = jnp.maximum(h + x, 0.0)
    return jnp.transpose(out, (0, 3, 1, 2))


def make_params(key, inplanes, planes, eps=1e-5):
    """Deterministic weights + folded-BN scale/bias.  expansion = 4."""
    cout = planes * 4
    ks = jax.random.split(key, 12)

    def bn_fold(kg, kb, km, kv, c):
        gamma = 1.0 + 0.1 * jax.random.normal(kg, (c,), jnp.float32)
        beta = 0.1 * jax.random.normal(kb, (c,), jnp.float32)
        mean = 0.1 * jax.random.normal(km, (c,), jnp.float32)
        var = 0.5 + 0.5 * jnp.abs(jax.random.normal(kv, (c,), jnp.float32))
        scale = gamma * jax.lax.rsqrt(var + eps)
        bias = beta - mean * scale
        return scale.reshape(1, c), bias.reshape(1, c)

    w1 = 0.1 * jax.random.normal(ks[0], (inplanes, planes), jnp.float32)
    s1, b1 = bn_fold(ks[1], ks[2], ks[3], ks[4], planes)
    w2 = 0.1 * jax.random.normal(ks[5], (3, 3, planes, planes), jnp.float32)
    s2, b2 = bn_fold(ks[6], ks[7], ks[8], ks[9], planes)
    w3 = 0.1 * jax.random.normal(ks[10], (planes, cout), jnp.float32)
    s3, b3 = bn_fold(ks[11], ks[0], ks[5], ks[10], cout)
    return (w1, s1, b1, w2, s2, b2, w3, s3, b3)


if __name__ == "__main__":
    # TODO(synk): SynchronizedBatchNorm2d training-mode (cross-replica batch-stat)
    # behaviour is not modelled; BN is folded as inference-mode scale/bias.
    N, planes, H, W = 2, 4, 16, 16
    inplanes = planes * 4                         # required when downsample is None

    key = jax.random.PRNGKey(0)
    kx, kp = jax.random.split(key)
    x = jax.random.normal(kx, (N, inplanes, H, W), jnp.float32)   # NCHW like PyTorch
    raw_params = make_params(kp, inplanes, planes)
    params = fold_bn_into_weights(raw_params)

    # Exercise both the multi-row-tile path (dilation=1, tile_h=8 -> 2 tiles)
    # and the auto-picked tile path (dilation=2).
    for dil, th in ((1, 8), (2, None)):
        y = bottleneck_forward(x, params, dilation=dil, tile_h=th)
        jax.block_until_ready(y)
        y_ref = bottleneck_reference(x, raw_params, dilation=dil)
        assert y.shape == (N, inplanes, H, W)
        max_err = float(jnp.max(jnp.abs(y - y_ref)))
        assert jnp.allclose(y, y_ref, atol=6e-2, rtol=6e-2), max_err  # bf16 I/O + MXU path

    print("KERNEL_OK")
</pallas_src>

<mosaic_0001>
module attributes {stable_mosaic.version = 11 : i64} {
  func.func @bottleneck_kernel(%arg0: i32, %arg1: i32, %arg2: memref<1x18x16x16xbf16, #tpu.memory_space<vmem>>, %arg3: memref<16x4xbf16, #tpu.memory_space<vmem>>, %arg4: memref<1x4xf32, #tpu.memory_space<vmem>>, %arg5: memref<3x12x4xbf16, #tpu.memory_space<vmem>>, %arg6: memref<1x4xf32, #tpu.memory_space<vmem>>, %arg7: memref<4x16xbf16, #tpu.memory_space<vmem>>, %arg8: memref<1x16xf32, #tpu.memory_space<vmem>>, %arg9: memref<1x8x16x16xf32, #tpu.memory_space<vmem>>, %arg10: memref<3x10x16x4xbf16, #tpu.memory_space<vmem>>) attributes {dimension_semantics = [#tpu.dimension_semantics<parallel>, #tpu.dimension_semantics<parallel>], iteration_bounds = array<i64: 2, 2>, scalar_prefetch = 0 : i64, scratch_operands = 1 : i64, tpu.core_type = #tpu.core_type<tc>, window_params = [{pipeline_mode = #tpu.pipeline_mode<synchronous>, transform_indices = @transform_0, window_bounds = array<i64: 1, 18, 16, 16>}, {pipeline_mode = #tpu.pipeline_mode<synchronous>, transform_indices = @transform_1, window_bounds = array<i64: 16, 4>}, {pipeline_mode = #tpu.pipeline_mode<synchronous>, transform_indices = @transform_2, window_bounds = array<i64: 1, 4>}, {pipeline_mode = #tpu.pipeline_mode<synchronous>, transform_indices = @transform_3, window_bounds = array<i64: 3, 12, 4>}, {pipeline_mode = #tpu.pipeline_mode<synchronous>, transform_indices = @transform_4, window_bounds = array<i64: 1, 4>}, {pipeline_mode = #tpu.pipeline_mode<synchronous>, transform_indices = @transform_5, window_bounds = array<i64: 4, 16>}, {pipeline_mode = #tpu.pipeline_mode<synchronous>, transform_indices = @transform_6, window_bounds = array<i64: 1, 16>}, {transform_indices = @transform_7, window_bounds = array<i64: 1, 8, 16, 16>}]} {
    %c8_i32 = arith.constant 8 : i32
    %0 = arith.muli %arg1, %c8_i32 : i32
    %1 = tpu.assume_multiple %0, 8 : i32
    %c0 = arith.constant 0 : index
    %2 = arith.index_cast %1 : i32 to index
    %c0_0 = arith.constant 0 : index
    %c0_1 = arith.constant 0 : index
    %3 = vector.load %arg2[%c0, %2, %c0_0, %c0_1] : memref<1x18x16x16xbf16, #tpu.memory_space<vmem>>, vector<1x10x16x16xbf16>
    %4 = vector.shape_cast %3 : vector<1x10x16x16xbf16> to vector<10x16x16xbf16>
    %5 = vector.shape_cast %4 : vector<10x16x16xbf16> to vector<160x16xbf16>
    %c0_2 = arith.constant 0 : index
    %c0_3 = arith.constant 0 : index
    %6 = vector.load %arg3[%c0_2, %c0_3] : memref<16x4xbf16, #tpu.memory_space<vmem>>, vector<16x4xbf16>
    %cst = arith.constant dense<0.000000e+00> : vector<160x4xf32>
    %7 = tpu.matmul %5, %6, %cst {dimension_numbers = #tpu.dot_dimension_numbers<[1], [0], [0], [1], [0, 0, 1, 1], [], []>} : vector<160x16xbf16>, vector<16x4xbf16>, vector<160x4xf32> -> vector<160x4xf32>
    %c0_4 = arith.constant 0 : index
    %c0_5 = arith.constant 0 : index
    %8 = vector.load %arg4[%c0_4, %c0_5] : memref<1x4xf32, #tpu.memory_space<vmem>>, vector<1x4xf32>
    %9 = vector.broadcast %8 : vector<1x4xf32> to vector<160x4xf32>
    %10 = arith.addf %7, %9 : vector<160x4xf32>
    %cst_6 = arith.constant 0.000000e+00 : f32
    %11 = vector.broadcast %cst_6 : f32 to vector<160x4xf32>
    %12 = arith.maximumf %10, %11 : vector<160x4xf32>
    %13 = tpu.iota {dimensions = array<i32: 0>} : vector<160x1xi32>
    %c16_i32 = arith.constant 16 : i32
    %c0_i32 = arith.constant 0 : i32
    %14 = arith.cmpi eq, %c16_i32, %c0_i32 : i32
    %c1_i32 = arith.constant 1 : i32
    %15 = arith.select %14, %c1_i32, %c16_i32 : i32
    %16 = vector.broadcast %15 : i32 to vector<160x1xi32>
    %17 = arith.remsi %13, %16 : vector<160x1xi32>
    %c0_i32_7 = arith.constant 0 : i32
    %18 = vector.broadcast %c0_i32_7 : i32 to vector<160x1xi32>
    %19 = arith.cmpi ne, %17, %18 : vector<160x1xi32>
    %c0_i32_8 = arith.constant 0 : i32
    %20 = vector.broadcast %c0_i32_8 : i32 to vector<160x1xi32>
    %21 = arith.cmpi slt, %17, %20 : vector<160x1xi32>
    %c0_i32_9 = arith.constant 0 : i32
    %22 = arith.cmpi slt, %15, %c0_i32_9 : i32
    %23 = vector.broadcast %22 : i1 to vector<160x1xi1>
    %24 = vector.broadcast %23 : vector<160x1xi1> to vector<160x1xi1>
    %25 = arith.xori %21, %24 : vector<160x1xi1>
    %26 = arith.andi %25, %19 : vector<160x1xi1>
    %27 = vector.broadcast %15 : i32 to vector<160x1xi32>
    %28 = arith.addi %17, %27 : vector<160x1xi32>
    %29 = arith.select %26, %28, %17 : vector<160x1xi1>, vector<160x1xi32>
    %c1_i32_10 = arith.constant 1 : i32
    %30 = vector.broadcast %c1_i32_10 : i32 to vector<160x1xi32>
    %31 = arith.cmpi sge, %29, %30 : vector<160x1xi32>
    %c1_i32_11 = arith.constant 1 : i32
    %32 = tpu.dynamic_rotate %12 by %c1_i32_11 dim 0 : vector<160x4xf32>, i32 -> vector<160x4xf32>
    %cst_12 = arith.constant 0.000000e+00 : f32
    %33 = vector.shape_cast %31 : vector<160x1xi1> to vector<160x1xi1>
    %34 = vector.broadcast %33 : vector<160x1xi1> to vector<160x4xi1>
    %35 = vector.broadcast %cst_12 : f32 to vector<160x4xf32>
    %36 = arith.select %34, %32, %35 : vector<160x4xi1>, vector<160x4xf32>
    %c15_i32 = arith.constant 15 : i32
    %37 = vector.broadcast %c15_i32 : i32 to vector<160x1xi32>
    %38 = arith.cmpi slt, %29, %37 : vector<160x1xi32>
    %c159_i32 = arith.constant 159 : i32
    %39 = tpu.dynamic_rotate %12 by %c159_i32 dim 0 : vector<160x4xf32>, i32 -> vector<160x4xf32>
    %cst_13 = arith.constant 0.000000e+00 : f32
    %40 = vector.shape_cast %38 : vector<160x1xi1> to vector<160x1xi1>
    %41 = vector.broadcast %40 : vector<160x1xi1> to vector<160x4xi1>
    %42 = vector.broadcast %cst_13 : f32 to vector<160x4xf32>
    %43 = arith.select %41, %39, %42 : vector<160x4xi1>, vector<160x4xf32>
    %44 = arith.truncf %36 : vector<160x4xf32> to vector<160x4xbf16>
    %45 = vector.shape_cast %44 : vector<160x4xbf16> to vector<10x16x4xbf16>
    %c0_14 = arith.constant 0 : index
    %c0_15 = arith.constant 0 : index
    %c0_16 = arith.constant 0 : index
    %c0_17 = arith.constant 0 : index
    %46 = vector.load %arg10[%c0_14, %c0_15, %c0_16, %c0_17] : memref<3x10x16x4xbf16, #tpu.memory_space<vmem>>, vector<1x10x16x4xbf16>
    %47 = vector.shape_cast %46 : vector<1x10x16x4xbf16> to vector<10x16x4xbf16>
    %48 = vector.shape_cast %45 : vector<10x16x4xbf16> to vector<1x10x16x4xbf16>
    tpu.vector_store %arg10[%c0_14, %c0_15, %c0_16, %c0_17], %48 {strides = array<i32>} : memref<3x10x16x4xbf16, #tpu.memory_space<vmem>>, vector<1x10x16x4xbf16>,
    %49 = arith.truncf %12 : vector<160x4xf32> to vector<160x4xbf16>
    %50 = vector.shape_cast %49 : vector<160x4xbf16> to vector<10x16x4xbf16>
    %c1 = arith.constant 1 : index
    %c0_18 = arith.constant 0 : index
    %c0_19 = arith.constant 0 : index
    %c0_20 = arith.constant 0 : index
    %51 = vector.load %arg10[%c1, %c0_18, %c0_19, %c0_20] : memref<3x10x16x4xbf16, #tpu.memory_space<vmem>>, vector<1x10x16x4xbf16>
    %52 = vector.shape_cast %51 : vector<1x10x16x4xbf16> to vector<10x16x4xbf16>
    %53 = vector.shape_cast %50 : vector<10x16x4xbf16> to vector<1x10x16x4xbf16>
    tpu.vector_store %arg10[%c1, %c0_18, %c0_19, %c0_20], %53 {strides = array<i32>} : memref<3x10x16x4xbf16, #tpu.memory_space<vmem>>, vector<1x10x16x4xbf16>,
    %54 = arith.truncf %43 : vector<160x4xf32> to vector<160x4xbf16>
    %55 = vector.shape_cast %54 : vector<160x4xbf16> to vector<10x16x4xbf16>
    %c2 = arith.constant 2 : index
    %c0_21 = arith.constant 0 : index
    %c0_22 = arith.constant 0 : index
    %c0_23 = arith.constant 0 : index
    %56 = vector.load %arg10[%c2, %c0_21, %c0_22, %c0_23] : memref<3x10x16x4xbf16, #tpu.memory_space<vmem>>, vector<1x10x16x4xbf16>
    %57 = vector.shape_cast %56 : vector<1x10x16x4xbf16> to vector<10x16x4xbf16>
    %58 = vector.shape_cast %55 : vector<10x16x4xbf16> to vector<1x10x16x4xbf16>
    tpu.vector_store %arg10[%c2, %c0_21, %c0_22, %c0_23], %58 {strides = array<i32>} : memref<3x10x16x4xbf16, #tpu.memory_space<vmem>>, vector<1x10x16x4xbf16>,
    %cst_24 = arith.constant 0.000000e+00 : bf16
    %59 = vector.broadcast %cst_24 : bf16 to vector<3x1x16x4xbf16>
    %c0_i32_25 = arith.constant 0 : i32
    %60 = arith.cmpi eq, %arg1, %c0_i32_25 : i32
    %61 = arith.extui %60 : i1 to i32
    %c0_i32_26 = arith.constant 0 : i32
    %62 = arith.cmpi ne, %61, %c0_i32_26 : i32
    scf.if %62 {
      %c0_94 = arith.constant 0 : index
      %c0_95 = arith.constant 0 : index
      %c0_96 = arith.constant 0 : index
      %c0_97 = arith.constant 0 : index
      %131 = vector.load %arg10[%c0_94, %c0_95, %c0_96, %c0_97] : memref<3x10x16x4xbf16, #tpu.memory_space<vmem>>, vector<3x1x16x4xbf16>
      tpu.vector_store %arg10[%c0_94, %c0_95, %c0_96, %c0_97], %59 {strides = array<i32>} : memref<3x10x16x4xbf16, #tpu.memory_space<vmem>>, vector<3x1x16x4xbf16>,
    } else {
    }
    %c1_i32_27 = arith.constant 1 : i32
    %63 = arith.cmpi eq, %arg1, %c1_i32_27 : i32
    %64 = arith.extui %63 : i1 to i32
    %c0_i32_28 = arith.constant 0 : i32
    %65 = arith.cmpi ne, %64, %c0_i32_28 : i32
    scf.if %65 {
      %c0_94 = arith.constant 0 : index
      %c9 = arith.constant 9 : index
      %c0_95 = arith.constant 0 : index
      %c0_96 = arith.constant 0 : index
      %131 = vector.load %arg10[%c0_94, %c9, %c0_95, %c0_96] : memref<3x10x16x4xbf16, #tpu.memory_space<vmem>>, vector<3x1x16x4xbf16>
      tpu.vector_store %arg10[%c0_94, %c9, %c0_95, %c0_96], %59 {strides = array<i32>} : memref<3x10x16x4xbf16, #tpu.memory_space<vmem>>, vector<3x1x16x4xbf16>,
    } else {
    }
    %c0_29 = arith.constant 0 : index
    %c0_30 = arith.constant 0 : index
    %c0_31 = arith.constant 0 : index
    %c0_32 = arith.constant 0 : index
    %66 = vector.load %arg10[%c0_29, %c0_30, %c0_31, %c0_32] : memref<3x10x16x4xbf16, #tpu.memory_space<vmem>>, vector<1x8x16x4xbf16>
    %67 = vector.shape_cast %66 : vector<1x8x16x4xbf16> to vector<8x16x4xbf16>
    %68 = vector.shape_cast %67 : vector<8x16x4xbf16> to vector<128x4xbf16>
    %c1_33 = arith.constant 1 : index
    %c0_34 = arith.constant 0 : index
    %c0_35 = arith.constant 0 : index
    %c0_36 = arith.constant 0 : index
    %69 = vector.load %arg10[%c1_33, %c0_34, %c0_35, %c0_36] : memref<3x10x16x4xbf16, #tpu.memory_space<vmem>>, vector<1x8x16x4xbf16>
    %70 = vector.shape_cast %69 : vector<1x8x16x4xbf16> to vector<8x16x4xbf16>
    %71 = vector.shape_cast %70 : vector<8x16x4xbf16> to vector<128x4xbf16>
    %c2_37 = arith.constant 2 : index
    %c0_38 = arith.constant 0 : index
    %c0_39 = arith.constant 0 : index
    %c0_40 = arith.constant 0 : index
    %72 = vector.load %arg10[%c2_37, %c0_38, %c0_39, %c0_40] : memref<3x10x16x4xbf16, #tpu.memory_space<vmem>>, vector<1x8x16x4xbf16>
    %73 = vector.shape_cast %72 : vector<1x8x16x4xbf16> to vector<8x16x4xbf16>
    %74 = vector.shape_cast %73 : vector<8x16x4xbf16> to vector<128x4xbf16>
    %75 = tpu.concatenate %68, %71, %74 in 1 : vector<128x4xbf16>, vector<128x4xbf16>, vector<128x4xbf16> -> vector<128x12xbf16>
    %c0_41 = arith.constant 0 : index
    %c0_42 = arith.constant 0 : index
    %c0_43 = arith.constant 0 : index
    %76 = vector.load %arg5[%c0_41, %c0_42, %c0_43] : memref<3x12x4xbf16, #tpu.memory_space<vmem>>, vector<1x12x4xbf16>
    %77 = vector.shape_cast %76 : vector<1x12x4xbf16> to vector<12x4xbf16>
    %cst_44 = arith.constant dense<0.000000e+00> : vector<128x4xf32>
    %78 = tpu.matmul %75, %77, %cst_44 {dimension_numbers = #tpu.dot_dimension_numbers<[1], [0], [0], [1], [0, 0, 1, 1], [], []>} : vector<128x12xbf16>, vector<12x4xbf16>, vector<128x4xf32> -> vector<128x4xf32>
    %c0_45 = arith.constant 0 : index
    %c1_46 = arith.constant 1 : index
    %c0_47 = arith.constant 0 : index
    %c0_48 = arith.constant 0 : index
    %79 = vector.load %arg10[%c0_45, %c1_46, %c0_47, %c0_48] : memref<3x10x16x4xbf16, #tpu.memory_space<vmem>>, vector<1x8x16x4xbf16>
    %80 = vector.shape_cast %79 : vector<1x8x16x4xbf16> to vector<8x16x4xbf16>
    %81 = vector.shape_cast %80 : vector<8x16x4xbf16> to vector<128x4xbf16>
    %c1_49 = arith.constant 1 : index
    %c1_50 = arith.constant 1 : index
    %c0_51 = arith.constant 0 : index
    %c0_52 = arith.constant 0 : index
    %82 = vector.load %arg10[%c1_49, %c1_50, %c0_51, %c0_52] : memref<3x10x16x4xbf16, #tpu.memory_space<vmem>>, vector<1x8x16x4xbf16>
    %83 = vector.shape_cast %82 : vector<1x8x16x4xbf16> to vector<8x16x4xbf16>
    %84 = vector.shape_cast %83 : vector<8x16x4xbf16> to vector<128x4xbf16>
    %c2_53 = arith.constant 2 : index
    %c1_54 = arith.constant 1 : index
    %c0_55 = arith.constant 0 : index
    %c0_56 = arith.constant 0 : index
    %85 = vector.load %arg10[%c2_53, %c1_54, %c0_55, %c0_56] : memref<3x10x16x4xbf16, #tpu.memory_space<vmem>>, vector<1x8x16x4xbf16>
    %86 = vector.shape_cast %85 : vector<1x8x16x4xbf16> to vector<8x16x4xbf16>
    %87 = vector.shape_cast %86 : vector<8x16x4xbf16> to vector<128x4xbf16>
    %88 = tpu.concatenate %81, %84, %87 in 1 : vector<128x4xbf16>, vector<128x4xbf16>, vector<128x4xbf16> -> vector<128x12xbf16>
    %c1_57 = arith.constant 1 : index
    %c0_58 = arith.constant 0 : index
    %c0_59 = arith.constant 0 : index
    %89 = vector.load %arg5[%c1_57, %c0_58, %c0_59] : memref<3x12x4xbf16, #tpu.memory_space<vmem>>, vector<1x12x4xbf16>
    %90 = vector.shape_cast %89 : vector<1x12x4xbf16> to vector<12x4xbf16>
    %cst_60 = arith.constant dense<0.000000e+00> : vector<128x4xf32>
    %91 = tpu.matmul %88, %90, %cst_60 {dimension_numbers = #tpu.dot_dimension_numbers<[1], [0], [0], [1], [0, 0, 1, 1], [], []>} : vector<128x12xbf16>, vector<12x4xbf16>, vector<128x4xf32> -> vector<128x4xf32>
    %92 = arith.addf %78, %91 : vector<128x4xf32>
    %c0_61 = arith.constant 0 : index
    %c2_62 = arith.constant 2 : index
    %c0_63 = arith.constant 0 : index
    %c0_64 = arith.constant 0 : index
    %93 = vector.load %arg10[%c0_61, %c2_62, %c0_63, %c0_64] : memref<3x10x16x4xbf16, #tpu.memory_space<vmem>>, vector<1x8x16x4xbf16>
    %94 = vector.shape_cast %93 : vector<1x8x16x4xbf16> to vector<8x16x4xbf16>
    %95 = vector.shape_cast %94 : vector<8x16x4xbf16> to vector<128x4xbf16>
    %c1_65 = arith.constant 1 : index
    %c2_66 = arith.constant 2 : index
    %c0_67 = arith.constant 0 : index
    %c0_68 = arith.constant 0 : index
    %96 = vector.load %arg10[%c1_65, %c2_66, %c0_67, %c0_68] : memref<3x10x16x4xbf16, #tpu.memory_space<vmem>>, vector<1x8x16x4xbf16>
    %97 = vector.shape_cast %96 : vector<1x8x16x4xbf16> to vector<8x16x4xbf16>
    %98 = vector.shape_cast %97 : vector<8x16x4xbf16> to vector<128x4xbf16>
    %c2_69 = arith.constant 2 : index
    %c2_70 = arith.constant 2 : index
    %c0_71 = arith.constant 0 : index
    %c0_72 = arith.constant 0 : index
    %99 = vector.load %arg10[%c2_69, %c2_70, %c0_71, %c0_72] : memref<3x10x16x4xbf16, #tpu.memory_space<vmem>>, vector<1x8x16x4xbf16>
    %100 = vector.shape_cast %99 : vector<1x8x16x4xbf16> to vector<8x16x4xbf16>
    %101 = vector.shape_cast %100 : vector<8x16x4xbf16> to vector<128x4xbf16>
    %102 = tpu.concatenate %95, %98, %101 in 1 : vector<128x4xbf16>, vector<128x4xbf16>, vector<128x4xbf16> -> vector<128x12xbf16>
    %c2_73 = arith.constant 2 : index
    %c0_74 = arith.constant 0 : index
    %c0_75 = arith.constant 0 : index
    %103 = vector.load %arg5[%c2_73, %c0_74, %c0_75] : memref<3x12x4xbf16, #tpu.memory_space<vmem>>, vector<1x12x4xbf16>
    %104 = vector.shape_cast %103 : vector<1x12x4xbf16> to vector<12x4xbf16>
    %cst_76 = arith.constant dense<0.000000e+00> : vector<128x4xf32>
    %105 = tpu.matmul %102, %104, %cst_76 {dimension_numbers = #tpu.dot_dimension_numbers<[1], [0], [0], [1], [0, 0, 1, 1], [], []>} : vector<128x12xbf16>, vector<12x4xbf16>, vector<128x4xf32> -> vector<128x4xf32>
    %106 = arith.addf %92, %105 : vector<128x4xf32>
    %c0_77 = arith.constant 0 : index
    %c0_78 = arith.constant 0 : index
    %107 = vector.load %arg6[%c0_77, %c0_78] : memref<1x4xf32, #tpu.memory_space<vmem>>, vector<1x4xf32>
    %108 = vector.broadcast %107 : vector<1x4xf32> to vector<128x4xf32>
    %109 = arith.addf %106, %108 : vector<128x4xf32>
    %cst_79 = arith.constant 0.000000e+00 : f32
    %110 = vector.broadcast %cst_79 : f32 to vector<128x4xf32>
    %111 = arith.maximumf %109, %110 : vector<128x4xf32>
    %112 = arith.truncf %111 : vector<128x4xf32> to vector<128x4xbf16>
    %c0_80 = arith.constant 0 : index
    %c0_81 = arith.constant 0 : index
    %113 = vector.load %arg7[%c0_80, %c0_81] : memref<4x16xbf16, #tpu.memory_space<vmem>>, vector<4x16xbf16>
    %cst_82 = arith.constant dense<0.000000e+00> : vector<128x16xf32>
    %114 = tpu.matmul %112, %113, %cst_82 {dimension_numbers = #tpu.dot_dimension_numbers<[1], [0], [0], [1], [0, 0, 1, 1], [], []>} : vector<128x4xbf16>, vector<4x16xbf16>, vector<128x16xf32> -> vector<128x16xf32>
    %c0_83 = arith.constant 0 : index
    %c0_84 = arith.constant 0 : index
    %115 = vector.load %arg8[%c0_83, %c0_84] : memref<1x16xf32, #tpu.memory_space<vmem>>, vector<1x16xf32>
    %116 = vector.broadcast %115 : vector<1x16xf32> to vector<128x16xf32>
    %117 = arith.addf %114, %116 : vector<128x16xf32>
    %c1_i32_85 = arith.constant 1 : i32
    %118 = arith.addi %1, %c1_i32_85 : i32
    %c0_86 = arith.constant 0 : index
    %119 = arith.index_cast %118 : i32 to index
    %c0_87 = arith.constant 0 : index
    %c0_88 = arith.constant 0 : index
    %120 = vector.load %arg2[%c0_86, %119, %c0_87, %c0_88] : memref<1x18x16x16xbf16, #tpu.memory_space<vmem>>, vector<1x8x16x16xbf16>
    %121 = vector.shape_cast %120 : vector<1x8x16x16xbf16> to vector<8x16x16xbf16>
    %122 = vector.shape_cast %121 : vector<8x16x16xbf16> to vector<128x16xbf16>
    %123 = arith.extf %122 : vector<128x16xbf16> to vector<128x16xf32>
    %124 = arith.addf %117, %123 : vector<128x16xf32>
    %cst_89 = arith.constant 0.000000e+00 : f32
    %125 = vector.broadcast %cst_89 : f32 to vector<128x16xf32>
    %126 = arith.maximumf %124, %125 : vector<128x16xf32>
    %127 = vector.shape_cast %126 : vector<128x16xf32> to vector<8x16x16xf32>
    %c0_90 = arith.constant 0 : index
    %c0_91 = arith.constant 0 : index
    %c0_92 = arith.constant 0 : index
    %c0_93 = arith.constant 0 : index
    %128 = vector.load %arg9[%c0_90, %c0_91, %c0_92, %c0_93] : memref<1x8x16x16xf32, #tpu.memory_space<vmem>>, vector<1x8x16x16xf32>
    %129 = vector.shape_cast %128 : vector<1x8x16x16xf32> to vector<8x16x16xf32>
    %130 = vector.shape_cast %127 : vector<8x16x16xf32> to vector<1x8x16x16xf32>
    tpu.vector_store %arg9[%c0_90, %c0_91, %c0_92, %c0_93], %130 {strides = array<i32>} : memref<1x8x16x16xf32, #tpu.memory_space<vmem>>, vector<1x8x16x16xf32>,
    return
  }
  func.func @transform_0(%arg0: i32, %arg1: i32) -> (i32, i32, i32, i32) {
    %c0_i32 = arith.constant 0 : i32
    %c0_i32_0 = arith.constant 0 : i32
    %c0_i32_1 = arith.constant 0 : i32
    %c0_i32_2 = arith.constant 0 : i32
    return %arg0, %c0_i32, %c0_i32_0, %c0_i32_1 : i32, i32, i32, i32
  }
  func.func @transform_1(%arg0: i32, %arg1: i32) -> (i32, i32) {
    %c0_i32 = arith.constant 0 : i32
    %c0_i32_0 = arith.constant 0 : i32
    %c0_i32_1 = arith.constant 0 : i32
    return %c0_i32, %c0_i32_0 : i32, i32
  }
  func.func @transform_2(%arg0: i32, %arg1: i32) -> (i32, i32) {
    %c0_i32 = arith.constant 0 : i32
    %c0_i32_0 = arith.constant 0 : i32
    %c0_i32_1 = arith.constant 0 : i32
    return %c0_i32, %c0_i32_0 : i32, i32
  }
  func.func @transform_3(%arg0: i32, %arg1: i32) -> (i32, i32, i32) {
    %c0_i32 = arith.constant 0 : i32
    %c0_i32_0 = arith.constant 0 : i32
    %c0_i32_1 = arith.constant 0 : i32
    %c0_i32_2 = arith.constant 0 : i32
    return %c0_i32, %c0_i32_0, %c0_i32_1 : i32, i32, i32
  }
  func.func @transform_4(%arg0: i32, %arg1: i32) -> (i32, i32) {
    %c0_i32 = arith.constant 0 : i32
    %c0_i32_0 = arith.constant 0 : i32
    %c0_i32_1 = arith.constant 0 : i32
    return %c0_i32, %c0_i32_0 : i32, i32
  }
  func.func @transform_5(%arg0: i32, %arg1: i32) -> (i32, i32) {
    %c0_i32 = arith.constant 0 : i32
    %c0_i32_0 = arith.constant 0 : i32
    %c0_i32_1 = arith.constant 0 : i32
    return %c0_i32, %c0_i32_0 : i32, i32
  }
  func.func @transform_6(%arg0: i32, %arg1: i32) -> (i32, i32) {
    %c0_i32 = arith.constant 0 : i32
    %c0_i32_0 = arith.constant 0 : i32
    %c0_i32_1 = arith.constant 0 : i32
    return %c0_i32, %c0_i32_0 : i32, i32
  }
  func.func @transform_7(%arg0: i32, %arg1: i32) -> (i32, i32, i32, i32) {
    %c0_i32 = arith.constant 0 : i32
    %c0_i32_0 = arith.constant 0 : i32
    %c0_i32_1 = arith.constant 0 : i32
    return %arg0, %arg1, %c0_i32, %c0_i32_0 : i32, i32, i32, i32
  }
}

module attributes {stable_mosaic.version = 11 : i64} {
  func.func @bottleneck_kernel(%arg0: i32, %arg1: i32, %arg2: memref<1x18x16x16xbf16, #tpu.memory_space<vmem>>, %arg3: memref<16x4xbf16, #tpu.memory_space<vmem>>, %arg4: memref<1x4xf32, #tpu.memory_space<vmem>>, %arg5: memref<3x12x4xbf16, #tpu.memory_space<vmem>>, %arg6: memref<1x4xf32, #tpu.memory_space<vmem>>, %arg7: memref<4x16xbf16, #tpu.memory_space<vmem>>, %arg8: memref<1x16xf32, #tpu.memory_space<vmem>>, %arg9: memref<1x8x16x16xf32, #tpu.memory_space<vmem>>, %arg10: memref<3x10x16x4xbf16, #tpu.memory_space<vmem>>) attributes {dimension_semantics = [#tpu.dimension_semantics<parallel>, #tpu.dimension_semantics<parallel>], iteration_bounds = array<i64: 2, 2>, scalar_prefetch = 0 : i64, scratch_operands = 1 : i64, tpu.core_type = #tpu.core_type<tc>, window_params = [{transform_indices = @transform_0, window_bounds = array<i64: 1, 18, 16, 16>}, {pipeline_mode = #tpu.pipeline_mode<synchronous>, transform_indices = @transform_1, window_bounds = array<i64: 16, 4>}, {pipeline_mode = #tpu.pipeline_mode<synchronous>, transform_indices = @transform_2, window_bounds = array<i64: 1, 4>}, {pipeline_mode = #tpu.pipeline_mode<synchronous>, transform_indices = @transform_3, window_bounds = array<i64: 3, 12, 4>}, {pipeline_mode = #tpu.pipeline_mode<synchronous>, transform_indices = @transform_4, window_bounds = array<i64: 1, 4>}, {pipeline_mode = #tpu.pipeline_mode<synchronous>, transform_indices = @transform_5, window_bounds = array<i64: 4, 16>}, {pipeline_mode = #tpu.pipeline_mode<synchronous>, transform_indices = @transform_6, window_bounds = array<i64: 1, 16>}, {transform_indices = @transform_7, window_bounds = array<i64: 1, 8, 16, 16>}]} {
    %c8_i32 = arith.constant 8 : i32
    %0 = arith.muli %arg1, %c8_i32 : i32
    %1 = tpu.assume_multiple %0, 8 : i32
    %c0 = arith.constant 0 : index
    %2 = arith.index_cast %1 : i32 to index
    %c0_0 = arith.constant 0 : index
    %c0_1 = arith.constant 0 : index
    %3 = vector.load %arg2[%c0, %2, %c0_0, %c0_1] : memref<1x18x16x16xbf16, #tpu.memory_space<vmem>>, vector<1x10x16x16xbf16>
    %4 = vector.shape_cast %3 : vector<1x10x16x16xbf16> to vector<10x16x16xbf16>
    %5 = vector.shape_cast %4 : vector<10x16x16xbf16> to vector<160x16xbf16>
    %c0_2 = arith.constant 0 : index
    %c0_3 = arith.constant 0 : index
    %6 = vector.load %arg3[%c0_2, %c0_3] : memref<16x4xbf16, #tpu.memory_space<vmem>>, vector<16x4xbf16>
    %cst = arith.constant dense<0.000000e+00> : vector<160x4xf32>
    %7 = tpu.matmul %5, %6, %cst {dimension_numbers = #tpu.dot_dimension_numbers<[1], [0], [0], [1], [0, 0, 1, 1], [], []>} : vector<160x16xbf16>, vector<16x4xbf16>, vector<160x4xf32> -> vector<160x4xf32>
    %c0_4 = arith.constant 0 : index
    %c0_5 = arith.constant 0 : index
    %8 = vector.load %arg4[%c0_4, %c0_5] : memref<1x4xf32, #tpu.memory_space<vmem>>, vector<1x4xf32>
    %9 = vector.broadcast %8 : vector<1x4xf32> to vector<160x4xf32>
    %10 = arith.addf %7, %9 : vector<160x4xf32>
    %cst_6 = arith.constant 0.000000e+00 : f32
    %11 = vector.broadcast %cst_6 : f32 to vector<160x4xf32>
    %12 = arith.maximumf %10, %11 : vector<160x4xf32>
    %13 = tpu.iota {dimensions = array<i32: 0>} : vector<160x1xi32>
    %c16_i32 = arith.constant 16 : i32
    %c0_i32 = arith.constant 0 : i32
    %14 = arith.cmpi eq, %c16_i32, %c0_i32 : i32
    %c1_i32 = arith.constant 1 : i32
    %15 = arith.select %14, %c1_i32, %c16_i32 : i32
    %16 = vector.broadcast %15 : i32 to vector<160x1xi32>
    %17 = arith.remsi %13, %16 : vector<160x1xi32>
    %c0_i32_7 = arith.constant 0 : i32
    %18 = vector.broadcast %c0_i32_7 : i32 to vector<160x1xi32>
    %19 = arith.cmpi ne, %17, %18 : vector<160x1xi32>
    %c0_i32_8 = arith.constant 0 : i32
    %20 = vector.broadcast %c0_i32_8 : i32 to vector<160x1xi32>
    %21 = arith.cmpi slt, %17, %20 : vector<160x1xi32>
    %c0_i32_9 = arith.constant 0 : i32
    %22 = arith.cmpi slt, %15, %c0_i32_9 : i32
    %23 = vector.broadcast %22 : i1 to vector<160x1xi1>
    %24 = vector.broadcast %23 : vector<160x1xi1> to vector<160x1xi1>
    %25 = arith.xori %21, %24 : vector<160x1xi1>
    %26 = arith.andi %25, %19 : vector<160x1xi1>
    %27 = vector.broadcast %15 : i32 to vector<160x1xi32>
    %28 = arith.addi %17, %27 : vector<160x1xi32>
    %29 = arith.select %26, %28, %17 : vector<160x1xi1>, vector<160x1xi32>
    %c1_i32_10 = arith.constant 1 : i32
    %30 = vector.broadcast %c1_i32_10 : i32 to vector<160x1xi32>
    %31 = arith.cmpi sge, %29, %30 : vector<160x1xi32>
    %c1_i32_11 = arith.constant 1 : i32
    %32 = tpu.dynamic_rotate %12 by %c1_i32_11 dim 0 : vector<160x4xf32>, i32 -> vector<160x4xf32>
    %cst_12 = arith.constant 0.000000e+00 : f32
    %33 = vector.shape_cast %31 : vector<160x1xi1> to vector<160x1xi1>
    %34 = vector.broadcast %33 : vector<160x1xi1> to vector<160x4xi1>
    %35 = vector.broadcast %cst_12 : f32 to vector<160x4xf32>
    %36 = arith.select %34, %32, %35 : vector<160x4xi1>, vector<160x4xf32>
    %c15_i32 = arith.constant 15 : i32
    %37 = vector.broadcast %c15_i32 : i32 to vector<160x1xi32>
    %38 = arith.cmpi slt, %29, %37 : vector<160x1xi32>
    %c159_i32 = arith.constant 159 : i32
    %39 = tpu.dynamic_rotate %12 by %c159_i32 dim 0 : vector<160x4xf32>, i32 -> vector<160x4xf32>
    %cst_13 = arith.constant 0.000000e+00 : f32
    %40 = vector.shape_cast %38 : vector<160x1xi1> to vector<160x1xi1>
    %41 = vector.broadcast %40 : vector<160x1xi1> to vector<160x4xi1>
    %42 = vector.broadcast %cst_13 : f32 to vector<160x4xf32>
    %43 = arith.select %41, %39, %42 : vector<160x4xi1>, vector<160x4xf32>
    %44 = arith.truncf %36 : vector<160x4xf32> to vector<160x4xbf16>
    %45 = vector.shape_cast %44 : vector<160x4xbf16> to vector<10x16x4xbf16>
    %c0_14 = arith.constant 0 : index
    %c0_15 = arith.constant 0 : index
    %c0_16 = arith.constant 0 : index
    %c0_17 = arith.constant 0 : index
    %46 = vector.load %arg10[%c0_14, %c0_15, %c0_16, %c0_17] : memref<3x10x16x4xbf16, #tpu.memory_space<vmem>>, vector<1x10x16x4xbf16>
    %47 = vector.shape_cast %46 : vector<1x10x16x4xbf16> to vector<10x16x4xbf16>
    %48 = vector.shape_cast %45 : vector<10x16x4xbf16> to vector<1x10x16x4xbf16>
    tpu.vector_store %arg10[%c0_14, %c0_15, %c0_16, %c0_17], %48 {strides = array<i32>} : memref<3x10x16x4xbf16, #tpu.memory_space<vmem>>, vector<1x10x16x4xbf16>,
    %49 = arith.truncf %12 : vector<160x4xf32> to vector<160x4xbf16>
    %50 = vector.shape_cast %49 : vector<160x4xbf16> to vector<10x16x4xbf16>
    %c1 = arith.constant 1 : index
    %c0_18 = arith.constant 0 : index
    %c0_19 = arith.constant 0 : index
    %c0_20 = arith.constant 0 : index
    %51 = vector.load %arg10[%c1, %c0_18, %c0_19, %c0_20] : memref<3x10x16x4xbf16, #tpu.memory_space<vmem>>, vector<1x10x16x4xbf16>
    %52 = vector.shape_cast %51 : vector<1x10x16x4xbf16> to vector<10x16x4xbf16>
    %53 = vector.shape_cast %50 : vector<10x16x4xbf16> to vector<1x10x16x4xbf16>
    tpu.vector_store %arg10[%c1, %c0_18, %c0_19, %c0_20], %53 {strides = array<i32>} : memref<3x10x16x4xbf16, #tpu.memory_space<vmem>>, vector<1x10x16x4xbf16>,
    %54 = arith.truncf %43 : vector<160x4xf32> to vector<160x4xbf16>
    %55 = vector.shape_cast %54 : vector<160x4xbf16> to vector<10x16x4xbf16>
    %c2 = arith.constant 2 : index
    %c0_21 = arith.constant 0 : index
    %c0_22 = arith.constant 0 : index
    %c0_23 = arith.constant 0 : index
    %56 = vector.load %arg10[%c2, %c0_21, %c0_22, %c0_23] : memref<3x10x16x4xbf16, #tpu.memory_space<vmem>>, vector<1x10x16x4xbf16>
    %57 = vector.shape_cast %56 : vector<1x10x16x4xbf16> to vector<10x16x4xbf16>
    %58 = vector.shape_cast %55 : vector<10x16x4xbf16> to vector<1x10x16x4xbf16>
    tpu.vector_store %arg10[%c2, %c0_21, %c0_22, %c0_23], %58 {strides = array<i32>} : memref<3x10x16x4xbf16, #tpu.memory_space<vmem>>, vector<1x10x16x4xbf16>,
    %cst_24 = arith.constant 0.000000e+00 : bf16
    %59 = vector.broadcast %cst_24 : bf16 to vector<3x1x16x4xbf16>
    %c0_i32_25 = arith.constant 0 : i32
    %60 = arith.cmpi eq, %arg1, %c0_i32_25 : i32
    %61 = arith.extui %60 : i1 to i32
    %c0_i32_26 = arith.constant 0 : i32
    %62 = arith.cmpi ne, %61, %c0_i32_26 : i32
    scf.if %62 {
      %c0_94 = arith.constant 0 : index
      %c0_95 = arith.constant 0 : index
      %c0_96 = arith.constant 0 : index
      %c0_97 = arith.constant 0 : index
      %131 = vector.load %arg10[%c0_94, %c0_95, %c0_96, %c0_97] : memref<3x10x16x4xbf16, #tpu.memory_space<vmem>>, vector<3x1x16x4xbf16>
      tpu.vector_store %arg10[%c0_94, %c0_95, %c0_96, %c0_97], %59 {strides = array<i32>} : memref<3x10x16x4xbf16, #tpu.memory_space<vmem>>, vector<3x1x16x4xbf16>,
    } else {
    }
    %c1_i32_27 = arith.constant 1 : i32
    %63 = arith.cmpi eq, %arg1, %c1_i32_27 : i32
    %64 = arith.extui %63 : i1 to i32
    %c0_i32_28 = arith.constant 0 : i32
    %65 = arith.cmpi ne, %64, %c0_i32_28 : i32
    scf.if %65 {
      %c0_94 = arith.constant 0 : index
      %c9 = arith.constant 9 : index
      %c0_95 = arith.constant 0 : index
      %c0_96 = arith.constant 0 : index
      %131 = vector.load %arg10[%c0_94, %c9, %c0_95, %c0_96] : memref<3x10x16x4xbf16, #tpu.memory_space<vmem>>, vector<3x1x16x4xbf16>
      tpu.vector_store %arg10[%c0_94, %c9, %c0_95, %c0_96], %59 {strides = array<i32>} : memref<3x10x16x4xbf16, #tpu.memory_space<vmem>>, vector<3x1x16x4xbf16>,
    } else {
    }
    %c0_29 = arith.constant 0 : index
    %c0_30 = arith.constant 0 : index
    %c0_31 = arith.constant 0 : index
    %c0_32 = arith.constant 0 : index
    %66 = vector.load %arg10[%c0_29, %c0_30, %c0_31, %c0_32] : memref<3x10x16x4xbf16, #tpu.memory_space<vmem>>, vector<1x8x16x4xbf16>
    %67 = vector.shape_cast %66 : vector<1x8x16x4xbf16> to vector<8x16x4xbf16>
    %68 = vector.shape_cast %67 : vector<8x16x4xbf16> to vector<128x4xbf16>
    %c1_33 = arith.constant 1 : index
    %c0_34 = arith.constant 0 : index
    %c0_35 = arith.constant 0 : index
    %c0_36 = arith.constant 0 : index
    %69 = vector.load %arg10[%c1_33, %c0_34, %c0_35, %c0_36] : memref<3x10x16x4xbf16, #tpu.memory_space<vmem>>, vector<1x8x16x4xbf16>
    %70 = vector.shape_cast %69 : vector<1x8x16x4xbf16> to vector<8x16x4xbf16>
    %71 = vector.shape_cast %70 : vector<8x16x4xbf16> to vector<128x4xbf16>
    %c2_37 = arith.constant 2 : index
    %c0_38 = arith.constant 0 : index
    %c0_39 = arith.constant 0 : index
    %c0_40 = arith.constant 0 : index
    %72 = vector.load %arg10[%c2_37, %c0_38, %c0_39, %c0_40] : memref<3x10x16x4xbf16, #tpu.memory_space<vmem>>, vector<1x8x16x4xbf16>
    %73 = vector.shape_cast %72 : vector<1x8x16x4xbf16> to vector<8x16x4xbf16>
    %74 = vector.shape_cast %73 : vector<8x16x4xbf16> to vector<128x4xbf16>
    %75 = tpu.concatenate %68, %71, %74 in 1 : vector<128x4xbf16>, vector<128x4xbf16>, vector<128x4xbf16> -> vector<128x12xbf16>
    %c0_41 = arith.constant 0 : index
    %c0_42 = arith.constant 0 : index
    %c0_43 = arith.constant 0 : index
    %76 = vector.load %arg5[%c0_41, %c0_42, %c0_43] : memref<3x12x4xbf16, #tpu.memory_space<vmem>>, vector<1x12x4xbf16>
    %77 = vector.shape_cast %76 : vector<1x12x4xbf16> to vector<12x4xbf16>
    %cst_44 = arith.constant dense<0.000000e+00> : vector<128x4xf32>
    %78 = tpu.matmul %75, %77, %cst_44 {dimension_numbers = #tpu.dot_dimension_numbers<[1], [0], [0], [1], [0, 0, 1, 1], [], []>} : vector<128x12xbf16>, vector<12x4xbf16>, vector<128x4xf32> -> vector<128x4xf32>
    %c0_45 = arith.constant 0 : index
    %c1_46 = arith.constant 1 : index
    %c0_47 = arith.constant 0 : index
    %c0_48 = arith.constant 0 : index
    %79 = vector.load %arg10[%c0_45, %c1_46, %c0_47, %c0_48] : memref<3x10x16x4xbf16, #tpu.memory_space<vmem>>, vector<1x8x16x4xbf16>
    %80 = vector.shape_cast %79 : vector<1x8x16x4xbf16> to vector<8x16x4xbf16>
    %81 = vector.shape_cast %80 : vector<8x16x4xbf16> to vector<128x4xbf16>
    %c1_49 = arith.constant 1 : index
    %c1_50 = arith.constant 1 : index
    %c0_51 = arith.constant 0 : index
    %c0_52 = arith.constant 0 : index
    %82 = vector.load %arg10[%c1_49, %c1_50, %c0_51, %c0_52] : memref<3x10x16x4xbf16, #tpu.memory_space<vmem>>, vector<1x8x16x4xbf16>
    %83 = vector.shape_cast %82 : vector<1x8x16x4xbf16> to vector<8x16x4xbf16>
    %84 = vector.shape_cast %83 : vector<8x16x4xbf16> to vector<128x4xbf16>
    %c2_53 = arith.constant 2 : index
    %c1_54 = arith.constant 1 : index
    %c0_55 = arith.constant 0 : index
    %c0_56 = arith.constant 0 : index
    %85 = vector.load %arg10[%c2_53, %c1_54, %c0_55, %c0_56] : memref<3x10x16x4xbf16, #tpu.memory_space<vmem>>, vector<1x8x16x4xbf16>
    %86 = vector.shape_cast %85 : vector<1x8x16x4xbf16> to vector<8x16x4xbf16>
    %87 = vector.shape_cast %86 : vector<8x16x4xbf16> to vector<128x4xbf16>
    %88 = tpu.concatenate %81, %84, %87 in 1 : vector<128x4xbf16>, vector<128x4xbf16>, vector<128x4xbf16> -> vector<128x12xbf16>
    %c1_57 = arith.constant 1 : index
    %c0_58 = arith.constant 0 : index
    %c0_59 = arith.constant 0 : index
    %89 = vector.load %arg5[%c1_57, %c0_58, %c0_59] : memref<3x12x4xbf16, #tpu.memory_space<vmem>>, vector<1x12x4xbf16>
    %90 = vector.shape_cast %89 : vector<1x12x4xbf16> to vector<12x4xbf16>
    %cst_60 = arith.constant dense<0.000000e+00> : vector<128x4xf32>
    %91 = tpu.matmul %88, %90, %cst_60 {dimension_numbers = #tpu.dot_dimension_numbers<[1], [0], [0], [1], [0, 0, 1, 1], [], []>} : vector<128x12xbf16>, vector<12x4xbf16>, vector<128x4xf32> -> vector<128x4xf32>
    %92 = arith.addf %78, %91 : vector<128x4xf32>
    %c0_61 = arith.constant 0 : index
    %c2_62 = arith.constant 2 : index
    %c0_63 = arith.constant 0 : index
    %c0_64 = arith.constant 0 : index
    %93 = vector.load %arg10[%c0_61, %c2_62, %c0_63, %c0_64] : memref<3x10x16x4xbf16, #tpu.memory_space<vmem>>, vector<1x8x16x4xbf16>
    %94 = vector.shape_cast %93 : vector<1x8x16x4xbf16> to vector<8x16x4xbf16>
    %95 = vector.shape_cast %94 : vector<8x16x4xbf16> to vector<128x4xbf16>
    %c1_65 = arith.constant 1 : index
    %c2_66 = arith.constant 2 : index
    %c0_67 = arith.constant 0 : index
    %c0_68 = arith.constant 0 : index
    %96 = vector.load %arg10[%c1_65, %c2_66, %c0_67, %c0_68] : memref<3x10x16x4xbf16, #tpu.memory_space<vmem>>, vector<1x8x16x4xbf16>
    %97 = vector.shape_cast %96 : vector<1x8x16x4xbf16> to vector<8x16x4xbf16>
    %98 = vector.shape_cast %97 : vector<8x16x4xbf16> to vector<128x4xbf16>
    %c2_69 = arith.constant 2 : index
    %c2_70 = arith.constant 2 : index
    %c0_71 = arith.constant 0 : index
    %c0_72 = arith.constant 0 : index
    %99 = vector.load %arg10[%c2_69, %c2_70, %c0_71, %c0_72] : memref<3x10x16x4xbf16, #tpu.memory_space<vmem>>, vector<1x8x16x4xbf16>
    %100 = vector.shape_cast %99 : vector<1x8x16x4xbf16> to vector<8x16x4xbf16>
    %101 = vector.shape_cast %100 : vector<8x16x4xbf16> to vector<128x4xbf16>
    %102 = tpu.concatenate %95, %98, %101 in 1 : vector<128x4xbf16>, vector<128x4xbf16>, vector<128x4xbf16> -> vector<128x12xbf16>
    %c2_73 = arith.constant 2 : index
    %c0_74 = arith.constant 0 : index
    %c0_75 = arith.constant 0 : index
    %103 = vector.load %arg5[%c2_73, %c0_74, %c0_75] : memref<3x12x4xbf16, #tpu.memory_space<vmem>>, vector<1x12x4xbf16>
    %104 = vector.shape_cast %103 : vector<1x12x4xbf16> to vector<12x4xbf16>
    %cst_76 = arith.constant dense<0.000000e+00> : vector<128x4xf32>
    %105 = tpu.matmul %102, %104, %cst_76 {dimension_numbers = #tpu.dot_dimension_numbers<[1], [0], [0], [1], [0, 0, 1, 1], [], []>} : vector<128x12xbf16>, vector<12x4xbf16>, vector<128x4xf32> -> vector<128x4xf32>
    %106 = arith.addf %92, %105 : vector<128x4xf32>
    %c0_77 = arith.constant 0 : index
    %c0_78 = arith.constant 0 : index
    %107 = vector.load %arg6[%c0_77, %c0_78] : memref<1x4xf32, #tpu.memory_space<vmem>>, vector<1x4xf32>
    %108 = vector.broadcast %107 : vector<1x4xf32> to vector<128x4xf32>
    %109 = arith.addf %106, %108 : vector<128x4xf32>
    %cst_79 = arith.constant 0.000000e+00 : f32
    %110 = vector.broadcast %cst_79 : f32 to vector<128x4xf32>
    %111 = arith.maximumf %109, %110 : vector<128x4xf32>
    %112 = arith.truncf %111 : vector<128x4xf32> to vector<128x4xbf16>
    %c0_80 = arith.constant 0 : index
    %c0_81 = arith.constant 0 : index
    %113 = vector.load %arg7[%c0_80, %c0_81] : memref<4x16xbf16, #tpu.memory_space<vmem>>, vector<4x16xbf16>
    %cst_82 = arith.constant dense<0.000000e+00> : vector<128x16xf32>
    %114 = tpu.matmul %112, %113, %cst_82 {dimension_numbers = #tpu.dot_dimension_numbers<[1], [0], [0], [1], [0, 0, 1, 1], [], []>} : vector<128x4xbf16>, vector<4x16xbf16>, vector<128x16xf32> -> vector<128x16xf32>
    %c0_83 = arith.constant 0 : index
    %c0_84 = arith.constant 0 : index
    %115 = vector.load %arg8[%c0_83, %c0_84] : memref<1x16xf32, #tpu.memory_space<vmem>>, vector<1x16xf32>
    %116 = vector.broadcast %115 : vector<1x16xf32> to vector<128x16xf32>
    %117 = arith.addf %114, %116 : vector<128x16xf32>
    %c1_i32_85 = arith.constant 1 : i32
    %118 = arith.addi %1, %c1_i32_85 : i32
    %c0_86 = arith.constant 0 : index
    %119 = arith.index_cast %118 : i32 to index
    %c0_87 = arith.constant 0 : index
    %c0_88 = arith.constant 0 : index
    %120 = vector.load %arg2[%c0_86, %119, %c0_87, %c0_88] : memref<1x18x16x16xbf16, #tpu.memory_space<vmem>>, vector<1x8x16x16xbf16>
    %121 = vector.shape_cast %120 : vector<1x8x16x16xbf16> to vector<8x16x16xbf16>
    %122 = vector.shape_cast %121 : vector<8x16x16xbf16> to vector<128x16xbf16>
    %123 = arith.extf %122 : vector<128x16xbf16> to vector<128x16xf32>
    %124 = arith.addf %117, %123 : vector<128x16xf32>
    %cst_89 = arith.constant 0.000000e+00 : f32
    %125 = vector.broadcast %cst_89 : f32 to vector<128x16xf32>
    %126 = arith.maximumf %124, %125 : vector<128x16xf32>
    %127 = vector.shape_cast %126 : vector<128x16xf32> to vector<8x16x16xf32>
    %c0_90 = arith.constant 0 : index
    %c0_91 = arith.constant 0 : index
    %c0_92 = arith.constant 0 : index
    %c0_93 = arith.constant 0 : index
    %128 = vector.load %arg9[%c0_90, %c0_91, %c0_92, %c0_93] : memref<1x8x16x16xf32, #tpu.memory_space<vmem>>, vector<1x8x16x16xf32>
    %129 = vector.shape_cast %128 : vector<1x8x16x16xf32> to vector<8x16x16xf32>
    %130 = vector.shape_cast %127 : vector<8x16x16xf32> to vector<1x8x16x16xf32>
    tpu.vector_store %arg9[%c0_90, %c0_91, %c0_92, %c0_93], %130 {strides = array<i32>} : memref<1x8x16x16xf32, #tpu.memory_space<vmem>>, vector<1x8x16x16xf32>,
    return
  }
  func.func @transform_0(%arg0: i32, %arg1: i32) -> (i32, i32, i32, i32) {
    %c0_i32 = arith.constant 0 : i32
    %c0_i32_0 = arith.constant 0 : i32
    %c0_i32_1 = arith.constant 0 : i32
    %c0_i32_2 = arith.constant 0 : i32
    return %arg0, %c0_i32, %c0_i32_0, %c0_i32_1 : i32, i32, i32, i32
  }
  func.func @transform_1(%arg0: i32, %arg1: i32) -> (i32, i32) {
    %c0_i32 = arith.constant 0 : i32
    %c0_i32_0 = arith.constant 0 : i32
    %c0_i32_1 = arith.constant 0 : i32
    return %c0_i32, %c0_i32_0 : i32, i32
  }
  func.func @transform_2(%arg0: i32, %arg1: i32) -> (i32, i32) {
    %c0_i32 = arith.constant 0 : i32
    %c0_i32_0 = arith.constant 0 : i32
    %c0_i32_1 = arith.constant 0 : i32
    return %c0_i32, %c0_i32_0 : i32, i32
  }
  func.func @transform_3(%arg0: i32, %arg1: i32) -> (i32, i32, i32) {
    %c0_i32 = arith.constant 0 : i32
    %c0_i32_0 = arith.constant 0 : i32
    %c0_i32_1 = arith.constant 0 : i32
    %c0_i32_2 = arith.constant 0 : i32
    return %c0_i32, %c0_i32_0, %c0_i32_1 : i32, i32, i32
  }
  func.func @transform_4(%arg0: i32, %arg1: i32) -> (i32, i32) {
    %c0_i32 = arith.constant 0 : i32
    %c0_i32_0 = arith.constant 0 : i32
    %c0_i32_1 = arith.constant 0 : i32
    return %c0_i32, %c0_i32_0 : i32, i32
  }
  func.func @transform_5(%arg0: i32, %arg1: i32) -> (i32, i32) {
    %c0_i32 = arith.constant 0 : i32
    %c0_i32_0 = arith.constant 0 : i32
    %c0_i32_1 = arith.constant 0 : i32
    return %c0_i32, %c0_i32_0 : i32, i32
  }
  func.func @transform_6(%arg0: i32, %arg1: i32) -> (i32, i32) {
    %c0_i32 = arith.constant 0 : i32
    %c0_i32_0 = arith.constant 0 : i32
    %c0_i32_1 = arith.constant 0 : i32
    return %c0_i32, %c0_i32_0 : i32, i32
  }
  func.func @transform_7(%arg0: i32, %arg1: i32) -> (i32, i32, i32, i32) {
    %c0_i32 = arith.constant 0 : i32
    %c0_i32_0 = arith.constant 0 : i32
    %c0_i32_1 = arith.constant 0 : i32
    return %arg0, %arg1, %c0_i32, %c0_i32_0 : i32, i32, i32, i32
  }
}

</mosaic_0001>

<llo_original>
// kernel: tpu_custom_call.1
$region0: #{tpu_custom_call.1}
  #allocation0 [shape = 'u32[]', space=smem, size = 0x4, offset = 0x4, fixed_abs, tag = 'smem constant byte address 0x4 - core index']
  #allocation1 [shape = 'u32[144,128]{1,0:T(1,128)}', space=vmem, size = 0x12000, scoped, tag = 'internal scratch']
  #allocation2 [shape = 'bf16[3,10,16,4]{3,2,1,0:T(16,128)(2,1)}', space=vmem, size = 0x1e000, scoped, tag = 'scratch operand']
  %s0 = inlined_call_operand.vmem [shape: bf16[2,18,16,16], index: 0, kind: input, shape index: {}]
  %s1 = inlined_call_operand.vmem [shape: bf16[16,4], index: 1, kind: input, shape index: {}]
  %s2 = inlined_call_operand.vmem [shape: f32[1,4], index: 2, kind: input, shape index: {}]
  %s3 = inlined_call_operand.vmem [shape: bf16[3,12,4], index: 3, kind: input, shape index: {}]
  %s4 = inlined_call_operand.vmem [shape: f32[1,4], index: 4, kind: input, shape index: {}]
  %s5 = inlined_call_operand.vmem [shape: bf16[4,16], index: 5, kind: input, shape index: {}]
  %s6 = inlined_call_operand.vmem [shape: f32[1,16], index: 6, kind: input, shape index: {}]
  %s7 = inlined_call_operand.hbm [shape: f32[2,16,16,16], index: 7, kind: output, shape index: {}]
  %s8 = sld [smem:[#allocation0]]
  $region69: #{tpu_custom_call.1} parent=0
    _
  %s10 = ssub.s32 1, %s8
  %s11 = scalar_select 0, %s10, %s8
  $region1: #{tpu_custom_call.1} parent=0
    #allocation3 [shape = 'u8[131072]{0}', space=vmem, size = 0x20000, scoped, tag = 'output window, operand 0']
    #allocation4 [shape = 's32[2]{0}', space=sflag, size = 0x8, scoped, tag = 'scoped memory for tpu_custom_call.1']
    %12 = vsyncpa [#allocation4], 0
    %s13 = scalar_lea.sflag [#allocation4], 1
    %14 = vsyncpa %s13, 0
    loop: start=0, step=1, limit=6
    $region2: #{tpu_custom_call.1} parent=1 // loop_pre_header
      _
    $region3: #{tpu_custom_call.1} parent=1 // loop_header
      %s16 = sphi 0, %s20
      %p17 = scmp.ge.s32.totalorder %s16, 6
      %s23 = sphi 0, %s35
      %s24 = sphi 0, %s31
      %s25 = sphi 0, %s23
      %s26 = sphi 0, %s24
      %s27 = sphi 0, %s25
      %s28 = sphi 0, %s26
      %s38 = sphi 0, %s40
      %s41 = sphi 0, %s38
      %s42 = sphi 0, %s41
      %s58 = sphi 0, %s42
      %s62 = sphi 0, %s62
      %s64 = sphi 0, %s62
      %s65 = sphi 0, %s64
      %s79 = sphi 0, %s65
      %s83 = sphi 0, %s83
      %s85 = sphi 0, %s83
      %s86 = sphi 0, %s85
      %s100 = sphi 0, %s86
      %s104 = sphi 0, %s104
      %s106 = sphi 0, %s104
      %s107 = sphi 0, %s106
      %s121 = sphi 0, %s107
      %s125 = sphi 0, %s125
      %s127 = sphi 0, %s125
      %s128 = sphi 0, %s127
      %s142 = sphi 0, %s128
      %s146 = sphi 0, %s146
      %s148 = sphi 0, %s146
      %s149 = sphi 0, %s148
      %s163 = sphi 0, %s149
      %s167 = sphi 0, %s167
      %s169 = sphi 0, %s167
      %s170 = sphi 0, %s169
      %s184 = sphi 0, %s170
      %s192 = sphi 0, %s194
      %s195 = sphi 0, %s192
      %s196 = sphi 0, %s195
      %s212 = sphi 0, %s196
    $region4: #{tpu_custom_call.1} parent=1 // loop_header_branch
      %19 = sbr.rel (%p17) target = $region8
    $region5: #{tpu_custom_call.1} parent=1 // loop_body
      %s21 = ssub.s32 %s16, 1
      %s22 = ssub.s32 %s16, 2
      %s29 = sadd.s32 1, %s24
      %p30 = scmp.ge.s32.totalorder %s29, 2
      %s31 = scalar_select %p30, 0, %s29
      %s32 = sadd.s32 1, %s23
      %s33 = scalar_select %p30, %s32, %s23
      %p34 = scmp.ge.s32.totalorder %s33, 2
      %s35 = scalar_select %p34, 0, %s33
      %s36 = ssub.s32 %s23, %s35
      %p37 = scmp.eq.s32.totalorder %s36, 0
      %s39 = sadd.s32 %s38, 1
      %s40 = scalar_select %p37, %s38, %s39
      %p43 = pneg %p37
      %p44 = scmp.eq.s32.totalorder %s16, 3
      %p45 = por %p43, %p44
      %p46 = scmp.ne.s32.totalorder %s38, %s41
      %p47 = scmp.eq.s32.totalorder %s16, 0
      %p48 = por %p46, %p47
      %p49 = scmp.ne.s32.totalorder %s38, %s41
      %p50 = scmp.eq.s32.totalorder %s21, 3
      %p51 = por %p49, %p50
      %p52 = scmp.ne.s32.totalorder %s41, %s42
      %p53 = scmp.eq.s32.totalorder %s21, 0
      %p54 = por %p52, %p53
      %p55 = scmp.ne.s32.totalorder %s41, %s42
      %p56 = scmp.eq.s32.totalorder %s22, 3
      %p57 = por %p55, %p56
      %p59 = scmp.ne.s32.totalorder %s42, %s58
      %p60 = scmp.eq.s32.totalorder %s22, 0
      %p61 = por %p59, %p60
      %s63 = sadd.s32 %s62, 1
      %p66 = scmp.eq.s32.totalorder %s16, 3
      %p67 = scmp.ne.s32.totalorder %s62, %s64
      %p68 = scmp.eq.s32.totalorder %s16, 0
      %p69 = por %p67, %p68
      %p70 = scmp.ne.s32.totalorder %s62, %s64
      %p71 = scmp.eq.s32.totalorder %s21, 3
      %p72 = por %p70, %p71
      %p73 = scmp.ne.s32.totalorder %s64, %s65
      %p74 = scmp.eq.s32.totalorder %s21, 0
      %p75 = por %p73, %p74
      %p76 = scmp.ne.s32.totalorder %s64, %s65
      %p77 = scmp.eq.s32.totalorder %s22, 3
      %p78 = por %p76, %p77
      %p80 = scmp.ne.s32.totalorder %s65, %s79
      %p81 = scmp.eq.s32.totalorder %s22, 0
      %p82 = por %p80, %p81
      %s84 = sadd.s32 %s83, 1
      %p87 = scmp.eq.s32.totalorder %s16, 3
      %p88 = scmp.ne.s32.totalorder %s83, %s85
      %p89 = scmp.eq.s32.totalorder %s16, 0
      %p90 = por %p88, %p89
      %p91 = scmp.ne.s32.totalorder %s83, %s85
      %p92 = scmp.eq.s32.totalorder %s21, 3
      %p93 = por %p91, %p92
      %p94 = scmp.ne.s32.totalorder %s85, %s86
      %p95 = scmp.eq.s32.totalorder %s21, 0
      %p96 = por %p94, %p95
      %p97 = scmp.ne.s32.totalorder %s85, %s86
      %p98 = scmp.eq.s32.totalorder %s22, 3
      %p99 = por %p97, %p98
      %p101 = scmp.ne.s32.totalorder %s86, %s100
      %p102 = scmp.eq.s32.totalorder %s22, 0
      %p103 = por %p101, %p102
      %s105 = sadd.s32 %s104, 1
      %p108 = scmp.eq.s32.totalorder %s16, 3
      %p109 = scmp.ne.s32.totalorder %s104, %s106
      %p110 = scmp.eq.s32.totalorder %s16, 0
      %p111 = por %p109, %p110
      %p112 = scmp.ne.s32.totalorder %s104, %s106
      %p113 = scmp.eq.s32.totalorder %s21, 3
      %p114 = por %p112, %p113
      %p115 = scmp.ne.s32.totalorder %s106, %s107
      %p116 = scmp.eq.s32.totalorder %s21, 0
      %p117 = por %p115, %p116
      %p118 = scmp.ne.s32.totalorder %s106, %s107
      %p119 = scmp.eq.s32.totalorder %s22, 3
      %p120 = por %p118, %p119
      %p122 = scmp.ne.s32.totalorder %s107, %s121
      %p123 = scmp.eq.s32.totalorder %s22, 0
      %p124 = por %p122, %p123
      %s126 = sadd.s32 %s125, 1
      %p129 = scmp.eq.s32.totalorder %s16, 3
      %p130 = scmp.ne.s32.totalorder %s125, %s127
      %p131 = scmp.eq.s32.totalorder %s16, 0
      %p132 = por %p130, %p131
      %p133 = scmp.ne.s32.totalorder %s125, %s127
      %p134 = scmp.eq.s32.totalorder %s21, 3
      %p135 = por %p133, %p134
      %p136 = scmp.ne.s32.totalorder %s127, %s128
      %p137 = scmp.eq.s32.totalorder %s21, 0
      %p138 = por %p136, %p137
      %p139 = scmp.ne.s32.totalorder %s127, %s128
      %p140 = scmp.eq.s32.totalorder %s22, 3
      %p141 = por %p139, %p140
      %p143 = scmp.ne.s32.totalorder %s128, %s142
      %p144 = scmp.eq.s32.totalorder %s22, 0
      %p145 = por %p143, %p144
      %s147 = sadd.s32 %s146, 1
      %p150 = scmp.eq.s32.totalorder %s16, 3
      %p151 = scmp.ne.s32.totalorder %s146, %s148
      %p152 = scmp.eq.s32.totalorder %s16, 0
      %p153 = por %p151, %p152
      %p154 = scmp.ne.s32.totalorder %s146, %s148
      %p155 = scmp.eq.s32.totalorder %s21, 3
      %p156 = por %p154, %p155
      %p157 = scmp.ne.s32.totalorder %s148, %s149
      %p158 = scmp.eq.s32.totalorder %s21, 0
      %p159 = por %p157, %p158
      %p160 = scmp.ne.s32.totalorder %s148, %s149
      %p161 = scmp.eq.s32.totalorder %s22, 3
      %p162 = por %p160, %p161
      %p164 = scmp.ne.s32.totalorder %s149, %s163
      %p165 = scmp.eq.s32.totalorder %s22, 0
      %p166 = por %p164, %p165
      %s168 = sadd.s32 %s167, 1
      %p171 = scmp.eq.s32.totalorder %s16, 3
      %p172 = scmp.ne.s32.totalorder %s167, %s169
      %p173 = scmp.eq.s32.totalorder %s16, 0
      %p174 = por %p172, %p173
      %p175 = scmp.ne.s32.totalorder %s167, %s169
      %p176 = scmp.eq.s32.totalorder %s21, 3
      %p177 = por %p175, %p176
      %p178 = scmp.ne.s32.totalorder %s169, %s170
      %p179 = scmp.eq.s32.totalorder %s21, 0
      %p180 = por %p178, %p179
      %p181 = scmp.ne.s32.totalorder %s169, %s170
      %p182 = scmp.eq.s32.totalorder %s22, 3
      %p183 = por %p181, %p182
      %p185 = scmp.ne.s32.totalorder %s170, %s184
      %p186 = scmp.eq.s32.totalorder %s22, 0
      %p187 = por %p185, %p186
      %s188 = ssub.s32 %s23, %s35
      %s189 = ssub.s32 %s24, %s31
      %s190 = sor.u32 %s188, %s189
      %p191 = scmp.eq.s32.totalorder %s190, 0
      %s193 = sadd.s32 %s192, 1
      %s194 = scalar_select %p191, %s192, %s193
      %p197 = pneg %p191
      %p198 = scmp.eq.s32.totalorder %s16, 3
      %p199 = por %p197, %p198
      %p200 = scmp.ne.s32.totalorder %s192, %s195
      %p201 = scmp.eq.s32.totalorder %s16, 0
      %p202 = por %p200, %p201
      %p203 = scmp.ne.s32.totalorder %s192, %s195
      %p204 = scmp.eq.s32.totalorder %s21, 3
      %p205 = por %p203, %p204
      %p206 = scmp.ne.s32.totalorder %s195, %s196
      %p207 = scmp.eq.s32.totalorder %s21, 0
      %p208 = por %p206, %p207
      %p209 = scmp.ne.s32.totalorder %s195, %s196
      %p210 = scmp.eq.s32.totalorder %s22, 3
      %p211 = por %p209, %p210
      %p213 = scmp.ne.s32.totalorder %s196, %s212
      %p214 = scmp.eq.s32.totalorder %s22, 0
      %p215 = por %p213, %p214
      %p216 = scmp.le.s32.totalorder 1, %s16
      %p217 = scmp.lt.s32.totalorder %s16, 5
      %p218 = pnand %p216, %p217
      %p219 = pneg %p218
      // Predicated region
      $region9: #{tpu_custom_call.1} parent=5 // pred_check
        _
      $region10: #{tpu_custom_call.1} parent=5 // pred_check_branch
        %221 = sbr.rel (%p218) target = $region12
      $region11: #{tpu_custom_call.1} parent=5 // pred_region
        %s222 = ssub.s32 %s16, 1
        // Predicated region
        $region13: #{tpu_custom_call.1} parent=11 // pred_check
          %p223 = pneg %p54
        $region14: #{tpu_custom_call.1} parent=11 // pred_check_branch
          %225 = sbr.rel (%p223) target = $region16
        $region15: #{tpu_custom_call.1} parent=11 // pred_region
          %p226 = scmp.lt.s32.totalorder %s25, 1
          %s227 = scalar_select %p226, %s25, 1
          %s228 = smul.addr %s227, 36
          %s229 = smul.addr %s228, 4
          %s230 = scalar_lea.vmem %s0, %s229
        $region16: #{tpu_custom_call.1} parent=11 // pred_fallthru
          _
        // Predicated region
        $region17: #{tpu_custom_call.1} parent=11 // pred_check
          %p231 = pneg %p75
        $region18: #{tpu_custom_call.1} parent=11 // pred_check_branch
          %233 = sbr.rel (%p231) target = $region20
        $region19: #{tpu_custom_call.1} parent=11 // pred_region
          _
        $region20: #{tpu_custom_call.1} parent=11 // pred_fallthru
          _
        // Predicated region
        $region21: #{tpu_custom_call.1} parent=11 // pred_check
          %p234 = pneg %p96
        $region22: #{tpu_custom_call.1} parent=11 // pred_check_branch
          %236 = sbr.rel (%p234) target = $region24
        $region23: #{tpu_custom_call.1} parent=11 // pred_region
          _
        $region24: #{tpu_custom_call.1} parent=11 // pred_fallthru
          _
        // Predicated region
        $region25: #{tpu_custom_call.1} parent=11 // pred_check
          %p237 = pneg %p117
        $region26: #{tpu_custom_call.1} parent=11 // pred_check_branch
          %239 = sbr.rel (%p237) target = $region28
        $region27: #{tpu_custom_call.1} parent=11 // pred_region
          _
        $region28: #{tpu_custom_call.1} parent=11 // pred_fallthru
          _
        // Predicated region
        $region29: #{tpu_custom_call.1} parent=11 // pred_check
          %p240 = pneg %p138
        $region30: #{tpu_custom_call.1} parent=11 // pred_check_branch
          %242 = sbr.rel (%p240) target = $region32
        $region31: #{tpu_custom_call.1} parent=11 // pred_region
          _
        $region32: #{tpu_custom_call.1} parent=11 // pred_fallthru
          _
        // Predicated region
        $region33: #{tpu_custom_call.1} parent=11 // pred_check
          %p243 = pneg %p159
        $region34: #{tpu_custom_call.1} parent=11 // pred_check_branch
          %245 = sbr.rel (%p243) target = $region36
        $region35: #{tpu_custom_call.1} parent=11 // pred_region
          _
        $region36: #{tpu_custom_call.1} parent=11 // pred_fallthru
          _
        // Predicated region
        $region37: #{tpu_custom_call.1} parent=11 // pred_check
          %p246 = pneg %p180
        $region38: #{tpu_custom_call.1} parent=11 // pred_check_branch
          %248 = sbr.rel (%p246) target = $region40
        $region39: #{tpu_custom_call.1} parent=11 // pred_region
          _
        $region40: #{tpu_custom_call.1} parent=11 // pred_fallthru
          _
      $region12: #{tpu_custom_call.1} parent=5 // pred_fallthru
        _
      %p249 = scmp.lt.s32.totalorder %s16, 4
      // Predicated region
      $region41: #{tpu_custom_call.1} parent=5 // pred_check
        %p250 = pneg %p249
      $region42: #{tpu_custom_call.1} parent=5 // pred_check_branch
        %252 = sbr.rel (%p250) target = $region44
      $region43: #{tpu_custom_call.1} parent=5 // pred_region
        _
      $region44: #{tpu_custom_call.1} parent=5 // pred_fallthru
        _
      %p253 = scmp.le.s32.totalorder 1, %s16
      %p254 = scmp.lt.s32.totalorder %s16, 5
      %p255 = pnand %p253, %p254
      %p256 = pneg %p255
      // Predicated region
      $region45: #{tpu_custom_call.1} parent=5 // pred_check
        _
      $region46: #{tpu_custom_call.1} parent=5 // pred_check_branch
        %258 = sbr.rel (%p255) target = $region48
      $region47: #{tpu_custom_call.1} parent=5 // pred_region
        %s259 = ssub.s32 %s16, 1
        %p260 = scmp.lt.s32.totalorder %s25, 1
        %s261 = scalar_select %p260, %s25, 1
        %s262 = smul.addr %s261, 36
        %s263 = smul.addr %s262, 4
        %s264 = scalar_lea.vmem %s0, %s263
        %p265 = pneg %p54
        %p266 = pneg %p51
        %p267 = pneg %p75
        %p268 = pneg %p72
        %p269 = pneg %p96
        %p270 = pneg %p93
        %p271 = pneg %p117
        %p272 = pneg %p114
        %p273 = pneg %p138
        %p274 = pneg %p135
        %p275 = pneg %p159
        %p276 = pneg %p156
        %p277 = pneg %p180
        %p278 = pneg %p177
        %p279 = pneg %p208
        %p280 = pneg %p205
        %s281 = sand.u32 %s195, 1
        %s282 = scalar_lea.sflag [#allocation4], %s281
        %s283 = sand.u32 %s195, 1
        %s284 = smul.addr %s283, 128
        %s285 = scalar_lea.vmem [#allocation3], %s284
        %p286 = scmp.lt.s32.totalorder %s25, 1
        %s287 = scalar_select %p286, %s25, 1
        %s288 = smul.addr %s287, 36
        %s289 = smul.addr %s288, 4
        %s290 = scalar_lea.vmem %s0, %s289
        %s291 = smul.u32 8, %s26
        %s293 = smul.u32 %s26, 8
        %s294 = smul.u32 %s293, 2
        %s295 = smul.addr %s294, 4
        %s296 = scalar_lea.vmem %s290, %s295
        %v297 = vld [vmem:[%s296] sm:$0xf]
        %v298 = vld [vmem:[%s296 + $0x4] sm:$0xf]
        %v299 = vld [vmem:[%s296 + $0x8] sm:$0xf]
        %v300 = vld [vmem:[%s296 + $0xc] sm:$0xf]
        %v301 = vld [vmem:[%s296 + $0x10] sm:$0xf]
        %v302 = vld [vmem:[%s296 + $0x14] sm:$0xf]
        %v303 = vld [vmem:[%s296 + $0x18] sm:$0xf]
        %v304 = vld [vmem:[%s296 + $0x1c] sm:$0xf]
        %v305 = vld [vmem:[%s296 + $0x20] sm:$0xf]
        %v306 = vld [vmem:[%s296 + $0x24] sm:$0xf]
        %v307 = vld [vmem:[%s296 + $0x28] sm:$0xf]
        %v308 = vld [vmem:[%s296 + $0x2c] sm:$0xf]
        %v309 = vld [vmem:[%s296 + $0x30] sm:$0xf]
        %v310 = vld [vmem:[%s296 + $0x34] sm:$0xf]
        %v311 = vld [vmem:[%s296 + $0x38] sm:$0xf]
        %v312 = vld [vmem:[%s296 + $0x3c] sm:$0xf]
        %v313 = vld [vmem:[%s296 + $0x40] sm:$0xf]
        %v314 = vld [vmem:[%s296 + $0x44] sm:$0xf]
        %v315 = vld [vmem:[%s296 + $0x48] sm:$0xf]
        %v316 = vld [vmem:[%s296 + $0x4c] sm:$0xf]
        %v317 = vld [vmem:[%s1] sm:$0xf]
        %v318 = vld [vmem:[%s1 + $0x4] sm:$0xf]
        %v319 = vld [vmem:[%s2] sm:$0x1]
        %v321 = vlaneseq
        %v322 = vshrl.u32 %v321, 7
        %v323 = vsub.s32 0, %v322
        %v324 = vrot.slane %v319, %v323
        %v346 = vunpack.c.l.b16 %v297
        %v347 = vunpack.c.l.b16 %v298
        %v348 = vunpack.c.l.b16 %v299
        %v349 = vunpack.c.l.b16 %v300
        %v350 = vunpack.c.l.b16 %v301
        %v351 = vunpack.c.l.b16 %v302
        %v352 = vunpack.c.l.b16 %v303
        %v353 = vunpack.c.l.b16 %v304
        %v354 = vunpack.c.l.b16 %v305
        %v355 = vunpack.c.l.b16 %v306
        %v356 = vunpack.c.l.b16 %v307
        %v357 = vunpack.c.l.b16 %v308
        %v358 = vunpack.c.l.b16 %v309
        %v359 = vunpack.c.l.b16 %v310
        %v360 = vunpack.c.l.b16 %v311
        %v361 = vunpack.c.l.b16 %v312
        %v362 = vunpack.c.l.b16 %v313
        %v363 = vunpack.c.l.b16 %v314
        %v364 = vunpack.c.l.b16 %v315
        %v365 = vunpack.c.l.b16 %v316
        %v366 = vpack.c.b16 %v347, %v346
        %v367 = vpack.c.b16 %v349, %v348
        %v368 = vpack.c.b16 %v351, %v350
        %v369 = vpack.c.b16 %v353, %v352
        %v370 = vpack.c.b16 %v355, %v354
        %v371 = vpack.c.b16 %v357, %v356
        %v372 = vpack.c.b16 %v359, %v358
        %v373 = vpack.c.b16 %v361, %v360
        %v374 = vpack.c.b16 %v363, %v362
        %v375 = vpack.c.b16 %v365, %v364
        %v378 = vunpack.c.l.b16 %v317
        %v379 = vunpack.c.l.b16 %v318
        %v380 = vpack.c.b16 %v379, %v378
        %vm382 = vcmask 130048
        %v384 = vsel %vm382, %v366, 0
        %v387 = vsel %vm382, %v367, 0
        %v390 = vsel %vm382, %v368, 0
        %v393 = vsel %vm382, %v369, 0
        %v396 = vsel %vm382, %v370, 0
        %v399 = vsel %vm382, %v371, 0
        %v402 = vsel %vm382, %v372, 0
        %v405 = vsel %vm382, %v373, 0
        %v408 = vsel %vm382, %v374, 0
        %v411 = vsel %vm382, %v375, 0
        %413 = vmatprep.subr.bf16.mxu0 0
        %414 = vmatpush1.bf16.msra.mxu0 %v380
        %415 = vmatprep.subr.bf16.mxu0 0
        %416 = vmatpush1.bf16.msra.mxu0 0
        %417 = vmatprep.subr.bf16.mxu0 0
        %418 = vmatpush1.bf16.msra.mxu0 0
        %419 = vmatprep.subr.bf16.mxu0 0
        %420 = vmatpush1.bf16.msra.mxu0 0
        %421 = vmatprep.subr.bf16.mxu0 0
        %422 = vmatpush1.bf16.msra.mxu0 0
        %423 = vmatprep.subr.bf16.mxu0 0
        %424 = vmatpush1.bf16.msra.mxu0 0
        %425 = vmatprep.subr.bf16.mxu0 0
        %426 = vmatpush1.bf16.msra.mxu0 0
        %427 = vmatprep.subr.bf16.mxu0 0
        %428 = vmatpush1.bf16.msra.mxu0 0
        %429 = vmatprep.subr.bf16.mxu0 0
        %430 = vmatpush1.bf16.msra.mxu0 0
        %431 = vmatprep.subr.bf16.mxu0 0
        %432 = vmatpush1.bf16.msra.mxu0 0
        %433 = vmatprep.subr.bf16.mxu0 0
        %434 = vmatpush1.bf16.msra.mxu0 0
        %435 = vmatprep.subr.bf16.mxu0 0
        %436 = vmatpush1.bf16.msra.mxu0 0
        %437 = vmatprep.subr.bf16.mxu0 0
        %438 = vmatpush1.bf16.msra.mxu0 0
        %439 = vmatprep.subr.bf16.mxu0 0
        %440 = vmatpush1.bf16.msra.mxu0 0
        %441 = vmatprep.subr.bf16.mxu0 0
        %442 = vmatpush1.bf16.msra.mxu0 0
        %443 = vmatprep.subr.bf16.mxu0 0
        %444 = vmatpush1.bf16.msra.mxu0 0
        %445 = vmatprep.mubr.bf16.mxu0 0
        %446 = vmatmul.mubr.bf16.gmra.mrb[0].mxu0 %v384
        %v447 = vpop.f32.mrb[0].mxu0
        %v448 = vadd.f32 %v324, %v447
        %v449 = vpop.f32.mrb[0].mxu0
        %v450 = vpop.f32.mrb[0].mxu0
        %v451 = vadd.f32 %v324, %v450
        %v452 = vpop.f32.mrb[0].mxu0
        %453 = vmatprep.mubr.bf16.mxu0 0
        %454 = vmatmul.mubr.bf16.gmra.mrb[0].mxu0 %v387
        %v455 = vpop.f32.mrb[0].mxu0
        %v456 = vadd.f32 %v324, %v455
        %v457 = vpop.f32.mrb[0].mxu0
        %v458 = vpop.f32.mrb[0].mxu0
        %v459 = vadd.f32 %v324, %v458
        %v460 = vpop.f32.mrb[0].mxu0
        %461 = vmatprep.mubr.bf16.mxu0 0
        %462 = vmatmul.mubr.bf16.gmra.mrb[0].mxu0 %v390
        %v463 = vpop.f32.mrb[0].mxu0
        %v464 = vadd.f32 %v324, %v463
        %v465 = vpop.f32.mrb[0].mxu0
        %v466 = vpop.f32.mrb[0].mxu0
        %v467 = vadd.f32 %v324, %v466
        %v468 = vpop.f32.mrb[0].mxu0
        %469 = vmatprep.mubr.bf16.mxu0 0
        %470 = vmatmul.mubr.bf16.gmra.mrb[0].mxu0 %v393
        %v471 = vpop.f32.mrb[0].mxu0
        %v472 = vadd.f32 %v324, %v471
        %v473 = vpop.f32.mrb[0].mxu0
        %v474 = vpop.f32.mrb[0].mxu0
        %v475 = vadd.f32 %v324, %v474
        %v476 = vpop.f32.mrb[0].mxu0
        %477 = vmatprep.mubr.bf16.mxu0 0
        %478 = vmatmul.mubr.bf16.gmra.mrb[0].mxu0 %v396
        %v479 = vpop.f32.mrb[0].mxu0
        %v480 = vadd.f32 %v324, %v479
        %v481 = vpop.f32.mrb[0].mxu0
        %v482 = vpop.f32.mrb[0].mxu0
        %v483 = vadd.f32 %v324, %v482
        %v484 = vpop.f32.mrb[0].mxu0
        %485 = vmatprep.mubr.bf16.mxu0 0
        %486 = vmatmul.mubr.bf16.gmra.mrb[0].mxu0 %v399
        %v487 = vpop.f32.mrb[0].mxu0
        %v488 = vadd.f32 %v324, %v487
        %v489 = vpop.f32.mrb[0].mxu0
        %v490 = vpop.f32.mrb[0].mxu0
        %v491 = vadd.f32 %v324, %v490
        %v492 = vpop.f32.mrb[0].mxu0
        %493 = vmatprep.mubr.bf16.mxu0 0
        %494 = vmatmul.mubr.bf16.gmra.mrb[0].mxu0 %v402
        %v495 = vpop.f32.mrb[0].mxu0
        %v496 = vadd.f32 %v324, %v495
        %v497 = vpop.f32.mrb[0].mxu0
        %v498 = vpop.f32.mrb[0].mxu0
        %v499 = vadd.f32 %v324, %v498
        %v500 = vpop.f32.mrb[0].mxu0
        %501 = vmatprep.mubr.bf16.mxu0 0
        %502 = vmatmul.mubr.bf16.gmra.mrb[0].mxu0 %v405
        %v503 = vpop.f32.mrb[0].mxu0
        %v504 = vadd.f32 %v324, %v503
        %v505 = vpop.f32.mrb[0].mxu0
        %v506 = vpop.f32.mrb[0].mxu0
        %v507 = vadd.f32 %v324, %v506
        %v508 = vpop.f32.mrb[0].mxu0
        %509 = vmatprep.mubr.bf16.mxu0 0
        %510 = vmatmul.mubr.bf16.gmra.mrb[0].mxu0 %v408
        %v511 = vpop.f32.mrb[0].mxu0
        %v512 = vadd.f32 %v324, %v511
        %v513 = vpop.f32.mrb[0].mxu0
        %v514 = vpop.f32.mrb[0].mxu0
        %v515 = vadd.f32 %v324, %v514
        %v516 = vpop.f32.mrb[0].mxu0
        %517 = vmatprep.mubr.bf16.mxu0 0
        %518 = vmatmul.mubr.bf16.gmra.mrb[0].mxu0 %v411
        %v519 = vpop.f32.mrb[0].mxu0
        %v520 = vadd.f32 %v324, %v519
        %v521 = vpop.f32.mrb[0].mxu0
        %v522 = vpop.f32.mrb[0].mxu0
        %v523 = vadd.f32 %v324, %v522
        %v524 = vpop.f32.mrb[0].mxu0
        %525 = vdwg.mxu0
        %v526 = vmax.f32 %v448, 0.0
        %v527 = vmax.f32 %v451, 0.0
        %v528 = vmax.f32 %v456, 0.0
        %v529 = vmax.f32 %v459, 0.0
        %v530 = vmax.f32 %v464, 0.0
        %v531 = vmax.f32 %v467, 0.0
        %v532 = vmax.f32 %v472, 0.0
        %v533 = vmax.f32 %v475, 0.0
        %v534 = vmax.f32 %v480, 0.0
        %v535 = vmax.f32 %v483, 0.0
        %v536 = vmax.f32 %v488, 0.0
        %v537 = vmax.f32 %v491, 0.0
        %v538 = vmax.f32 %v496, 0.0
        %v539 = vmax.f32 %v499, 0.0
        %v540 = vmax.f32 %v504, 0.0
        %v541 = vmax.f32 %v507, 0.0
        %v542 = vmax.f32 %v512, 0.0
        %v543 = vmax.f32 %v515, 0.0
        %v544 = vmax.f32 %v520, 0.0
        %v545 = vmax.f32 %v523, 0.0
        %v546 = vlaneseq
        %v547 = vshrl.u32 %v546, 7
        %v548 = vadd.s32 %v547, 8
        %v549 = vadd.s32 %v547, 16
        %v550 = vadd.s32 %v547, 24
        %v551 = vadd.s32 %v547, 32
        %v552 = vadd.s32 %v547, 40
        %v553 = vadd.s32 %v547, 48
        %v554 = vadd.s32 %v547, 56
        %v555 = vadd.s32 %v547, 64
        %v556 = vadd.s32 %v547, 72
        %v557 = vadd.s32 %v547, 80
        %v558 = vadd.s32 %v547, 88
        %v559 = vadd.s32 %v547, 96
        %v560 = vadd.s32 %v547, 104
        %v561 = vadd.s32 %v547, 112
        %v562 = vadd.s32 %v547, 120
        %v563 = vadd.s32 %v547, 128
        %v564 = vadd.s32 %v547, 136
        %v565 = vadd.s32 %v547, 144
        %v566 = vadd.s32 %v547, 152
        %vm567 = vcmp.lt.s32.totalorder %v547, 0
        %v568 = vsub.s32 0, %v547
        %v569 = vsel %vm567, %v568, %v547
        %v570 = vshrl.u32 %v569, 4
        %v571 = vand.u32 %v569, 15
        %v572 = vsub.s32 0, %v571
        %v573 = vsel %vm567, %v572, %v571
        %vm574 = vcmp.lt.s32.totalorder %v548, 0
        %v575 = vsub.s32 0, %v548
        %v576 = vsel %vm574, %v575, %v548
        %v577 = vshrl.u32 %v576, 4
        %v578 = vand.u32 %v576, 15
        %v579 = vsub.s32 0, %v578
        %v580 = vsel %vm574, %v579, %v578
        %vm581 = vcmp.lt.s32.totalorder %v549, 0
        %v582 = vsub.s32 0, %v549
        %v583 = vsel %vm581, %v582, %v549
        %v584 = vshrl.u32 %v583, 4
        %v585 = vand.u32 %v583, 15
        %v586 = vsub.s32 0, %v585
        %v587 = vsel %vm581, %v586, %v585
        %vm588 = vcmp.lt.s32.totalorder %v550, 0
        %v589 = vsub.s32 0, %v550
        %v590 = vsel %vm588, %v589, %v550
        %v591 = vshrl.u32 %v590, 4
        %v592 = vand.u32 %v590, 15
        %v593 = vsub.s32 0, %v592
        %v594 = vsel %vm588, %v593, %v592
        %vm595 = vcmp.lt.s32.totalorder %v551, 0
        %v596 = vsub.s32 0, %v551
        %v597 = vsel %vm595, %v596, %v551
        %v598 = vshrl.u32 %v597, 4
        %v599 = vand.u32 %v597, 15
        %v600 = vsub.s32 0, %v599
        %v601 = vsel %vm595, %v600, %v599
        %vm602 = vcmp.lt.s32.totalorder %v552, 0
        %v603 = vsub.s32 0, %v552
        %v604 = vsel %vm602, %v603, %v552
        %v605 = vshrl.u32 %v604, 4
        %v606 = vand.u32 %v604, 15
        %v607 = vsub.s32 0, %v606
        %v608 = vsel %vm602, %v607, %v606
        %vm609 = vcmp.lt.s32.totalorder %v553, 0
        %v610 = vsub.s32 0, %v553
        %v611 = vsel %vm609, %v610, %v553
        %v612 = vshrl.u32 %v611, 4
        %v613 = vand.u32 %v611, 15
        %v614 = vsub.s32 0, %v613
        %v615 = vsel %vm609, %v614, %v613
        %vm616 = vcmp.lt.s32.totalorder %v554, 0
        %v617 = vsub.s32 0, %v554
        %v618 = vsel %vm616, %v617, %v554
        %v619 = vshrl.u32 %v618, 4
        %v620 = vand.u32 %v618, 15
        %v621 = vsub.s32 0, %v620
        %v622 = vsel %vm616, %v621, %v620
        %vm623 = vcmp.lt.s32.totalorder %v555, 0
        %v624 = vsub.s32 0, %v555
        %v625 = vsel %vm623, %v624, %v555
        %v626 = vshrl.u32 %v625, 4
        %v627 = vand.u32 %v625, 15
        %v628 = vsub.s32 0, %v627
        %v629 = vsel %vm623, %v628, %v627
        %vm630 = vcmp.lt.s32.totalorder %v556, 0
        %v631 = vsub.s32 0, %v556
        %v632 = vsel %vm630, %v631, %v556
        %v633 = vshrl.u32 %v632, 4
        %v634 = vand.u32 %v632, 15
        %v635 = vsub.s32 0, %v634
        %v636 = vsel %vm630, %v635, %v634
        %vm637 = vcmp.lt.s32.totalorder %v557, 0
        %v638 = vsub.s32 0, %v557
        %v639 = vsel %vm637, %v638, %v557
        %v640 = vshrl.u32 %v639, 4
        %v641 = vand.u32 %v639, 15
        %v642 = vsub.s32 0, %v641
        %v643 = vsel %vm637, %v642, %v641
        %vm644 = vcmp.lt.s32.totalorder %v558, 0
        %v645 = vsub.s32 0, %v558
        %v646 = vsel %vm644, %v645, %v558
        %v647 = vshrl.u32 %v646, 4
        %v648 = vand.u32 %v646, 15
        %v649 = vsub.s32 0, %v648
        %v650 = vsel %vm644, %v649, %v648
        %vm651 = vcmp.lt.s32.totalorder %v559, 0
        %v652 = vsub.s32 0, %v559
        %v653 = vsel %vm651, %v652, %v559
        %v654 = vshrl.u32 %v653, 4
        %v655 = vand.u32 %v653, 15
        %v656 = vsub.s32 0, %v655
        %v657 = vsel %vm651, %v656, %v655
        %vm658 = vcmp.lt.s32.totalorder %v560, 0
        %v659 = vsub.s32 0, %v560
        %v660 = vsel %vm658, %v659, %v560
        %v661 = vshrl.u32 %v660, 4
        %v662 = vand.u32 %v660, 15
        %v663 = vsub.s32 0, %v662
        %v664 = vsel %vm658, %v663, %v662
        %vm665 = vcmp.lt.s32.totalorder %v561, 0
        %v666 = vsub.s32 0, %v561
        %v667 = vsel %vm665, %v666, %v561
        %v668 = vshrl.u32 %v667, 4
        %v669 = vand.u32 %v667, 15
        %v670 = vsub.s32 0, %v669
        %v671 = vsel %vm665, %v670, %v669
        %vm672 = vcmp.lt.s32.totalorder %v562, 0
        %v673 = vsub.s32 0, %v562
        %v674 = vsel %vm672, %v673, %v562
        %v675 = vshrl.u32 %v674, 4
        %v676 = vand.u32 %v674, 15
        %v677 = vsub.s32 0, %v676
        %v678 = vsel %vm672, %v677, %v676
        %vm679 = vcmp.lt.s32.totalorder %v563, 0
        %v680 = vsub.s32 0, %v563
        %v681 = vsel %vm679, %v680, %v563
        %v682 = vshrl.u32 %v681, 4
        %v683 = vand.u32 %v681, 15
        %v684 = vsub.s32 0, %v683
        %v685 = vsel %vm679, %v684, %v683
        %vm686 = vcmp.lt.s32.totalorder %v564, 0
        %v687 = vsub.s32 0, %v564
        %v688 = vsel %vm686, %v687, %v564
        %v689 = vshrl.u32 %v688, 4
        %v690 = vand.u32 %v688, 15
        %v691 = vsub.s32 0, %v690
        %v692 = vsel %vm686, %v691, %v690
        %vm693 = vcmp.lt.s32.totalorder %v565, 0
        %v694 = vsub.s32 0, %v565
        %v695 = vsel %vm693, %v694, %v565
        %v696 = vshrl.u32 %v695, 4
        %v697 = vand.u32 %v695, 15
        %v698 = vsub.s32 0, %v697
        %v699 = vsel %vm693, %v698, %v697
        %vm700 = vcmp.lt.s32.totalorder %v566, 0
        %v701 = vsub.s32 0, %v566
        %v702 = vsel %vm700, %v701, %v566
        %v703 = vshrl.u32 %v702, 4
        %v704 = vand.u32 %v702, 15
        %v705 = vsub.s32 0, %v704
        %v706 = vsel %vm700, %v705, %v704
        %vm707 = vcmp.ne.s32.totalorder %v573, 0
        %vm708 = vcmp.ne.s32.totalorder %v580, 0
        %vm709 = vcmp.ne.s32.totalorder %v587, 0
        %vm710 = vcmp.ne.s32.totalorder %v594, 0
        %vm711 = vcmp.ne.s32.totalorder %v601, 0
        %vm712 = vcmp.ne.s32.totalorder %v608, 0
        %vm713 = vcmp.ne.s32.totalorder %v615, 0
        %vm714 = vcmp.ne.s32.totalorder %v622, 0
        %vm715 = vcmp.ne.s32.totalorder %v629, 0
        %vm716 = vcmp.ne.s32.totalorder %v636, 0
        %vm717 = vcmp.ne.s32.totalorder %v643, 0
        %vm718 = vcmp.ne.s32.totalorder %v650, 0
        %vm719 = vcmp.ne.s32.totalorder %v657, 0
        %vm720 = vcmp.ne.s32.totalorder %v664, 0
        %vm721 = vcmp.ne.s32.totalorder %v671, 0
        %vm722 = vcmp.ne.s32.totalorder %v678, 0
        %vm723 = vcmp.ne.s32.totalorder %v685, 0
        %vm724 = vcmp.ne.s32.totalorder %v692, 0
        %vm725 = vcmp.ne.s32.totalorder %v699, 0
        %vm726 = vcmp.ne.s32.totalorder %v706, 0
        %vm727 = vcmp.lt.s32.totalorder %v573, 0
        %vm728 = vcmp.lt.s32.totalorder %v580, 0
        %vm729 = vcmp.lt.s32.totalorder %v587, 0
        %vm730 = vcmp.lt.s32.totalorder %v594, 0
        %vm731 = vcmp.lt.s32.totalorder %v601, 0
        %vm732 = vcmp.lt.s32.totalorder %v608, 0
        %vm733 = vcmp.lt.s32.totalorder %v615, 0
        %vm734 = vcmp.lt.s32.totalorder %v622, 0
        %vm735 = vcmp.lt.s32.totalorder %v629, 0
        %vm736 = vcmp.lt.s32.totalorder %v636, 0
        %vm737 = vcmp.lt.s32.totalorder %v643, 0
        %vm738 = vcmp.lt.s32.totalorder %v650, 0
        %vm739 = vcmp.lt.s32.totalorder %v657, 0
        %vm740 = vcmp.lt.s32.totalorder %v664, 0
        %vm741 = vcmp.lt.s32.totalorder %v671, 0
        %vm742 = vcmp.lt.s32.totalorder %v678, 0
        %vm743 = vcmp.lt.s32.totalorder %v685, 0
        %vm744 = vcmp.lt.s32.totalorder %v692, 0
        %vm745 = vcmp.lt.s32.totalorder %v699, 0
        %vm746 = vcmp.lt.s32.totalorder %v706, 0
        %vm747 = vmand %vm727, %vm707
        %vm748 = vmand %vm728, %vm708
        %vm749 = vmand %vm729, %vm709
        %vm750 = vmand %vm730, %vm710
        %vm751 = vmand %vm731, %vm711
        %vm752 = vmand %vm732, %vm712
        %vm753 = vmand %vm733, %vm713
        %vm754 = vmand %vm734, %vm714
        %vm755 = vmand %vm735, %vm715
        %vm756 = vmand %vm736, %vm716
        %vm757 = vmand %vm737, %vm717
        %vm758 = vmand %vm738, %vm718
        %vm759 = vmand %vm739, %vm719
        %vm760 = vmand %vm740, %vm720
        %vm761 = vmand %vm741, %vm721
        %vm762 = vmand %vm742, %vm722
        %vm763 = vmand %vm743, %vm723
        %vm764 = vmand %vm744, %vm724
        %vm765 = vmand %vm745, %vm725
        %vm766 = vmand %vm746, %vm726
        %v767 = vadd.s32 %v573, 16
        %v768 = vadd.s32 %v580, 16
        %v769 = vadd.s32 %v587, 16
        %v770 = vadd.s32 %v594, 16
        %v771 = vadd.s32 %v601, 16
        %v772 = vadd.s32 %v608, 16
        %v773 = vadd.s32 %v615, 16
        %v774 = vadd.s32 %v622, 16
        %v775 = vadd.s32 %v629, 16
        %v776 = vadd.s32 %v636, 16
        %v777 = vadd.s32 %v643, 16
        %v778 = vadd.s32 %v650, 16
        %v779 = vadd.s32 %v657, 16
        %v780 = vadd.s32 %v664, 16
        %v781 = vadd.s32 %v671, 16
        %v782 = vadd.s32 %v678, 16
        %v783 = vadd.s32 %v685, 16
        %v784 = vadd.s32 %v692, 16
        %v785 = vadd.s32 %v699, 16
        %v786 = vadd.s32 %v706, 16
        %v787 = vsel %vm747, %v767, %v573
        %v788 = vsel %vm748, %v768, %v580
        %v789 = vsel %vm749, %v769, %v587
        %v790 = vsel %vm750, %v770, %v594
        %v791 = vsel %vm751, %v771, %v601
        %v792 = vsel %vm752, %v772, %v608
        %v793 = vsel %vm753, %v773, %v615
        %v794 = vsel %vm754, %v774, %v622
        %v795 = vsel %vm755, %v775, %v629
        %v796 = vsel %vm756, %v776, %v636
        %v797 = vsel %vm757, %v777, %v643
        %v798 = vsel %vm758, %v778, %v650
        %v799 = vsel %vm759, %v779, %v657
        %v800 = vsel %vm760, %v780, %v664
        %v801 = vsel %vm761, %v781, %v671
        %v802 = vsel %vm762, %v782, %v678
        %v803 = vsel %vm763, %v783, %v685
        %v804 = vsel %vm764, %v784, %v692
        %v805 = vsel %vm765, %v785, %v699
        %v806 = vsel %vm766, %v786, %v706
        %vm807 = vcmp.ge.s32.totalorder %v787, 1
        %vm808 = vcmp.ge.s32.totalorder %v788, 1
        %vm809 = vcmp.ge.s32.totalorder %v789, 1
        %vm810 = vcmp.ge.s32.totalorder %v790, 1
        %vm811 = vcmp.ge.s32.totalorder %v791, 1
        %vm812 = vcmp.ge.s32.totalorder %v792, 1
        %vm813 = vcmp.ge.s32.totalorder %v793, 1
        %vm814 = vcmp.ge.s32.totalorder %v794, 1
        %vm815 = vcmp.ge.s32.totalorder %v795, 1
        %vm816 = vcmp.ge.s32.totalorder %v796, 1
        %vm817 = vcmp.ge.s32.totalorder %v797, 1
        %vm818 = vcmp.ge.s32.totalorder %v798, 1
        %vm819 = vcmp.ge.s32.totalorder %v799, 1
        %vm820 = vcmp.ge.s32.totalorder %v800, 1
        %vm821 = vcmp.ge.s32.totalorder %v801, 1
        %vm822 = vcmp.ge.s32.totalorder %v802, 1
        %vm823 = vcmp.ge.s32.totalorder %v803, 1
        %vm824 = vcmp.ge.s32.totalorder %v804, 1
        %vm825 = vcmp.ge.s32.totalorder %v805, 1
        %vm826 = vcmp.ge.s32.totalorder %v806, 1
        %v827 = vrot.slane %v526, 7
        %v828 = vrot.slane %v527, 7
        %v829 = vrot.slane %v528, 7
        %v830 = vrot.slane %v529, 7
        %v831 = vrot.slane %v530, 7
        %v832 = vrot.slane %v531, 7
        %v833 = vrot.slane %v532, 7
        %v834 = vrot.slane %v533, 7
        %v835 = vrot.slane %v534, 7
        %v836 = vrot.slane %v535, 7
        %v837 = vrot.slane %v536, 7
        %v838 = vrot.slane %v537, 7
        %v839 = vrot.slane %v538, 7
        %v840 = vrot.slane %v539, 7
        %v841 = vrot.slane %v540, 7
        %v842 = vrot.slane %v541, 7
        %v843 = vrot.slane %v542, 7
        %v844 = vrot.slane %v543, 7
        %v845 = vrot.slane %v544, 7
        %v846 = vrot.slane %v545, 7
        %vm847 = vcmp.lt.s32.totalorder %v547, 1
        %v848 = vsel %vm847, %v845, %v846
        %v849 = vsel %vm847, %v844, %v845
        %v850 = vsel %vm847, %v843, %v844
        %v851 = vsel %vm847, %v842, %v843
        %v852 = vsel %vm847, %v841, %v842
        %v853 = vsel %vm847, %v840, %v841
        %v854 = vsel %vm847, %v839, %v840
        %v855 = vsel %vm847, %v838, %v839
        %v856 = vsel %vm847, %v837, %v838
        %v857 = vsel %vm847, %v836, %v837
        %v858 = vsel %vm847, %v835, %v836
        %v859 = vsel %vm847, %v834, %v835
        %v860 = vsel %vm847, %v833, %v834
        %v861 = vsel %vm847, %v832, %v833
        %v862 = vsel %vm847, %v831, %v832
        %v863 = vsel %vm847, %v830, %v831
        %v864 = vsel %vm847, %v829, %v830
        %v865 = vsel %vm847, %v828, %v829
        %v866 = vsel %vm847, %v827, %v828
        %v867 = vsel %vm847, %v846, %v827
        %v868 = vsel %vm807, 1, 0
        %v869 = vsel %vm808, 1, 0
        %v870 = vsel %vm809, 1, 0
        %v871 = vsel %vm810, 1, 0
        %v872 = vsel %vm811, 1, 0
        %v873 = vsel %vm812, 1, 0
        %v874 = vsel %vm813, 1, 0
        %v875 = vsel %vm814, 1, 0
        %v876 = vsel %vm815, 1, 0
        %v877 = vsel %vm816, 1, 0
        %v878 = vsel %vm817, 1, 0
        %v879 = vsel %vm818, 1, 0
        %v880 = vsel %vm819, 1, 0
        %v881 = vsel %vm820, 1, 0
        %v882 = vsel %vm821, 1, 0
        %v883 = vsel %vm822, 1, 0
        %v884 = vsel %vm823, 1, 0
        %v885 = vsel %vm824, 1, 0
        %v886 = vsel %vm825, 1, 0
        %v887 = vsel %vm826, 1, 0
        %vm888 = vcmp.eq.s32.totalorder %v868, 1
        %vm889 = vcmp.eq.s32.totalorder %v869, 1
        %vm890 = vcmp.eq.s32.totalorder %v870, 1
        %vm891 = vcmp.eq.s32.totalorder %v871, 1
        %vm892 = vcmp.eq.s32.totalorder %v872, 1
        %vm893 = vcmp.eq.s32.totalorder %v873, 1
        %vm894 = vcmp.eq.s32.totalorder %v874, 1
        %vm895 = vcmp.eq.s32.totalorder %v875, 1
        %vm896 = vcmp.eq.s32.totalorder %v876, 1
        %vm897 = vcmp.eq.s32.totalorder %v877, 1
        %vm898 = vcmp.eq.s32.totalorder %v878, 1
        %vm899 = vcmp.eq.s32.totalorder %v879, 1
        %vm900 = vcmp.eq.s32.totalorder %v880, 1
        %vm901 = vcmp.eq.s32.totalorder %v881, 1
        %vm902 = vcmp.eq.s32.totalorder %v882, 1
        %vm903 = vcmp.eq.s32.totalorder %v883, 1
        %vm904 = vcmp.eq.s32.totalorder %v884, 1
        %vm905 = vcmp.eq.s32.totalorder %v885, 1
        %vm906 = vcmp.eq.s32.totalorder %v886, 1
        %vm907 = vcmp.eq.s32.totalorder %v887, 1
        %v908 = vsel %vm888, %v867, 0.0
        %v909 = vsel %vm889, %v866, 0.0
        %v910 = vsel %vm890, %v865, 0.0
        %v911 = vsel %vm891, %v864, 0.0
        %v912 = vsel %vm892, %v863, 0.0
        %v913 = vsel %vm893, %v862, 0.0
        %v914 = vsel %vm894, %v861, 0.0
        %v915 = vsel %vm895, %v860, 0.0
        %v916 = vsel %vm896, %v859, 0.0
        %v917 = vsel %vm897, %v858, 0.0
        %v918 = vsel %vm898, %v857, 0.0
        %v919 = vsel %vm899, %v856, 0.0
        %v920 = vsel %vm900, %v855, 0.0
        %v921 = vsel %vm901, %v854, 0.0
        %v922 = vsel %vm902, %v853, 0.0
        %v923 = vsel %vm903, %v852, 0.0
        %v924 = vsel %vm904, %v851, 0.0
        %v925 = vsel %vm905, %v850, 0.0
        %v926 = vsel %vm906, %v849, 0.0
        %v927 = vsel %vm907, %v848, 0.0
        %vm928 = vcmp.lt.s32.totalorder %v787, 15
        %vm929 = vcmp.lt.s32.totalorder %v788, 15
        %vm930 = vcmp.lt.s32.totalorder %v789, 15
        %vm931 = vcmp.lt.s32.totalorder %v790, 15
        %vm932 = vcmp.lt.s32.totalorder %v791, 15
        %vm933 = vcmp.lt.s32.totalorder %v792, 15
        %vm934 = vcmp.lt.s32.totalorder %v793, 15
        %vm935 = vcmp.lt.s32.totalorder %v794, 15
        %vm936 = vcmp.lt.s32.totalorder %v795, 15
        %vm937 = vcmp.lt.s32.totalorder %v796, 15
        %vm938 = vcmp.lt.s32.totalorder %v797, 15
        %vm939 = vcmp.lt.s32.totalorder %v798, 15
        %vm940 = vcmp.lt.s32.totalorder %v799, 15
        %vm941 = vcmp.lt.s32.totalorder %v800, 15
        %vm942 = vcmp.lt.s32.totalorder %v801, 15
        %vm943 = vcmp.lt.s32.totalorder %v802, 15
        %vm944 = vcmp.lt.s32.totalorder %v803, 15
        %vm945 = vcmp.lt.s32.totalorder %v804, 15
        %vm946 = vcmp.lt.s32.totalorder %v805, 15
        %vm947 = vcmp.lt.s32.totalorder %v806, 15
        %v948 = vrot.slane %v526, 1
        %v949 = vrot.slane %v527, 1
        %v950 = vrot.slane %v528, 1
        %v951 = vrot.slane %v529, 1
        %v952 = vrot.slane %v530, 1
        %v953 = vrot.slane %v531, 1
        %v954 = vrot.slane %v532, 1
        %v955 = vrot.slane %v533, 1
        %v956 = vrot.slane %v534, 1
        %v957 = vrot.slane %v535, 1
        %v958 = vrot.slane %v536, 1
        %v959 = vrot.slane %v537, 1
        %v960 = vrot.slane %v538, 1
        %v961 = vrot.slane %v539, 1
        %v962 = vrot.slane %v540, 1
        %v963 = vrot.slane %v541, 1
        %v964 = vrot.slane %v542, 1
        %v965 = vrot.slane %v543, 1
        %v966 = vrot.slane %v544, 1
        %v967 = vrot.slane %v545, 1
        %vm968 = vcmp.lt.s32.totalorder %v547, 7
        %v969 = vsel %vm968, %v966, %v967
        %v970 = vsel %vm968, %v965, %v966
        %v971 = vsel %vm968, %v964, %v965
        %v972 = vsel %vm968, %v963, %v964
        %v973 = vsel %vm968, %v962, %v963
        %v974 = vsel %vm968, %v961, %v962
        %v975 = vsel %vm968, %v960, %v961
        %v976 = vsel %vm968, %v959, %v960
        %v977 = vsel %vm968, %v958, %v959
        %v978 = vsel %vm968, %v957, %v958
        %v979 = vsel %vm968, %v956, %v957
        %v980 = vsel %vm968, %v955, %v956
        %v981 = vsel %vm968, %v954, %v955
        %v982 = vsel %vm968, %v953, %v954
        %v983 = vsel %vm968, %v952, %v953
        %v984 = vsel %vm968, %v951, %v952
        %v985 = vsel %vm968, %v950, %v951
        %v986 = vsel %vm968, %v949, %v950
        %v987 = vsel %vm968, %v948, %v949
        %v988 = vsel %vm968, %v967, %v948
        %v989 = vsel %vm928, 1, 0
        %v990 = vsel %vm929, 1, 0
        %v991 = vsel %vm930, 1, 0
        %v992 = vsel %vm931, 1, 0
        %v993 = vsel %vm932, 1, 0
        %v994 = vsel %vm933, 1, 0
        %v995 = vsel %vm934, 1, 0
        %v996 = vsel %vm935, 1, 0
        %v997 = vsel %vm936, 1, 0
        %v998 = vsel %vm937, 1, 0
        %v999 = vsel %vm938, 1, 0
        %v1000 = vsel %vm939, 1, 0
        %v1001 = vsel %vm940, 1, 0
        %v1002 = vsel %vm941, 1, 0
        %v1003 = vsel %vm942, 1, 0
        %v1004 = vsel %vm943, 1, 0
        %v1005 = vsel %vm944, 1, 0
        %v1006 = vsel %vm945, 1, 0
        %v1007 = vsel %vm946, 1, 0
        %v1008 = vsel %vm947, 1, 0
        %vm1009 = vcmp.eq.s32.totalorder %v989, 1
        %vm1010 = vcmp.eq.s32.totalorder %v990, 1
        %vm1011 = vcmp.eq.s32.totalorder %v991, 1
        %vm1012 = vcmp.eq.s32.totalorder %v992, 1
        %vm1013 = vcmp.eq.s32.totalorder %v993, 1
        %vm1014 = vcmp.eq.s32.totalorder %v994, 1
        %vm1015 = vcmp.eq.s32.totalorder %v995, 1
        %vm1016 = vcmp.eq.s32.totalorder %v996, 1
        %vm1017 = vcmp.eq.s32.totalorder %v997, 1
        %vm1018 = vcmp.eq.s32.totalorder %v998, 1
        %vm1019 = vcmp.eq.s32.totalorder %v999, 1
        %vm1020 = vcmp.eq.s32.totalorder %v1000, 1
        %vm1021 = vcmp.eq.s32.totalorder %v1001, 1
        %vm1022 = vcmp.eq.s32.totalorder %v1002, 1
        %vm1023 = vcmp.eq.s32.totalorder %v1003, 1
        %vm1024 = vcmp.eq.s32.totalorder %v1004, 1
        %vm1025 = vcmp.eq.s32.totalorder %v1005, 1
        %vm1026 = vcmp.eq.s32.totalorder %v1006, 1
        %vm1027 = vcmp.eq.s32.totalorder %v1007, 1
        %vm1028 = vcmp.eq.s32.totalorder %v1008, 1
        %v1029 = vsel %vm1009, %v987, 0.0
        %v1030 = vsel %vm1010, %v986, 0.0
        %v1031 = vsel %vm1011, %v985, 0.0
        %v1032 = vsel %vm1012, %v984, 0.0
        %v1033 = vsel %vm1013, %v983, 0.0
        %v1034 = vsel %vm1014, %v982, 0.0
        %v1035 = vsel %vm1015, %v981, 0.0
        %v1036 = vsel %vm1016, %v980, 0.0
        %v1037 = vsel %vm1017, %v979, 0.0
        %v1038 = vsel %vm1018, %v978, 0.0
        %v1039 = vsel %vm1019, %v977, 0.0
        %v1040 = vsel %vm1020, %v976, 0.0
        %v1041 = vsel %vm1021, %v975, 0.0
        %v1042 = vsel %vm1022, %v974, 0.0
        %v1043 = vsel %vm1023, %v973, 0.0
        %v1044 = vsel %vm1024, %v972, 0.0
        %v1045 = vsel %vm1025, %v971, 0.0
        %v1046 = vsel %vm1026, %v970, 0.0
        %v1047 = vsel %vm1027, %v969, 0.0
        %v1048 = vsel %vm1028, %v988, 0.0
        %v1049 = vpack.c.bf16 %v909, %v908
        %v1050 = vpack.c.bf16 %v911, %v910
        %v1051 = vpack.c.bf16 %v913, %v912
        %v1052 = vpack.c.bf16 %v915, %v914
        %v1053 = vpack.c.bf16 %v917, %v916
        %v1054 = vpack.c.bf16 %v919, %v918
        %v1055 = vpack.c.bf16 %v921, %v920
        %v1056 = vpack.c.bf16 %v923, %v922
        %v1057 = vpack.c.bf16 %v925, %v924
        %v1058 = vpack.c.bf16 %v927, %v926
        %vm1059 = vcmask 31744
        %1060 = vst.msk [vmem:[#allocation2] sm:$0xff] %vm1059, %v1049
        %1061 = vst.msk [vmem:[#allocation2 + $0x8] sm:$0xff] %vm1059, %v1050
        %1062 = vst.msk [vmem:[#allocation2 + $0x10] sm:$0xff] %vm1059, %v1051
        %1063 = vst.msk [vmem:[#allocation2 + $0x18] sm:$0xff] %vm1059, %v1052
        %1064 = vst.msk [vmem:[#allocation2 + $0x20] sm:$0xff] %vm1059, %v1053
        %1065 = vst.msk [vmem:[#allocation2 + $0x28] sm:$0xff] %vm1059, %v1054
        %1066 = vst.msk [vmem:[#allocation2 + $0x30] sm:$0xff] %vm1059, %v1055
        %1067 = vst.msk [vmem:[#allocation2 + $0x38] sm:$0xff] %vm1059, %v1056
        %1068 = vst.msk [vmem:[#allocation2 + $0x40] sm:$0xff] %vm1059, %v1057
        %1069 = vst.msk [vmem:[#allocation2 + $0x48] sm:$0xff] %vm1059, %v1058
        %v1070 = vpack.c.bf16 %v527, %v526
        %v1071 = vpack.c.bf16 %v529, %v528
        %v1072 = vpack.c.bf16 %v531, %v530
        %v1073 = vpack.c.bf16 %v533, %v532
        %v1074 = vpack.c.bf16 %v535, %v534
        %v1075 = vpack.c.bf16 %v537, %v536
        %v1076 = vpack.c.bf16 %v539, %v538
        %v1077 = vpack.c.bf16 %v541, %v540
        %v1078 = vpack.c.bf16 %v543, %v542
        %v1079 = vpack.c.bf16 %v545, %v544
        %s1080 = scalar_lea.vmem [#allocation2], 80
        %1081 = vst.msk [vmem:[%s1080] sm:$0xff] %vm1059, %v1070
        %1082 = vst.msk [vmem:[%s1080 + $0x8] sm:$0xff] %vm1059, %v1071
        %1083 = vst.msk [vmem:[%s1080 + $0x10] sm:$0xff] %vm1059, %v1072
        %1084 = vst.msk [vmem:[%s1080 + $0x18] sm:$0xff] %vm1059, %v1073
        %1085 = vst.msk [vmem:[%s1080 + $0x20] sm:$0xff] %vm1059, %v1074
        %1086 = vst.msk [vmem:[%s1080 + $0x28] sm:$0xff] %vm1059, %v1075
        %1087 = vst.msk [vmem:[%s1080 + $0x30] sm:$0xff] %vm1059, %v1076
        %1088 = vst.msk [vmem:[%s1080 + $0x38] sm:$0xff] %vm1059, %v1077
        %1089 = vst.msk [vmem:[%s1080 + $0x40] sm:$0xff] %vm1059, %v1078
        %1090 = vst.msk [vmem:[%s1080 + $0x48] sm:$0xff] %vm1059, %v1079
        %v1091 = vpack.c.bf16 %v1030, %v1029
        %v1092 = vpack.c.bf16 %v1032, %v1031
        %v1093 = vpack.c.bf16 %v1034, %v1033
        %v1094 = vpack.c.bf16 %v1036, %v1035
        %v1095 = vpack.c.bf16 %v1038, %v1037
        %v1096 = vpack.c.bf16 %v1040, %v1039
        %v1097 = vpack.c.bf16 %v1042, %v1041
        %v1098 = vpack.c.bf16 %v1044, %v1043
        %v1099 = vpack.c.bf16 %v1046, %v1045
        %v1100 = vpack.c.bf16 %v1048, %v1047
        %s1101 = scalar_lea.vmem [#allocation2], 160
        %1102 = vst.msk [vmem:[%s1101] sm:$0xff] %vm1059, %v1091
        %1103 = vst.msk [vmem:[%s1101 + $0x8] sm:$0xff] %vm1059, %v1092
        %1104 = vst.msk [vmem:[%s1101 + $0x10] sm:$0xff] %vm1059, %v1093
        %1105 = vst.msk [vmem:[%s1101 + $0x18] sm:$0xff] %vm1059, %v1094
        %1106 = vst.msk [vmem:[%s1101 + $0x20] sm:$0xff] %vm1059, %v1095
        %1107 = vst.msk [vmem:[%s1101 + $0x28] sm:$0xff] %vm1059, %v1096
        %1108 = vst.msk [vmem:[%s1101 + $0x30] sm:$0xff] %vm1059, %v1097
        %1109 = vst.msk [vmem:[%s1101 + $0x38] sm:$0xff] %vm1059, %v1098
        %1110 = vst.msk [vmem:[%s1101 + $0x40] sm:$0xff] %vm1059, %v1099
        %1111 = vst.msk [vmem:[%s1101 + $0x48] sm:$0xff] %vm1059, %v1100
        %p1112 = scmp.eq.s32.totalorder %s26, 0
        // Predicated region
        $region49: #{tpu_custom_call.1} parent=47 // pred_check
          %p1113 = pneg %p1112
        $region50: #{tpu_custom_call.1} parent=47 // pred_check_branch
          %1115 = sbr.rel (%p1113) target = $region52
        $region51: #{tpu_custom_call.1} parent=47 // pred_region
          %1116 = vst.msk [vmem:[#allocation2] sm:$0xff] %vm1059, 0
          %1117 = vst.msk [vmem:[#allocation2 + $0x50] sm:$0xff] %vm1059, 0
          %1118 = vst.msk [vmem:[#allocation2 + $0xa0] sm:$0xff] %vm1059, 0
        $region52: #{tpu_custom_call.1} parent=47 // pred_fallthru
          _
        %p1119 = scmp.eq.s32.totalorder %s26, 1
        // Predicated region
        $region53: #{tpu_custom_call.1} parent=47 // pred_check
          %p1120 = pneg %p1119
        $region54: #{tpu_custom_call.1} parent=47 // pred_check_branch
          %1122 = sbr.rel (%p1120) target = $region56
        $region55: #{tpu_custom_call.1} parent=47 // pred_region
          %s1123 = scalar_lea.vmem [#allocation2], 72
          %1124 = vst.msk [vmem:[%s1123] sm:$0xff] %vm1059, 0
          %1125 = vst.msk [vmem:[%s1123 + $0x50] sm:$0xff] %vm1059, 0
          %1126 = vst.msk [vmem:[%s1123 + $0xa0] sm:$0xff] %vm1059, 0
        $region56: #{tpu_custom_call.1} parent=47 // pred_fallthru
          _
        %v1127 = vld [vmem:[#allocation2] sm:$0xff]
        %v1128 = vld [vmem:[#allocation2 + $0x8] sm:$0xff]
        %v1129 = vld [vmem:[#allocation2 + $0x10] sm:$0xff]
        %v1130 = vld [vmem:[#allocation2 + $0x18] sm:$0xff]
        %v1131 = vld [vmem:[#allocation2 + $0x20] sm:$0xff]
        %v1132 = vld [vmem:[#allocation2 + $0x28] sm:$0xff]
        %v1133 = vld [vmem:[#allocation2 + $0x30] sm:$0xff]
        %v1134 = vld [vmem:[#allocation2 + $0x38] sm:$0xff]
        %v1135 = vld [vmem:[%s1080] sm:$0xff]
        %v1136 = vld [vmem:[%s1080 + $0x8] sm:$0xff]
        %v1137 = vld [vmem:[%s1080 + $0x10] sm:$0xff]
        %v1138 = vld [vmem:[%s1080 + $0x18] sm:$0xff]
        %v1139 = vld [vmem:[%s1080 + $0x20] sm:$0xff]
        %v1140 = vld [vmem:[%s1080 + $0x28] sm:$0xff]
        %v1141 = vld [vmem:[%s1080 + $0x30] sm:$0xff]
        %v1142 = vld [vmem:[%s1080 + $0x38] sm:$0xff]
        %v1143 = vld [vmem:[%s1101] sm:$0xff]
        %v1144 = vld [vmem:[%s1101 + $0x8] sm:$0xff]
        %v1145 = vld [vmem:[%s1101 + $0x10] sm:$0xff]
        %v1146 = vld [vmem:[%s1101 + $0x18] sm:$0xff]
        %v1147 = vld [vmem:[%s1101 + $0x20] sm:$0xff]
        %v1148 = vld [vmem:[%s1101 + $0x28] sm:$0xff]
        %v1149 = vld [vmem:[%s1101 + $0x30] sm:$0xff]
        %v1150 = vld [vmem:[%s1101 + $0x38] sm:$0xff]
        %1159 = vrot.lane.b32.xlu0 %v1135, 4
        %v1160 = vpop.permute.xlu0 %1159
        %1161 = vrot.lane.b32.xlu0 %v1136, 4
        %v1162 = vpop.permute.xlu0 %1161
        %1163 = vrot.lane.b32.xlu0 %v1137, 4
        %v1164 = vpop.permute.xlu0 %1163
        %1165 = vrot.lane.b32.xlu0 %v1138, 4
        %v1166 = vpop.permute.xlu0 %1165
        %1167 = vrot.lane.b32.xlu0 %v1139, 4
        %v1168 = vpop.permute.xlu0 %1167
        %1169 = vrot.lane.b32.xlu0 %v1140, 4
        %v1170 = vpop.permute.xlu0 %1169
        %1171 = vrot.lane.b32.xlu0 %v1141, 4
        %v1172 = vpop.permute.xlu0 %1171
        %1173 = vrot.lane.b32.xlu0 %v1142, 4
        %v1174 = vpop.permute.xlu0 %1173
        %1183 = vrot.lane.b32.xlu0 %v1143, 8
        %v1184 = vpop.permute.xlu0 %1183
        %1185 = vrot.lane.b32.xlu0 %v1144, 8
        %v1186 = vpop.permute.xlu0 %1185
        %1187 = vrot.lane.b32.xlu0 %v1145, 8
        %v1188 = vpop.permute.xlu0 %1187
        %1189 = vrot.lane.b32.xlu0 %v1146, 8
        %v1190 = vpop.permute.xlu0 %1189
        %1191 = vrot.lane.b32.xlu0 %v1147, 8
        %v1192 = vpop.permute.xlu0 %1191
        %1193 = vrot.lane.b32.xlu0 %v1148, 8
        %v1194 = vpop.permute.xlu0 %1193
        %1195 = vrot.lane.b32.xlu0 %v1149, 8
        %v1196 = vpop.permute.xlu0 %1195
        %1197 = vrot.lane.b32.xlu0 %v1150, 8
        %v1198 = vpop.permute.xlu0 %1197
        %v1201 = vsel %vm1059, %v1127, %v1160
        %v1204 = vsel %vm1059, %v1128, %v1162
        %v1207 = vsel %vm1059, %v1129, %v1164
        %v1210 = vsel %vm1059, %v1130, %v1166
        %v1213 = vsel %vm1059, %v1131, %v1168
        %v1216 = vsel %vm1059, %v1132, %v1170
        %v1219 = vsel %vm1059, %v1133, %v1172
        %v1222 = vsel %vm1059, %v1134, %v1174
        %vm1223 = vcmask 64512
        %v1225 = vsel %vm1223, %v1201, %v1184
        %v1227 = vsel %vm1223, %v1204, %v1186
        %v1229 = vsel %vm1223, %v1207, %v1188
        %v1231 = vsel %vm1223, %v1210, %v1190
        %v1233 = vsel %vm1223, %v1213, %v1192
        %v1235 = vsel %vm1223, %v1216, %v1194
        %v1237 = vsel %vm1223, %v1219, %v1196
        %v1239 = vsel %vm1223, %v1222, %v1198
        %v1240 = vld [vmem:[%s3] sm:$0xf]
        %v1241 = vld [vmem:[%s3 + $0x4] sm:$0x3]
        %s1242 = scalar_lea.vmem [#allocation2], 8
        %v1243 = vld [vmem:[%s1242] sm:$0xff]
        %v1244 = vld [vmem:[%s1242 + $0x8] sm:$0xff]
        %v1245 = vld [vmem:[%s1242 + $0x10] sm:$0xff]
        %v1246 = vld [vmem:[%s1242 + $0x18] sm:$0xff]
        %v1247 = vld [vmem:[%s1242 + $0x20] sm:$0xff]
        %v1248 = vld [vmem:[%s1242 + $0x28] sm:$0xff]
        %v1249 = vld [vmem:[%s1242 + $0x30] sm:$0xff]
        %v1250 = vld [vmem:[%s1242 + $0x38] sm:$0xff]
        %s1251 = scalar_lea.vmem [#allocation2], 88
        %v1252 = vld [vmem:[%s1251] sm:$0xff]
        %v1253 = vld [vmem:[%s1251 + $0x8] sm:$0xff]
        %v1254 = vld [vmem:[%s1251 + $0x10] sm:$0xff]
        %v1255 = vld [vmem:[%s1251 + $0x18] sm:$0xff]
        %v1256 = vld [vmem:[%s1251 + $0x20] sm:$0xff]
        %v1257 = vld [vmem:[%s1251 + $0x28] sm:$0xff]
        %v1258 = vld [vmem:[%s1251 + $0x30] sm:$0xff]
        %v1259 = vld [vmem:[%s1251 + $0x38] sm:$0xff]
        %s1260 = scalar_lea.vmem [#allocation2], 168
        %v1261 = vld [vmem:[%s1260] sm:$0xff]
        %v1262 = vld [vmem:[%s1260 + $0x8] sm:$0xff]
        %v1263 = vld [vmem:[%s1260 + $0x10] sm:$0xff]
        %v1264 = vld [vmem:[%s1260 + $0x18] sm:$0xff]
        %v1265 = vld [vmem:[%s1260 + $0x20] sm:$0xff]
        %v1266 = vld [vmem:[%s1260 + $0x28] sm:$0xff]
        %v1267 = vld [vmem:[%s1260 + $0x30] sm:$0xff]
        %v1268 = vld [vmem:[%s1260 + $0x38] sm:$0xff]
        %1277 = vrot.lane.b32.xlu0 %v1252, 4
        %v1278 = vpop.permute.xlu0 %1277
        %1279 = vrot.lane.b32.xlu0 %v1253, 4
        %v1280 = vpop.permute.xlu0 %1279
        %1281 = vrot.lane.b32.xlu0 %v1254, 4
        %v1282 = vpop.permute.xlu0 %1281
        %1283 = vrot.lane.b32.xlu0 %v1255, 4
        %v1284 = vpop.permute.xlu0 %1283
        %1285 = vrot.lane.b32.xlu0 %v1256, 4
        %v1286 = vpop.permute.xlu0 %1285
        %1287 = vrot.lane.b32.xlu0 %v1257, 4
        %v1288 = vpop.permute.xlu0 %1287
        %1289 = vrot.lane.b32.xlu0 %v1258, 4
        %v1290 = vpop.permute.xlu0 %1289
        %1291 = vrot.lane.b32.xlu0 %v1259, 4
        %v1292 = vpop.permute.xlu0 %1291
        %1301 = vrot.lane.b32.xlu0 %v1261, 8
        %v1302 = vpop.permute.xlu0 %1301
        %1303 = vrot.lane.b32.xlu0 %v1262, 8
        %v1304 = vpop.permute.xlu0 %1303
        %1305 = vrot.lane.b32.xlu0 %v1263, 8
        %v1306 = vpop.permute.xlu0 %1305
        %1307 = vrot.lane.b32.xlu0 %v1264, 8
        %v1308 = vpop.permute.xlu0 %1307
        %1309 = vrot.lane.b32.xlu0 %v1265, 8
        %v1310 = vpop.permute.xlu0 %1309
        %1311 = vrot.lane.b32.xlu0 %v1266, 8
        %v1312 = vpop.permute.xlu0 %1311
        %1313 = vrot.lane.b32.xlu0 %v1267, 8
        %v1314 = vpop.permute.xlu0 %1313
        %1315 = vrot.lane.b32.xlu0 %v1268, 8
        %v1316 = vpop.permute.xlu0 %1315
        %v1319 = vsel %vm1059, %v1243, %v1278
        %v1322 = vsel %vm1059, %v1244, %v1280
        %v1325 = vsel %vm1059, %v1245, %v1282
        %v1328 = vsel %vm1059, %v1246, %v1284
        %v1331 = vsel %vm1059, %v1247, %v1286
        %v1334 = vsel %vm1059, %v1248, %v1288
        %v1337 = vsel %vm1059, %v1249, %v1290
        %v1340 = vsel %vm1059, %v1250, %v1292
        %v1342 = vsel %vm1223, %v1319, %v1302
        %v1344 = vsel %vm1223, %v1322, %v1304
        %v1346 = vsel %vm1223, %v1325, %v1306
        %v1348 = vsel %vm1223, %v1328, %v1308
        %v1350 = vsel %vm1223, %v1331, %v1310
        %v1352 = vsel %vm1223, %v1334, %v1312
        %v1354 = vsel %vm1223, %v1337, %v1314
        %v1356 = vsel %vm1223, %v1340, %v1316
        %s1357 = scalar_lea.vmem %s3, 8
        %v1358 = vld [vmem:[%s1357] sm:$0xf]
        %v1359 = vld [vmem:[%s1357 + $0x4] sm:$0x3]
        %v1362 = vunpack.c.l.b16 %v1358
        %v1363 = vunpack.c.l.b16 %v1359
        %v1364 = vpack.c.b16 %v1363, %v1362
        %vm1365 = vcmask 97280
        %v1366 = vsel %vm1365, %v1342, 0
        %v1368 = vsel %vm1365, %v1344, 0
        %v1370 = vsel %vm1365, %v1346, 0
        %v1372 = vsel %vm1365, %v1348, 0
        %v1374 = vsel %vm1365, %v1350, 0
        %v1376 = vsel %vm1365, %v1352, 0
        %v1378 = vsel %vm1365, %v1354, 0
        %v1380 = vsel %vm1365, %v1356, 0
        %vm1382 = vcmask 1045504
        %v1384 = vsel %vm1382, %v1364, 0
        %1386 = vmatprep.subr.bf16.mxu0 0
        %1387 = vmatpush1.bf16.msra.mxu0 %v1384
        %1388 = vmatprep.subr.bf16.mxu0 0
        %1389 = vmatpush1.bf16.msra.mxu0 0
        %1390 = vmatprep.subr.bf16.mxu0 0
        %1391 = vmatpush1.bf16.msra.mxu0 0
        %1392 = vmatprep.subr.bf16.mxu0 0
        %1393 = vmatpush1.bf16.msra.mxu0 0
        %1394 = vmatprep.subr.bf16.mxu0 0
        %1395 = vmatpush1.bf16.msra.mxu0 0
        %1396 = vmatprep.subr.bf16.mxu0 0
        %1397 = vmatpush1.bf16.msra.mxu0 0
        %1398 = vmatprep.subr.bf16.mxu0 0
        %1399 = vmatpush1.bf16.msra.mxu0 0
        %1400 = vmatprep.subr.bf16.mxu0 0
        %1401 = vmatpush1.bf16.msra.mxu0 0
        %1402 = vmatprep.subr.bf16.mxu0 0
        %1403 = vmatpush1.bf16.msra.mxu0 0
        %1404 = vmatprep.subr.bf16.mxu0 0
        %1405 = vmatpush1.bf16.msra.mxu0 0
        %1406 = vmatprep.subr.bf16.mxu0 0
        %1407 = vmatpush1.bf16.msra.mxu0 0
        %1408 = vmatprep.subr.bf16.mxu0 0
        %1409 = vmatpush1.bf16.msra.mxu0 0
        %1410 = vmatprep.subr.bf16.mxu0 0
        %1411 = vmatpush1.bf16.msra.mxu0 0
        %1412 = vmatprep.subr.bf16.mxu0 0
        %1413 = vmatpush1.bf16.msra.mxu0 0
        %1414 = vmatprep.subr.bf16.mxu0 0
        %1415 = vmatpush1.bf16.msra.mxu0 0
        %1416 = vmatprep.subr.bf16.mxu0 0
        %1417 = vmatpush1.bf16.msra.mxu0 0
        %1418 = vmatprep.mubr.bf16.mxu0 0
        %1419 = vmatmul.mubr.bf16.gmra.mrb[0].mxu0 %v1366
        %v1420 = vpop.f32.mrb[0].mxu0
        %v1421 = vadd.f32 0.0, %v1420
        %v1422 = vpop.f32.mrb[0].mxu0
        %v1423 = vpop.f32.mrb[0].mxu0
        %v1424 = vadd.f32 0.0, %v1423
        %v1425 = vpop.f32.mrb[0].mxu0
        %1426 = vmatprep.mubr.bf16.mxu0 0
        %1427 = vmatmul.mubr.bf16.gmra.mrb[0].mxu0 %v1368
        %v1428 = vpop.f32.mrb[0].mxu0
        %v1429 = vadd.f32 0.0, %v1428
        %v1430 = vpop.f32.mrb[0].mxu0
        %v1431 = vpop.f32.mrb[0].mxu0
        %v1432 = vadd.f32 0.0, %v1431
        %v1433 = vpop.f32.mrb[0].mxu0
        %1434 = vmatprep.mubr.bf16.mxu0 0
        %1435 = vmatmul.mubr.bf16.gmra.mrb[0].mxu0 %v1370
        %v1436 = vpop.f32.mrb[0].mxu0
        %v1437 = vadd.f32 0.0, %v1436
        %v1438 = vpop.f32.mrb[0].mxu0
        %v1439 = vpop.f32.mrb[0].mxu0
        %v1440 = vadd.f32 0.0, %v1439
        %v1441 = vpop.f32.mrb[0].mxu0
        %1442 = vmatprep.mubr.bf16.mxu0 0
        %1443 = vmatmul.mubr.bf16.gmra.mrb[0].mxu0 %v1372
        %v1444 = vpop.f32.mrb[0].mxu0
        %v1445 = vadd.f32 0.0, %v1444
        %v1446 = vpop.f32.mrb[0].mxu0
        %v1447 = vpop.f32.mrb[0].mxu0
        %v1448 = vadd.f32 0.0, %v1447
        %v1449 = vpop.f32.mrb[0].mxu0
        %1450 = vmatprep.mubr.bf16.mxu0 0
        %1451 = vmatmul.mubr.bf16.gmra.mrb[0].mxu0 %v1374
        %v1452 = vpop.f32.mrb[0].mxu0
        %v1453 = vadd.f32 0.0, %v1452
        %v1454 = vpop.f32.mrb[0].mxu0
        %v1455 = vpop.f32.mrb[0].mxu0
        %v1456 = vadd.f32 0.0, %v1455
        %v1457 = vpop.f32.mrb[0].mxu0
        %1458 = vmatprep.mubr.bf16.mxu0 0
        %1459 = vmatmul.mubr.bf16.gmra.mrb[0].mxu0 %v1376
        %v1460 = vpop.f32.mrb[0].mxu0
        %v1461 = vadd.f32 0.0, %v1460
        %v1462 = vpop.f32.mrb[0].mxu0
        %v1463 = vpop.f32.mrb[0].mxu0
        %v1464 = vadd.f32 0.0, %v1463
        %v1465 = vpop.f32.mrb[0].mxu0
        %1466 = vmatprep.mubr.bf16.mxu0 0
        %1467 = vmatmul.mubr.bf16.gmra.mrb[0].mxu0 %v1378
        %v1468 = vpop.f32.mrb[0].mxu0
        %v1469 = vadd.f32 0.0, %v1468
        %v1470 = vpop.f32.mrb[0].mxu0
        %v1471 = vpop.f32.mrb[0].mxu0
        %v1472 = vadd.f32 0.0, %v1471
        %v1473 = vpop.f32.mrb[0].mxu0
        %1474 = vmatprep.mubr.bf16.mxu0 0
        %1475 = vmatmul.mubr.bf16.gmra.mrb[0].mxu0 %v1380
        %v1476 = vpop.f32.mrb[0].mxu0
        %v1477 = vadd.f32 0.0, %v1476
        %v1478 = vpop.f32.mrb[0].mxu0
        %v1479 = vpop.f32.mrb[0].mxu0
        %v1480 = vadd.f32 0.0, %v1479
        %v1481 = vpop.f32.mrb[0].mxu0
        %1482 = vdwg.mxu0
        %v1485 = vunpack.c.l.b16 %v1240
        %v1486 = vunpack.c.l.b16 %v1241
        %v1487 = vpack.c.b16 %v1486, %v1485
        %v1488 = vsel %vm1365, %v1225, 0
        %v1490 = vsel %vm1365, %v1227, 0
        %v1492 = vsel %vm1365, %v1229, 0
        %v1494 = vsel %vm1365, %v1231, 0
        %v1496 = vsel %vm1365, %v1233, 0
        %v1498 = vsel %vm1365, %v1235, 0
        %v1500 = vsel %vm1365, %v1237, 0
        %v1502 = vsel %vm1365, %v1239, 0
        %v1505 = vsel %vm1382, %v1487, 0
        %1507 = vmatprep.subr.bf16.mxu0 0
        %1508 = vmatpush1.bf16.msra.mxu0 %v1505
        %1509 = vmatprep.subr.bf16.mxu0 0
        %1510 = vmatpush1.bf16.msra.mxu0 0
        %1511 = vmatprep.subr.bf16.mxu0 0
        %1512 = vmatpush1.bf16.msra.mxu0 0
        %1513 = vmatprep.subr.bf16.mxu0 0
        %1514 = vmatpush1.bf16.msra.mxu0 0
        %1515 = vmatprep.subr.bf16.mxu0 0
        %1516 = vmatpush1.bf16.msra.mxu0 0
        %1517 = vmatprep.subr.bf16.mxu0 0
        %1518 = vmatpush1.bf16.msra.mxu0 0
        %1519 = vmatprep.subr.bf16.mxu0 0
        %1520 = vmatpush1.bf16.msra.mxu0 0
        %1521 = vmatprep.subr.bf16.mxu0 0
        %1522 = vmatpush1.bf16.msra.mxu0 0
        %1523 = vmatprep.subr.bf16.mxu0 0
        %1524 = vmatpush1.bf16.msra.mxu0 0
        %1525 = vmatprep.subr.bf16.mxu0 0
        %1526 = vmatpush1.bf16.msra.mxu0 0
        %1527 = vmatprep.subr.bf16.mxu0 0
        %1528 = vmatpush1.bf16.msra.mxu0 0
        %1529 = vmatprep.subr.bf16.mxu0 0
        %1530 = vmatpush1.bf16.msra.mxu0 0
        %1531 = vmatprep.subr.bf16.mxu0 0
        %1532 = vmatpush1.bf16.msra.mxu0 0
        %1533 = vmatprep.subr.bf16.mxu0 0
        %1534 = vmatpush1.bf16.msra.mxu0 0
        %1535 = vmatprep.subr.bf16.mxu0 0
        %1536 = vmatpush1.bf16.msra.mxu0 0
        %1537 = vmatprep.subr.bf16.mxu0 0
        %1538 = vmatpush1.bf16.msra.mxu0 0
        %1539 = vmatprep.mubr.bf16.mxu0 0
        %1540 = vmatmul.mubr.bf16.gmra.mrb[0].mxu0 %v1488
        %v1541 = vpop.f32.mrb[0].mxu0
        %v1542 = vadd.f32 %v1421, %v1541
        %v1543 = vpop.f32.mrb[0].mxu0
        %v1544 = vpop.f32.mrb[0].mxu0
        %v1545 = vadd.f32 %v1424, %v1544
        %v1546 = vpop.f32.mrb[0].mxu0
        %1547 = vmatprep.mubr.bf16.mxu0 0
        %1548 = vmatmul.mubr.bf16.gmra.mrb[0].mxu0 %v1490
        %v1549 = vpop.f32.mrb[0].mxu0
        %v1550 = vadd.f32 %v1429, %v1549
        %v1551 = vpop.f32.mrb[0].mxu0
        %v1552 = vpop.f32.mrb[0].mxu0
        %v1553 = vadd.f32 %v1432, %v1552
        %v1554 = vpop.f32.mrb[0].mxu0
        %1555 = vmatprep.mubr.bf16.mxu0 0
        %1556 = vmatmul.mubr.bf16.gmra.mrb[0].mxu0 %v1492
        %v1557 = vpop.f32.mrb[0].mxu0
        %v1558 = vadd.f32 %v1437, %v1557
        %v1559 = vpop.f32.mrb[0].mxu0
        %v1560 = vpop.f32.mrb[0].mxu0
        %v1561 = vadd.f32 %v1440, %v1560
        %v1562 = vpop.f32.mrb[0].mxu0
        %1563 = vmatprep.mubr.bf16.mxu0 0
        %1564 = vmatmul.mubr.bf16.gmra.mrb[0].mxu0 %v1494
        %v1565 = vpop.f32.mrb[0].mxu0
        %v1566 = vadd.f32 %v1445, %v1565
        %v1567 = vpop.f32.mrb[0].mxu0
        %v1568 = vpop.f32.mrb[0].mxu0
        %v1569 = vadd.f32 %v1448, %v1568
        %v1570 = vpop.f32.mrb[0].mxu0
        %1571 = vmatprep.mubr.bf16.mxu0 0
        %1572 = vmatmul.mubr.bf16.gmra.mrb[0].mxu0 %v1496
        %v1573 = vpop.f32.mrb[0].mxu0
        %v1574 = vadd.f32 %v1453, %v1573
        %v1575 = vpop.f32.mrb[0].mxu0
        %v1576 = vpop.f32.mrb[0].mxu0
        %v1577 = vadd.f32 %v1456, %v1576
        %v1578 = vpop.f32.mrb[0].mxu0
        %1579 = vmatprep.mubr.bf16.mxu0 0
        %1580 = vmatmul.mubr.bf16.gmra.mrb[0].mxu0 %v1498
        %v1581 = vpop.f32.mrb[0].mxu0
        %v1582 = vadd.f32 %v1461, %v1581
        %v1583 = vpop.f32.mrb[0].mxu0
        %v1584 = vpop.f32.mrb[0].mxu0
        %v1585 = vadd.f32 %v1464, %v1584
        %v1586 = vpop.f32.mrb[0].mxu0
        %1587 = vmatprep.mubr.bf16.mxu0 0
        %1588 = vmatmul.mubr.bf16.gmra.mrb[0].mxu0 %v1500
        %v1589 = vpop.f32.mrb[0].mxu0
        %v1590 = vadd.f32 %v1469, %v1589
        %v1591 = vpop.f32.mrb[0].mxu0
        %v1592 = vpop.f32.mrb[0].mxu0
        %v1593 = vadd.f32 %v1472, %v1592
        %v1594 = vpop.f32.mrb[0].mxu0
        %1595 = vmatprep.mubr.bf16.mxu0 0
        %1596 = vmatmul.mubr.bf16.gmra.mrb[0].mxu0 %v1502
        %v1597 = vpop.f32.mrb[0].mxu0
        %v1598 = vadd.f32 %v1477, %v1597
        %v1599 = vpop.f32.mrb[0].mxu0
        %v1600 = vpop.f32.mrb[0].mxu0
        %v1601 = vadd.f32 %v1480, %v1600
        %v1602 = vpop.f32.mrb[0].mxu0
        %1603 = vdwg.mxu0
        %s1604 = scalar_lea.vmem [#allocation2], 16
        %v1605 = vld [vmem:[%s1604] sm:$0xff]
        %v1606 = vld [vmem:[%s1604 + $0x8] sm:$0xff]
        %v1607 = vld [vmem:[%s1604 + $0x10] sm:$0xff]
        %v1608 = vld [vmem:[%s1604 + $0x18] sm:$0xff]
        %v1609 = vld [vmem:[%s1604 + $0x20] sm:$0xff]
        %v1610 = vld [vmem:[%s1604 + $0x28] sm:$0xff]
        %v1611 = vld [vmem:[%s1604 + $0x30] sm:$0xff]
        %v1612 = vld [vmem:[%s1604 + $0x38] sm:$0xff]
        %s1613 = scalar_lea.vmem [#allocation2], 96
        %v1614 = vld [vmem:[%s1613] sm:$0xff]
        %v1615 = vld [vmem:[%s1613 + $0x8] sm:$0xff]
        %v1616 = vld [vmem:[%s1613 + $0x10] sm:$0xff]
        %v1617 = vld [vmem:[%s1613 + $0x18] sm:$0xff]
        %v1618 = vld [vmem:[%s1613 + $0x20] sm:$0xff]
        %v1619 = vld [vmem:[%s1613 + $0x28] sm:$0xff]
        %v1620 = vld [vmem:[%s1613 + $0x30] sm:$0xff]
        %v1621 = vld [vmem:[%s1613 + $0x38] sm:$0xff]
        %s1622 = scalar_lea.vmem [#allocation2], 176
        %v1623 = vld [vmem:[%s1622] sm:$0xff]
        %v1624 = vld [vmem:[%s1622 + $0x8] sm:$0xff]
        %v1625 = vld [vmem:[%s1622 + $0x10] sm:$0xff]
        %v1626 = vld [vmem:[%s1622 + $0x18] sm:$0xff]
        %v1627 = vld [vmem:[%s1622 + $0x20] sm:$0xff]
        %v1628 = vld [vmem:[%s1622 + $0x28] sm:$0xff]
        %v1629 = vld [vmem:[%s1622 + $0x30] sm:$0xff]
        %v1630 = vld [vmem:[%s1622 + $0x38] sm:$0xff]
        %1639 = vrot.lane.b32.xlu0 %v1614, 4
        %v1640 = vpop.permute.xlu0 %1639
        %1641 = vrot.lane.b32.xlu0 %v1615, 4
        %v1642 = vpop.permute.xlu0 %1641
        %1643 = vrot.lane.b32.xlu0 %v1616, 4
        %v1644 = vpop.permute.xlu0 %1643
        %1645 = vrot.lane.b32.xlu0 %v1617, 4
        %v1646 = vpop.permute.xlu0 %1645
        %1647 = vrot.lane.b32.xlu0 %v1618, 4
        %v1648 = vpop.permute.xlu0 %1647
        %1649 = vrot.lane.b32.xlu0 %v1619, 4
        %v1650 = vpop.permute.xlu0 %1649
        %1651 = vrot.lane.b32.xlu0 %v1620, 4
        %v1652 = vpop.permute.xlu0 %1651
        %1653 = vrot.lane.b32.xlu0 %v1621, 4
        %v1654 = vpop.permute.xlu0 %1653
        %1663 = vrot.lane.b32.xlu0 %v1623, 8
        %v1664 = vpop.permute.xlu0 %1663
        %1665 = vrot.lane.b32.xlu0 %v1624, 8
        %v1666 = vpop.permute.xlu0 %1665
        %1667 = vrot.lane.b32.xlu0 %v1625, 8
        %v1668 = vpop.permute.xlu0 %1667
        %1669 = vrot.lane.b32.xlu0 %v1626, 8
        %v1670 = vpop.permute.xlu0 %1669
        %1671 = vrot.lane.b32.xlu0 %v1627, 8
        %v1672 = vpop.permute.xlu0 %1671
        %1673 = vrot.lane.b32.xlu0 %v1628, 8
        %v1674 = vpop.permute.xlu0 %1673
        %1675 = vrot.lane.b32.xlu0 %v1629, 8
        %v1676 = vpop.permute.xlu0 %1675
        %1677 = vrot.lane.b32.xlu0 %v1630, 8
        %v1678 = vpop.permute.xlu0 %1677
        %v1681 = vsel %vm1059, %v1605, %v1640
        %v1684 = vsel %vm1059, %v1606, %v1642
        %v1687 = vsel %vm1059, %v1607, %v1644
        %v1690 = vsel %vm1059, %v1608, %v1646
        %v1693 = vsel %vm1059, %v1609, %v1648
        %v1696 = vsel %vm1059, %v1610, %v1650
        %v1699 = vsel %vm1059, %v1611, %v1652
        %v1702 = vsel %vm1059, %v1612, %v1654
        %v1704 = vsel %vm1223, %v1681, %v1664
        %v1706 = vsel %vm1223, %v1684, %v1666
        %v1708 = vsel %vm1223, %v1687, %v1668
        %v1710 = vsel %vm1223, %v1690, %v1670
        %v1712 = vsel %vm1223, %v1693, %v1672
        %v1714 = vsel %vm1223, %v1696, %v1674
        %v1716 = vsel %vm1223, %v1699, %v1676
        %v1718 = vsel %vm1223, %v1702, %v1678
        %s1719 = scalar_lea.vmem %s3, 16
        %v1720 = vld [vmem:[%s1719] sm:$0xf]
        %v1721 = vld [vmem:[%s1719 + $0x4] sm:$0x3]
        %v1724 = vunpack.c.l.b16 %v1720
        %v1725 = vunpack.c.l.b16 %v1721
        %v1726 = vpack.c.b16 %v1725, %v1724
        %v1727 = vsel %vm1365, %v1704, 0
        %v1729 = vsel %vm1365, %v1706, 0
        %v1731 = vsel %vm1365, %v1708, 0
        %v1733 = vsel %vm1365, %v1710, 0
        %v1735 = vsel %vm1365, %v1712, 0
        %v1737 = vsel %vm1365, %v1714, 0
        %v1739 = vsel %vm1365, %v1716, 0
        %v1741 = vsel %vm1365, %v1718, 0
        %v1744 = vsel %vm1382, %v1726, 0
        %1746 = vmatprep.subr.bf16.mxu0 0
        %1747 = vmatpush1.bf16.msra.mxu0 %v1744
        %1748 = vmatprep.subr.bf16.mxu0 0
        %1749 = vmatpush1.bf16.msra.mxu0 0
        %1750 = vmatprep.subr.bf16.mxu0 0
        %1751 = vmatpush1.bf16.msra.mxu0 0
        %1752 = vmatprep.subr.bf16.mxu0 0
        %1753 = vmatpush1.bf16.msra.mxu0 0
        %1754 = vmatprep.subr.bf16.mxu0 0
        %1755 = vmatpush1.bf16.msra.mxu0 0
        %1756 = vmatprep.subr.bf16.mxu0 0
        %1757 = vmatpush1.bf16.msra.mxu0 0
        %1758 = vmatprep.subr.bf16.mxu0 0
        %1759 = vmatpush1.bf16.msra.mxu0 0
        %1760 = vmatprep.subr.bf16.mxu0 0
        %1761 = vmatpush1.bf16.msra.mxu0 0
        %1762 = vmatprep.subr.bf16.mxu0 0
        %1763 = vmatpush1.bf16.msra.mxu0 0
        %1764 = vmatprep.subr.bf16.mxu0 0
        %1765 = vmatpush1.bf16.msra.mxu0 0
        %1766 = vmatprep.subr.bf16.mxu0 0
        %1767 = vmatpush1.bf16.msra.mxu0 0
        %1768 = vmatprep.subr.bf16.mxu0 0
        %1769 = vmatpush1.bf16.msra.mxu0 0
        %1770 = vmatprep.subr.bf16.mxu0 0
        %1771 = vmatpush1.bf16.msra.mxu0 0
        %1772 = vmatprep.subr.bf16.mxu0 0
        %1773 = vmatpush1.bf16.msra.mxu0 0
        %1774 = vmatprep.subr.bf16.mxu0 0
        %1775 = vmatpush1.bf16.msra.mxu0 0
        %1776 = vmatprep.subr.bf16.mxu0 0
        %1777 = vmatpush1.bf16.msra.mxu0 0
        %1778 = vmatprep.mubr.bf16.mxu0 0
        %1779 = vmatmul.mubr.bf16.gmra.mrb[0].mxu0 %v1727
        %v1780 = vpop.f32.mrb[0].mxu0
        %v1781 = vadd.f32 0.0, %v1780
        %v1782 = vpop.f32.mrb[0].mxu0
        %v1783 = vpop.f32.mrb[0].mxu0
        %v1784 = vadd.f32 0.0, %v1783
        %v1785 = vpop.f32.mrb[0].mxu0
        %1786 = vmatprep.mubr.bf16.mxu0 0
        %1787 = vmatmul.mubr.bf16.gmra.mrb[0].mxu0 %v1729
        %v1788 = vpop.f32.mrb[0].mxu0
        %v1789 = vadd.f32 0.0, %v1788
        %v1790 = vpop.f32.mrb[0].mxu0
        %v1791 = vpop.f32.mrb[0].mxu0
        %v1792 = vadd.f32 0.0, %v1791
        %v1793 = vpop.f32.mrb[0].mxu0
        %1794 = vmatprep.mubr.bf16.mxu0 0
        %1795 = vmatmul.mubr.bf16.gmra.mrb[0].mxu0 %v1731
        %v1796 = vpop.f32.mrb[0].mxu0
        %v1797 = vadd.f32 0.0, %v1796
        %v1798 = vpop.f32.mrb[0].mxu0
        %v1799 = vpop.f32.mrb[0].mxu0
        %v1800 = vadd.f32 0.0, %v1799
        %v1801 = vpop.f32.mrb[0].mxu0
        %1802 = vmatprep.mubr.bf16.mxu0 0
        %1803 = vmatmul.mubr.bf16.gmra.mrb[0].mxu0 %v1733
        %v1804 = vpop.f32.mrb[0].mxu0
        %v1805 = vadd.f32 0.0, %v1804
        %v1806 = vpop.f32.mrb[0].mxu0
        %v1807 = vpop.f32.mrb[0].mxu0
        %v1808 = vadd.f32 0.0, %v1807
        %v1809 = vpop.f32.mrb[0].mxu0
        %1810 = vmatprep.mubr.bf16.mxu0 0
        %1811 = vmatmul.mubr.bf16.gmra.mrb[0].mxu0 %v1735
        %v1812 = vpop.f32.mrb[0].mxu0
        %v1813 = vadd.f32 0.0, %v1812
        %v1814 = vpop.f32.mrb[0].mxu0
        %v1815 = vpop.f32.mrb[0].mxu0
        %v1816 = vadd.f32 0.0, %v1815
        %v1817 = vpop.f32.mrb[0].mxu0
        %1818 = vmatprep.mubr.bf16.mxu0 0
        %1819 = vmatmul.mubr.bf16.gmra.mrb[0].mxu0 %v1737
        %v1820 = vpop.f32.mrb[0].mxu0
        %v1821 = vadd.f32 0.0, %v1820
        %v1822 = vpop.f32.mrb[0].mxu0
        %v1823 = vpop.f32.mrb[0].mxu0
        %v1824 = vadd.f32 0.0, %v1823
        %v1825 = vpop.f32.mrb[0].mxu0
        %1826 = vmatprep.mubr.bf16.mxu0 0
        %1827 = vmatmul.mubr.bf16.gmra.mrb[0].mxu0 %v1739
        %v1828 = vpop.f32.mrb[0].mxu0
        %v1829 = vadd.f32 0.0, %v1828
        %v1830 = vpop.f32.mrb[0].mxu0
        %v1831 = vpop.f32.mrb[0].mxu0
        %v1832 = vadd.f32 0.0, %v1831
        %v1833 = vpop.f32.mrb[0].mxu0
        %1834 = vmatprep.mubr.bf16.mxu0 0
        %1835 = vmatmul.mubr.bf16.gmra.mrb[0].mxu0 %v1741
        %v1836 = vpop.f32.mrb[0].mxu0
        %v1837 = vadd.f32 0.0, %v1836
        %v1838 = vpop.f32.mrb[0].mxu0
        %v1839 = vpop.f32.mrb[0].mxu0
        %v1840 = vadd.f32 0.0, %v1839
        %v1841 = vpop.f32.mrb[0].mxu0
        %1842 = vdwg.mxu0
        %v1843 = vadd.f32 %v1542, %v1781
        %v1844 = vadd.f32 %v1545, %v1784
        %v1845 = vadd.f32 %v1550, %v1789
        %v1846 = vadd.f32 %v1553, %v1792
        %v1847 = vadd.f32 %v1558, %v1797
        %v1848 = vadd.f32 %v1561, %v1800
        %v1849 = vadd.f32 %v1566, %v1805
        %v1850 = vadd.f32 %v1569, %v1808
        %v1851 = vadd.f32 %v1574, %v1813
        %v1852 = vadd.f32 %v1577, %v1816
        %v1853 = vadd.f32 %v1582, %v1821
        %v1854 = vadd.f32 %v1585, %v1824
        %v1855 = vadd.f32 %v1590, %v1829
        %v1856 = vadd.f32 %v1593, %v1832
        %v1857 = vadd.f32 %v1598, %v1837
        %v1858 = vadd.f32 %v1601, %v1840
        %v1859 = vld [vmem:[%s4] sm:$0x1]
        %v1861 = vlaneseq
        %v1862 = vshrl.u32 %v1861, 7
        %v1863 = vsub.s32 0, %v1862
        %v1864 = vrot.slane %v1859, %v1863
        %v1866 = vadd.f32 %v1843, %v1864
        %v1867 = vadd.f32 %v1844, %v1864
        %v1868 = vadd.f32 %v1845, %v1864
        %v1869 = vadd.f32 %v1846, %v1864
        %v1870 = vadd.f32 %v1847, %v1864
        %v1871 = vadd.f32 %v1848, %v1864
        %v1872 = vadd.f32 %v1849, %v1864
        %v1873 = vadd.f32 %v1850, %v1864
        %v1874 = vadd.f32 %v1851, %v1864
        %v1875 = vadd.f32 %v1852, %v1864
        %v1876 = vadd.f32 %v1853, %v1864
        %v1877 = vadd.f32 %v1854, %v1864
        %v1878 = vadd.f32 %v1855, %v1864
        %v1879 = vadd.f32 %v1856, %v1864
        %v1880 = vadd.f32 %v1857, %v1864
        %v1881 = vadd.f32 %v1858, %v1864
        %v1882 = vmax.f32 %v1866, 0.0
        %v1883 = vmax.f32 %v1867, 0.0
        %v1884 = vmax.f32 %v1868, 0.0
        %v1885 = vmax.f32 %v1869, 0.0
        %v1886 = vmax.f32 %v1870, 0.0
        %v1887 = vmax.f32 %v1871, 0.0
        %v1888 = vmax.f32 %v1872, 0.0
        %v1889 = vmax.f32 %v1873, 0.0
        %v1890 = vmax.f32 %v1874, 0.0
        %v1891 = vmax.f32 %v1875, 0.0
        %v1892 = vmax.f32 %v1876, 0.0
        %v1893 = vmax.f32 %v1877, 0.0
        %v1894 = vmax.f32 %v1878, 0.0
        %v1895 = vmax.f32 %v1879, 0.0
        %v1896 = vmax.f32 %v1880, 0.0
        %v1897 = vmax.f32 %v1881, 0.0
        %v1898 = vpack.c.bf16 %v1883, %v1882
        %v1899 = vpack.c.bf16 %v1885, %v1884
        %v1900 = vpack.c.bf16 %v1887, %v1886
        %v1901 = vpack.c.bf16 %v1889, %v1888
        %v1902 = vpack.c.bf16 %v1891, %v1890
        %v1903 = vpack.c.bf16 %v1893, %v1892
        %v1904 = vpack.c.bf16 %v1895, %v1894
        %v1905 = vpack.c.bf16 %v1897, %v1896
        %v1906 = vld [vmem:[%s5] sm:$0x3]
        %v1907 = vld [vmem:[%s6] sm:$0x1]
        %v1909 = vlaneseq
        %v1910 = vshrl.u32 %v1909, 7
        %v1911 = vsub.s32 0, %v1910
        %v1912 = vrot.slane %v1907, %v1911
        %v1915 = vsel %vm1059, %v1898, 0
        %v1918 = vsel %vm1059, %v1899, 0
        %v1921 = vsel %vm1059, %v1900, 0
        %v1924 = vsel %vm1059, %v1901, 0
        %v1927 = vsel %vm1059, %v1902, 0
        %v1930 = vsel %vm1059, %v1903, 0
        %v1933 = vsel %vm1059, %v1904, 0
        %v1936 = vsel %vm1059, %v1905, 0
        %vm1938 = vcmask 1041408
        %v1940 = vsel %vm1938, %v1906, 0
        %1942 = vmatprep.subr.bf16.mxu0 0
        %1943 = vmatpush1.bf16.msra.mxu0 %v1940
        %1944 = vmatprep.subr.bf16.mxu0 0
        %1945 = vmatpush1.bf16.msra.mxu0 0
        %1946 = vmatprep.subr.bf16.mxu0 0
        %1947 = vmatpush1.bf16.msra.mxu0 0
        %1948 = vmatprep.subr.bf16.mxu0 0
        %1949 = vmatpush1.bf16.msra.mxu0 0
        %1950 = vmatprep.subr.bf16.mxu0 0
        %1951 = vmatpush1.bf16.msra.mxu0 0
        %1952 = vmatprep.subr.bf16.mxu0 0
        %1953 = vmatpush1.bf16.msra.mxu0 0
        %1954 = vmatprep.subr.bf16.mxu0 0
        %1955 = vmatpush1.bf16.msra.mxu0 0
        %1956 = vmatprep.subr.bf16.mxu0 0
        %1957 = vmatpush1.bf16.msra.mxu0 0
        %1958 = vmatprep.subr.bf16.mxu0 0
        %1959 = vmatpush1.bf16.msra.mxu0 0
        %1960 = vmatprep.subr.bf16.mxu0 0
        %1961 = vmatpush1.bf16.msra.mxu0 0
        %1962 = vmatprep.subr.bf16.mxu0 0
        %1963 = vmatpush1.bf16.msra.mxu0 0
        %1964 = vmatprep.subr.bf16.mxu0 0
        %1965 = vmatpush1.bf16.msra.mxu0 0
        %1966 = vmatprep.subr.bf16.mxu0 0
        %1967 = vmatpush1.bf16.msra.mxu0 0
        %1968 = vmatprep.subr.bf16.mxu0 0
        %1969 = vmatpush1.bf16.msra.mxu0 0
        %1970 = vmatprep.subr.bf16.mxu0 0
        %1971 = vmatpush1.bf16.msra.mxu0 0
        %1972 = vmatprep.subr.bf16.mxu0 0
        %1973 = vmatpush1.bf16.msra.mxu0 0
        %1974 = vmatprep.mubr.bf16.mxu0 0
        %1975 = vmatmul.mubr.bf16.gmra.mrb[0].mxu0 %v1915
        %v1976 = vpop.f32.mrb[0].mxu0
        %v1977 = vadd.f32 %v1912, %v1976
        %v1978 = vpop.f32.mrb[0].mxu0
        %v1979 = vpop.f32.mrb[0].mxu0
        %v1980 = vadd.f32 %v1912, %v1979
        %v1981 = vpop.f32.mrb[0].mxu0
        %1982 = vmatprep.mubr.bf16.mxu0 0
        %1983 = vmatmul.mubr.bf16.gmra.mrb[0].mxu0 %v1918
        %v1984 = vpop.f32.mrb[0].mxu0
        %v1985 = vadd.f32 %v1912, %v1984
        %v1986 = vpop.f32.mrb[0].mxu0
        %v1987 = vpop.f32.mrb[0].mxu0
        %v1988 = vadd.f32 %v1912, %v1987
        %v1989 = vpop.f32.mrb[0].mxu0
        %1990 = vmatprep.mubr.bf16.mxu0 0
        %1991 = vmatmul.mubr.bf16.gmra.mrb[0].mxu0 %v1921
        %v1992 = vpop.f32.mrb[0].mxu0
        %v1993 = vadd.f32 %v1912, %v1992
        %v1994 = vpop.f32.mrb[0].mxu0
        %v1995 = vpop.f32.mrb[0].mxu0
        %v1996 = vadd.f32 %v1912, %v1995
        %v1997 = vpop.f32.mrb[0].mxu0
        %1998 = vmatprep.mubr.bf16.mxu0 0
        %1999 = vmatmul.mubr.bf16.gmra.mrb[0].mxu0 %v1924
        %v2000 = vpop.f32.mrb[0].mxu0
        %v2001 = vadd.f32 %v1912, %v2000
        %v2002 = vpop.f32.mrb[0].mxu0
        %v2003 = vpop.f32.mrb[0].mxu0
        %v2004 = vadd.f32 %v1912, %v2003
        %v2005 = vpop.f32.mrb[0].mxu0
        %2006 = vmatprep.mubr.bf16.mxu0 0
        %2007 = vmatmul.mubr.bf16.gmra.mrb[0].mxu0 %v1927
        %v2008 = vpop.f32.mrb[0].mxu0
        %v2009 = vadd.f32 %v1912, %v2008
        %v2010 = vpop.f32.mrb[0].mxu0
        %v2011 = vpop.f32.mrb[0].mxu0
        %v2012 = vadd.f32 %v1912, %v2011
        %v2013 = vpop.f32.mrb[0].mxu0
        %2014 = vmatprep.mubr.bf16.mxu0 0
        %2015 = vmatmul.mubr.bf16.gmra.mrb[0].mxu0 %v1930
        %v2016 = vpop.f32.mrb[0].mxu0
        %v2017 = vadd.f32 %v1912, %v2016
        %v2018 = vpop.f32.mrb[0].mxu0
        %v2019 = vpop.f32.mrb[0].mxu0
        %v2020 = vadd.f32 %v1912, %v2019
        %v2021 = vpop.f32.mrb[0].mxu0
        %2022 = vmatprep.mubr.bf16.mxu0 0
        %2023 = vmatmul.mubr.bf16.gmra.mrb[0].mxu0 %v1933
        %v2024 = vpop.f32.mrb[0].mxu0
        %v2025 = vadd.f32 %v1912, %v2024
        %v2026 = vpop.f32.mrb[0].mxu0
        %v2027 = vpop.f32.mrb[0].mxu0
        %v2028 = vadd.f32 %v1912, %v2027
        %v2029 = vpop.f32.mrb[0].mxu0
        %2030 = vmatprep.mubr.bf16.mxu0 0
        %2031 = vmatmul.mubr.bf16.gmra.mrb[0].mxu0 %v1936
        %v2032 = vpop.f32.mrb[0].mxu0
        %v2033 = vadd.f32 %v1912, %v2032
        %v2034 = vpop.f32.mrb[0].mxu0
        %v2035 = vpop.f32.mrb[0].mxu0
        %v2036 = vadd.f32 %v1912, %v2035
        %v2037 = vpop.f32.mrb[0].mxu0
        %2038 = vdwg.mxu0
        %s2039 = sadd.s32 %s293, 1
        %s2040 = smul.u32 %s2039, 2
        %s2041 = smul.addr %s2040, 4
        %s2042 = scalar_lea.vmem %s290, %s2041
        %v2043 = vld [vmem:[%s2042] sm:$0xf]
        %v2044 = vld [vmem:[%s2042 + $0x4] sm:$0xf]
        %v2045 = vld [vmem:[%s2042 + $0x8] sm:$0xf]
        %v2046 = vld [vmem:[%s2042 + $0xc] sm:$0xf]
        %v2047 = vld [vmem:[%s2042 + $0x10] sm:$0xf]
        %v2048 = vld [vmem:[%s2042 + $0x14] sm:$0xf]
        %v2049 = vld [vmem:[%s2042 + $0x18] sm:$0xf]
        %v2050 = vld [vmem:[%s2042 + $0x1c] sm:$0xf]
        %v2051 = vld [vmem:[%s2042 + $0x20] sm:$0xf]
        %v2052 = vld [vmem:[%s2042 + $0x24] sm:$0xf]
        %v2053 = vld [vmem:[%s2042 + $0x28] sm:$0xf]
        %v2054 = vld [vmem:[%s2042 + $0x2c] sm:$0xf]
        %v2055 = vld [vmem:[%s2042 + $0x30] sm:$0xf]
        %v2056 = vld [vmem:[%s2042 + $0x34] sm:$0xf]
        %v2057 = vld [vmem:[%s2042 + $0x38] sm:$0xf]
        %v2058 = vld [vmem:[%s2042 + $0x3c] sm:$0xf]
        %v2059 = vunpack.c.l.bf16 %v2043
        %v2060 = vunpack.c.l.bf16 %v2044
        %v2061 = vunpack.c.l.bf16 %v2045
        %v2062 = vunpack.c.l.bf16 %v2046
        %v2063 = vunpack.c.l.bf16 %v2047
        %v2064 = vunpack.c.l.bf16 %v2048
        %v2065 = vunpack.c.l.bf16 %v2049
        %v2066 = vunpack.c.l.bf16 %v2050
        %v2067 = vunpack.c.l.bf16 %v2051
        %v2068 = vunpack.c.l.bf16 %v2052
        %v2069 = vunpack.c.l.bf16 %v2053
        %v2070 = vunpack.c.l.bf16 %v2054
        %v2071 = vunpack.c.l.bf16 %v2055
        %v2072 = vunpack.c.l.bf16 %v2056
        %v2073 = vunpack.c.l.bf16 %v2057
        %v2074 = vunpack.c.l.bf16 %v2058
        %v2075 = vadd.f32 %v1977, %v2059
        %v2076 = vadd.f32 %v1980, %v2060
        %v2077 = vadd.f32 %v1985, %v2061
        %v2078 = vadd.f32 %v1988, %v2062
        %v2079 = vadd.f32 %v1993, %v2063
        %v2080 = vadd.f32 %v1996, %v2064
        %v2081 = vadd.f32 %v2001, %v2065
        %v2082 = vadd.f32 %v2004, %v2066
        %v2083 = vadd.f32 %v2009, %v2067
        %v2084 = vadd.f32 %v2012, %v2068
        %v2085 = vadd.f32 %v2017, %v2069
        %v2086 = vadd.f32 %v2020, %v2070
        %v2087 = vadd.f32 %v2025, %v2071
        %v2088 = vadd.f32 %v2028, %v2072
        %v2089 = vadd.f32 %v2033, %v2073
        %v2090 = vadd.f32 %v2036, %v2074
        %v2091 = vmax.f32 %v2075, 0.0
        %v2092 = vmax.f32 %v2076, 0.0
        %v2093 = vmax.f32 %v2077, 0.0
        %v2094 = vmax.f32 %v2078, 0.0
        %v2095 = vmax.f32 %v2079, 0.0
        %v2096 = vmax.f32 %v2080, 0.0
        %v2097 = vmax.f32 %v2081, 0.0
        %v2098 = vmax.f32 %v2082, 0.0
        %v2099 = vmax.f32 %v2083, 0.0
        %v2100 = vmax.f32 %v2084, 0.0
        %v2101 = vmax.f32 %v2085, 0.0
        %v2102 = vmax.f32 %v2086, 0.0
        %v2103 = vmax.f32 %v2087, 0.0
        %v2104 = vmax.f32 %v2088, 0.0
        %v2105 = vmax.f32 %v2089, 0.0
        %v2106 = vmax.f32 %v2090, 0.0
        %2107 = vst.msk [vmem:[%s285] sm:$0xff] %vm382, %v2091
        %2108 = vst.msk [vmem:[%s285 + $0x8] sm:$0xff] %vm382, %v2092
        %2109 = vst.msk [vmem:[%s285 + $0x10] sm:$0xff] %vm382, %v2093
        %2110 = vst.msk [vmem:[%s285 + $0x18] sm:$0xff] %vm382, %v2094
        %2111 = vst.msk [vmem:[%s285 + $0x20] sm:$0xff] %vm382, %v2095
        %2112 = vst.msk [vmem:[%s285 + $0x28] sm:$0xff] %vm382, %v2096
        %2113 = vst.msk [vmem:[%s285 + $0x30] sm:$0xff] %vm382, %v2097
        %2114 = vst.msk [vmem:[%s285 + $0x38] sm:$0xff] %vm382, %v2098
        %2115 = vst.msk [vmem:[%s285 + $0x40] sm:$0xff] %vm382, %v2099
        %2116 = vst.msk [vmem:[%s285 + $0x48] sm:$0xff] %vm382, %v2100
        %2117 = vst.msk [vmem:[%s285 + $0x50] sm:$0xff] %vm382, %v2101
        %2118 = vst.msk [vmem:[%s285 + $0x58] sm:$0xff] %vm382, %v2102
        %2119 = vst.msk [vmem:[%s285 + $0x60] sm:$0xff] %vm382, %v2103
        %2120 = vst.msk [vmem:[%s285 + $0x68] sm:$0xff] %vm382, %v2104
        %2121 = vst.msk [vmem:[%s285 + $0x70] sm:$0xff] %vm382, %v2105
        %2122 = vst.msk [vmem:[%s285 + $0x78] sm:$0xff] %vm382, %v2106
        %s2123 = sand.u32 %s195, 1
        %s2124 = scalar_lea.sflag [#allocation4], %s2123
        %s2125 = sand.u32 %s195, 1
        %s2126 = smul.addr %s2125, 128
        %s2127 = scalar_lea.vmem [#allocation3], %s2126
        // Predicated region
        $region57: #{tpu_custom_call.1} parent=47 // pred_check
          %p2128 = pneg %p205
        $region58: #{tpu_custom_call.1} parent=47 // pred_check_branch
          %2130 = sbr.rel (%p2128) target = $region60
        $region59: #{tpu_custom_call.1} parent=47 // pred_region
          %s2131 = smul.u32 8, %s26
          %s2133 = ssub.s32 2048, 2048
          %2134 = vsyncadd %s2124, %s2133
          %s2135 = smul.addr %s2131, 2
          %s2136 = smul.addr %s25, 32
          %s2137 = sadd.s32 %s2135, %s2136
          %s2138 = smul.addr %s2137, 128
          %s2139 = scalar_lea.hbm %s7, %s2138
          %s2140 = sshll.u32 %s2127, 4
          %s2141 = int_to_ptr.vmem [resolvable:$true] %s2140
          %2146 = dma.vmem_to_hbm [thread:$0]  %s2141, 2048, %s2139, %s2124, 128, 128, 8
        $region60: #{tpu_custom_call.1} parent=47 // pred_fallthru
          _
      $region48: #{tpu_custom_call.1} parent=5 // pred_fallthru
        _
      %p2147 = scmp.le.s32.totalorder 2, %s16
      // Predicated region
      $region61: #{tpu_custom_call.1} parent=5 // pred_check
        %p2148 = pneg %p2147
      $region62: #{tpu_custom_call.1} parent=5 // pred_check_branch
        %2150 = sbr.rel (%p2148) target = $region64
      $region63: #{tpu_custom_call.1} parent=5 // pred_region
        %s2151 = ssub.s32 %s16, 2
        // Predicated region
        $region65: #{tpu_custom_call.1} parent=63 // pred_check
          %p2152 = pneg %p211
        $region66: #{tpu_custom_call.1} parent=63 // pred_check_branch
          %2154 = sbr.rel (%p2152) target = $region68
        $region67: #{tpu_custom_call.1} parent=63 // pred_region
          %s2155 = sand.u32 %s196, 1
          %s2156 = scalar_lea.sflag [#allocation4], %s2155
          %s2157 = sand.u32 %s196, 1
          %s2158 = smul.addr %s2157, 128
          %s2159 = scalar_lea.vmem [#allocation3], %s2158
          %2160 = dma.done %s2156, 2048
        $region68: #{tpu_custom_call.1} parent=63 // pred_fallthru
          _
      $region64: #{tpu_custom_call.1} parent=5 // pred_fallthru
        _
    $region6: #{tpu_custom_call.1} parent=1 // loop_footer
      %s20 = sadd.s32 1, %s16
    $region7: #{tpu_custom_call.1} parent=1 // loop_footer_branch
      %15 = sbr.rel target = $region3
    $region8: #{tpu_custom_call.1} parent=1 // loop_exit
      _
    %2161 = vsyncpa [#allocation4], 1
    %s2162 = scalar_lea.sflag [#allocation4], 1
    %2163 = vsyncpa %s2162, 1

// kernel: tpu_custom_call.1
$region0: #{tpu_custom_call.1}
  #allocation0 [shape = 'u32[]', space=smem, size = 0x4, offset = 0x4, fixed_abs, tag = 'smem constant byte address 0x4 - core index']
  #allocation1 [shape = 'u32[144,128]{1,0:T(1,128)}', space=vmem, size = 0x12000, scoped, tag = 'internal scratch']
  #allocation2 [shape = 'bf16[3,10,16,4]{3,2,1,0:T(16,128)(2,1)}', space=vmem, size = 0x1e000, scoped, tag = 'scratch operand']
  %s0 = inlined_call_operand.vmem [shape: bf16[2,18,16,16], index: 0, kind: input, shape index: {}]
  %s1 = inlined_call_operand.vmem [shape: bf16[16,4], index: 1, kind: input, shape index: {}]
  %s2 = inlined_call_operand.vmem [shape: f32[1,4], index: 2, kind: input, shape index: {}]
  %s3 = inlined_call_operand.vmem [shape: bf16[3,12,4], index: 3, kind: input, shape index: {}]
  %s4 = inlined_call_operand.vmem [shape: f32[1,4], index: 4, kind: input, shape index: {}]
  %s5 = inlined_call_operand.vmem [shape: bf16[4,16], index: 5, kind: input, shape index: {}]
  %s6 = inlined_call_operand.vmem [shape: f32[1,16], index: 6, kind: input, shape index: {}]
  %s7 = inlined_call_operand.hbm [shape: f32[2,16,16,16], index: 7, kind: output, shape index: {}]
  %s8 = sld [smem:[#allocation0]]
  $region69: #{tpu_custom_call.1} parent=0
    _
  %s10 = ssub.s32 1, %s8
  %s11 = scalar_select 0, %s10, %s8
  $region1: #{tpu_custom_call.1} parent=0
    #allocation3 [shape = 'u8[131072]{0}', space=vmem, size = 0x20000, scoped, tag = 'output window, operand 0']
    #allocation4 [shape = 's32[2]{0}', space=sflag, size = 0x8, scoped, tag = 'scoped memory for tpu_custom_call.1']
    %12 = vsyncpa [#allocation4], 0
    %s13 = scalar_lea.sflag [#allocation4], 1
    %14 = vsyncpa %s13, 0
    loop: start=0, step=1, limit=6
    $region2: #{tpu_custom_call.1} parent=1 // loop_pre_header
      _
    $region3: #{tpu_custom_call.1} parent=1 // loop_header
      %s16 = sphi 0, %s20
      %p17 = scmp.ge.s32.totalorder %s16, 6
      %s23 = sphi 0, %s35
      %s24 = sphi 0, %s31
      %s25 = sphi 0, %s23
      %s26 = sphi 0, %s24
      %s27 = sphi 0, %s25
      %s28 = sphi 0, %s26
      %s38 = sphi 0, %s40
      %s41 = sphi 0, %s38
      %s42 = sphi 0, %s41
      %s58 = sphi 0, %s42
      %s62 = sphi 0, %s62
      %s64 = sphi 0, %s62
      %s65 = sphi 0, %s64
      %s79 = sphi 0, %s65
      %s83 = sphi 0, %s83
      %s85 = sphi 0, %s83
      %s86 = sphi 0, %s85
      %s100 = sphi 0, %s86
      %s104 = sphi 0, %s104
      %s106 = sphi 0, %s104
      %s107 = sphi 0, %s106
      %s121 = sphi 0, %s107
      %s125 = sphi 0, %s125
      %s127 = sphi 0, %s125
      %s128 = sphi 0, %s127
      %s142 = sphi 0, %s128
      %s146 = sphi 0, %s146
      %s148 = sphi 0, %s146
      %s149 = sphi 0, %s148
      %s163 = sphi 0, %s149
      %s167 = sphi 0, %s167
      %s169 = sphi 0, %s167
      %s170 = sphi 0, %s169
      %s184 = sphi 0, %s170
      %s192 = sphi 0, %s194
      %s195 = sphi 0, %s192
      %s196 = sphi 0, %s195
      %s212 = sphi 0, %s196
    $region4: #{tpu_custom_call.1} parent=1 // loop_header_branch
      %19 = sbr.rel (%p17) target = $region8
    $region5: #{tpu_custom_call.1} parent=1 // loop_body
      %s21 = ssub.s32 %s16, 1
      %s22 = ssub.s32 %s16, 2
      %s29 = sadd.s32 1, %s24
      %p30 = scmp.ge.s32.totalorder %s29, 2
      %s31 = scalar_select %p30, 0, %s29
      %s32 = sadd.s32 1, %s23
      %s33 = scalar_select %p30, %s32, %s23
      %p34 = scmp.ge.s32.totalorder %s33, 2
      %s35 = scalar_select %p34, 0, %s33
      %s36 = ssub.s32 %s23, %s35
      %p37 = scmp.eq.s32.totalorder %s36, 0
      %s39 = sadd.s32 %s38, 1
      %s40 = scalar_select %p37, %s38, %s39
      %p43 = pneg %p37
      %p44 = scmp.eq.s32.totalorder %s16, 3
      %p45 = por %p43, %p44
      %p46 = scmp.ne.s32.totalorder %s38, %s41
      %p47 = scmp.eq.s32.totalorder %s16, 0
      %p48 = por %p46, %p47
      %p49 = scmp.ne.s32.totalorder %s38, %s41
      %p50 = scmp.eq.s32.totalorder %s21, 3
      %p51 = por %p49, %p50
      %p52 = scmp.ne.s32.totalorder %s41, %s42
      %p53 = scmp.eq.s32.totalorder %s21, 0
      %p54 = por %p52, %p53
      %p55 = scmp.ne.s32.totalorder %s41, %s42
      %p56 = scmp.eq.s32.totalorder %s22, 3
      %p57 = por %p55, %p56
      %p59 = scmp.ne.s32.totalorder %s42, %s58
      %p60 = scmp.eq.s32.totalorder %s22, 0
      %p61 = por %p59, %p60
      %s63 = sadd.s32 %s62, 1
      %p66 = scmp.eq.s32.totalorder %s16, 3
      %p67 = scmp.ne.s32.totalorder %s62, %s64
      %p68 = scmp.eq.s32.totalorder %s16, 0
      %p69 = por %p67, %p68
      %p70 = scmp.ne.s32.totalorder %s62, %s64
      %p71 = scmp.eq.s32.totalorder %s21, 3
      %p72 = por %p70, %p71
      %p73 = scmp.ne.s32.totalorder %s64, %s65
      %p74 = scmp.eq.s32.totalorder %s21, 0
      %p75 = por %p73, %p74
      %p76 = scmp.ne.s32.totalorder %s64, %s65
      %p77 = scmp.eq.s32.totalorder %s22, 3
      %p78 = por %p76, %p77
      %p80 = scmp.ne.s32.totalorder %s65, %s79
      %p81 = scmp.eq.s32.totalorder %s22, 0
      %p82 = por %p80, %p81
      %s84 = sadd.s32 %s83, 1
      %p87 = scmp.eq.s32.totalorder %s16, 3
      %p88 = scmp.ne.s32.totalorder %s83, %s85
      %p89 = scmp.eq.s32.totalorder %s16, 0
      %p90 = por %p88, %p89
      %p91 = scmp.ne.s32.totalorder %s83, %s85
      %p92 = scmp.eq.s32.totalorder %s21, 3
      %p93 = por %p91, %p92
      %p94 = scmp.ne.s32.totalorder %s85, %s86
      %p95 = scmp.eq.s32.totalorder %s21, 0
      %p96 = por %p94, %p95
      %p97 = scmp.ne.s32.totalorder %s85, %s86
      %p98 = scmp.eq.s32.totalorder %s22, 3
      %p99 = por %p97, %p98
      %p101 = scmp.ne.s32.totalorder %s86, %s100
      %p102 = scmp.eq.s32.totalorder %s22, 0
      %p103 = por %p101, %p102
      %s105 = sadd.s32 %s104, 1
      %p108 = scmp.eq.s32.totalorder %s16, 3
      %p109 = scmp.ne.s32.totalorder %s104, %s106
      %p110 = scmp.eq.s32.totalorder %s16, 0
      %p111 = por %p109, %p110
      %p112 = scmp.ne.s32.totalorder %s104, %s106
      %p113 = scmp.eq.s32.totalorder %s21, 3
      %p114 = por %p112, %p113
      %p115 = scmp.ne.s32.totalorder %s106, %s107
      %p116 = scmp.eq.s32.totalorder %s21, 0
      %p117 = por %p115, %p116
      %p118 = scmp.ne.s32.totalorder %s106, %s107
      %p119 = scmp.eq.s32.totalorder %s22, 3
      %p120 = por %p118, %p119
      %p122 = scmp.ne.s32.totalorder %s107, %s121
      %p123 = scmp.eq.s32.totalorder %s22, 0
      %p124 = por %p122, %p123
      %s126 = sadd.s32 %s125, 1
      %p129 = scmp.eq.s32.totalorder %s16, 3
      %p130 = scmp.ne.s32.totalorder %s125, %s127
      %p131 = scmp.eq.s32.totalorder %s16, 0
      %p132 = por %p130, %p131
      %p133 = scmp.ne.s32.totalorder %s125, %s127
      %p134 = scmp.eq.s32.totalorder %s21, 3
      %p135 = por %p133, %p134
      %p136 = scmp.ne.s32.totalorder %s127, %s128
      %p137 = scmp.eq.s32.totalorder %s21, 0
      %p138 = por %p136, %p137
      %p139 = scmp.ne.s32.totalorder %s127, %s128
      %p140 = scmp.eq.s32.totalorder %s22, 3
      %p141 = por %p139, %p140
      %p143 = scmp.ne.s32.totalorder %s128, %s142
      %p144 = scmp.eq.s32.totalorder %s22, 0
      %p145 = por %p143, %p144
      %s147 = sadd.s32 %s146, 1
      %p150 = scmp.eq.s32.totalorder %s16, 3
      %p151 = scmp.ne.s32.totalorder %s146, %s148
      %p152 = scmp.eq.s32.totalorder %s16, 0
      %p153 = por %p151, %p152
      %p154 = scmp.ne.s32.totalorder %s146, %s148
      %p155 = scmp.eq.s32.totalorder %s21, 3
      %p156 = por %p154, %p155
      %p157 = scmp.ne.s32.totalorder %s148, %s149
      %p158 = scmp.eq.s32.totalorder %s21, 0
      %p159 = por %p157, %p158
      %p160 = scmp.ne.s32.totalorder %s148, %s149
      %p161 = scmp.eq.s32.totalorder %s22, 3
      %p162 = por %p160, %p161
      %p164 = scmp.ne.s32.totalorder %s149, %s163
      %p165 = scmp.eq.s32.totalorder %s22, 0
      %p166 = por %p164, %p165
      %s168 = sadd.s32 %s167, 1
      %p171 = scmp.eq.s32.totalorder %s16, 3
      %p172 = scmp.ne.s32.totalorder %s167, %s169
      %p173 = scmp.eq.s32.totalorder %s16, 0
      %p174 = por %p172, %p173
      %p175 = scmp.ne.s32.totalorder %s167, %s169
      %p176 = scmp.eq.s32.totalorder %s21, 3
      %p177 = por %p175, %p176
      %p178 = scmp.ne.s32.totalorder %s169, %s170
      %p179 = scmp.eq.s32.totalorder %s21, 0
      %p180 = por %p178, %p179
      %p181 = scmp.ne.s32.totalorder %s169, %s170
      %p182 = scmp.eq.s32.totalorder %s22, 3
      %p183 = por %p181, %p182
      %p185 = scmp.ne.s32.totalorder %s170, %s184
      %p186 = scmp.eq.s32.totalorder %s22, 0
      %p187 = por %p185, %p186
      %s188 = ssub.s32 %s23, %s35
      %s189 = ssub.s32 %s24, %s31
      %s190 = sor.u32 %s188, %s189
      %p191 = scmp.eq.s32.totalorder %s190, 0
      %s193 = sadd.s32 %s192, 1
      %s194 = scalar_select %p191, %s192, %s193
      %p197 = pneg %p191
      %p198 = scmp.eq.s32.totalorder %s16, 3
      %p199 = por %p197, %p198
      %p200 = scmp.ne.s32.totalorder %s192, %s195
      %p201 = scmp.eq.s32.totalorder %s16, 0
      %p202 = por %p200, %p201
      %p203 = scmp.ne.s32.totalorder %s192, %s195
      %p204 = scmp.eq.s32.totalorder %s21, 3
      %p205 = por %p203, %p204
      %p206 = scmp.ne.s32.totalorder %s195, %s196
      %p207 = scmp.eq.s32.totalorder %s21, 0
      %p208 = por %p206, %p207
      %p209 = scmp.ne.s32.totalorder %s195, %s196
      %p210 = scmp.eq.s32.totalorder %s22, 3
      %p211 = por %p209, %p210
      %p213 = scmp.ne.s32.totalorder %s196, %s212
      %p214 = scmp.eq.s32.totalorder %s22, 0
      %p215 = por %p213, %p214
      %p216 = scmp.le.s32.totalorder 1, %s16
      %p217 = scmp.lt.s32.totalorder %s16, 5
      %p218 = pnand %p216, %p217
      %p219 = pneg %p218
      // Predicated region
      $region9: #{tpu_custom_call.1} parent=5 // pred_check
        _
      $region10: #{tpu_custom_call.1} parent=5 // pred_check_branch
        %221 = sbr.rel (%p218) target = $region12
      $region11: #{tpu_custom_call.1} parent=5 // pred_region
        %s222 = ssub.s32 %s16, 1
        // Predicated region
        $region13: #{tpu_custom_call.1} parent=11 // pred_check
          %p223 = pneg %p75
        $region14: #{tpu_custom_call.1} parent=11 // pred_check_branch
          %225 = sbr.rel (%p223) target = $region16
        $region15: #{tpu_custom_call.1} parent=11 // pred_region
          _
        $region16: #{tpu_custom_call.1} parent=11 // pred_fallthru
          _
        // Predicated region
        $region17: #{tpu_custom_call.1} parent=11 // pred_check
          %p226 = pneg %p96
        $region18: #{tpu_custom_call.1} parent=11 // pred_check_branch
          %228 = sbr.rel (%p226) target = $region20
        $region19: #{tpu_custom_call.1} parent=11 // pred_region
          _
        $region20: #{tpu_custom_call.1} parent=11 // pred_fallthru
          _
        // Predicated region
        $region21: #{tpu_custom_call.1} parent=11 // pred_check
          %p229 = pneg %p117
        $region22: #{tpu_custom_call.1} parent=11 // pred_check_branch
          %231 = sbr.rel (%p229) target = $region24
        $region23: #{tpu_custom_call.1} parent=11 // pred_region
          _
        $region24: #{tpu_custom_call.1} parent=11 // pred_fallthru
          _
        // Predicated region
        $region25: #{tpu_custom_call.1} parent=11 // pred_check
          %p232 = pneg %p138
        $region26: #{tpu_custom_call.1} parent=11 // pred_check_branch
          %234 = sbr.rel (%p232) target = $region28
        $region27: #{tpu_custom_call.1} parent=11 // pred_region
          _
        $region28: #{tpu_custom_call.1} parent=11 // pred_fallthru
          _
        // Predicated region
        $region29: #{tpu_custom_call.1} parent=11 // pred_check
          %p235 = pneg %p159
        $region30: #{tpu_custom_call.1} parent=11 // pred_check_branch
          %237 = sbr.rel (%p235) target = $region32
        $region31: #{tpu_custom_call.1} parent=11 // pred_region
          _
        $region32: #{tpu_custom_call.1} parent=11 // pred_fallthru
          _
        // Predicated region
        $region33: #{tpu_custom_call.1} parent=11 // pred_check
          %p238 = pneg %p180
        $region34: #{tpu_custom_call.1} parent=11 // pred_check_branch
          %240 = sbr.rel (%p238) target = $region36
        $region35: #{tpu_custom_call.1} parent=11 // pred_region
          _
        $region36: #{tpu_custom_call.1} parent=11 // pred_fallthru
          _
      $region12: #{tpu_custom_call.1} parent=5 // pred_fallthru
        _
      %p241 = scmp.lt.s32.totalorder %s16, 4
      // Predicated region
      $region37: #{tpu_custom_call.1} parent=5 // pred_check
        %p242 = pneg %p241
      $region38: #{tpu_custom_call.1} parent=5 // pred_check_branch
        %244 = sbr.rel (%p242) target = $region40
      $region39: #{tpu_custom_call.1} parent=5 // pred_region
        // Predicated region
        $region41: #{tpu_custom_call.1} parent=39 // pred_check
          %p245 = pneg %p48
        $region42: #{tpu_custom_call.1} parent=39 // pred_check_branch
          %247 = sbr.rel (%p245) target = $region44
        $region43: #{tpu_custom_call.1} parent=39 // pred_region
          %p248 = scmp.lt.s32.totalorder %s23, 1
          %s249 = scalar_select %p248, %s23, 1
          %s250 = smul.addr %s249, 36
          %s251 = smul.addr %s250, 4
          %s252 = scalar_lea.vmem %s0, %s251
        $region44: #{tpu_custom_call.1} parent=39 // pred_fallthru
          _
      $region40: #{tpu_custom_call.1} parent=5 // pred_fallthru
        _
      %p253 = scmp.le.s32.totalorder 1, %s16
      %p254 = scmp.lt.s32.totalorder %s16, 5
      %p255 = pnand %p253, %p254
      %p256 = pneg %p255
      // Predicated region
      $region45: #{tpu_custom_call.1} parent=5 // pred_check
        _
      $region46: #{tpu_custom_call.1} parent=5 // pred_check_branch
        %258 = sbr.rel (%p255) target = $region48
      $region47: #{tpu_custom_call.1} parent=5 // pred_region
        %s259 = ssub.s32 %s16, 1
        %p260 = scmp.lt.s32.totalorder %s25, 1
        %s261 = scalar_select %p260, %s25, 1
        %s262 = smul.addr %s261, 36
        %s263 = smul.addr %s262, 4
        %s264 = scalar_lea.vmem %s0, %s263
        %p265 = pneg %p54
        %p266 = pneg %p51
        %p267 = pneg %p75
        %p268 = pneg %p72
        %p269 = pneg %p96
        %p270 = pneg %p93
        %p271 = pneg %p117
        %p272 = pneg %p114
        %p273 = pneg %p138
        %p274 = pneg %p135
        %p275 = pneg %p159
        %p276 = pneg %p156
        %p277 = pneg %p180
        %p278 = pneg %p177
        %p279 = pneg %p208
        %p280 = pneg %p205
        %s281 = sand.u32 %s195, 1
        %s282 = scalar_lea.sflag [#allocation4], %s281
        %s283 = sand.u32 %s195, 1
        %s284 = smul.addr %s283, 128
        %s285 = scalar_lea.vmem [#allocation3], %s284
        %p286 = scmp.lt.s32.totalorder %s25, 1
        %s287 = scalar_select %p286, %s25, 1
        %s288 = smul.addr %s287, 36
        %s289 = smul.addr %s288, 4
        %s290 = scalar_lea.vmem %s0, %s289
        %s291 = smul.u32 8, %s26
        %s293 = smul.u32 %s26, 8
        %s294 = smul.u32 %s293, 2
        %s295 = smul.addr %s294, 4
        %s296 = scalar_lea.vmem %s290, %s295
        %v297 = vld [vmem:[%s296] sm:$0xf]
        %v298 = vld [vmem:[%s296 + $0x4] sm:$0xf]
        %v299 = vld [vmem:[%s296 + $0x8] sm:$0xf]
        %v300 = vld [vmem:[%s296 + $0xc] sm:$0xf]
        %v301 = vld [vmem:[%s296 + $0x10] sm:$0xf]
        %v302 = vld [vmem:[%s296 + $0x14] sm:$0xf]
        %v303 = vld [vmem:[%s296 + $0x18] sm:$0xf]
        %v304 = vld [vmem:[%s296 + $0x1c] sm:$0xf]
        %v305 = vld [vmem:[%s296 + $0x20] sm:$0xf]
        %v306 = vld [vmem:[%s296 + $0x24] sm:$0xf]
        %v307 = vld [vmem:[%s296 + $0x28] sm:$0xf]
        %v308 = vld [vmem:[%s296 + $0x2c] sm:$0xf]
        %v309 = vld [vmem:[%s296 + $0x30] sm:$0xf]
        %v310 = vld [vmem:[%s296 + $0x34] sm:$0xf]
        %v311 = vld [vmem:[%s296 + $0x38] sm:$0xf]
        %v312 = vld [vmem:[%s296 + $0x3c] sm:$0xf]
        %v313 = vld [vmem:[%s296 + $0x40] sm:$0xf]
        %v314 = vld [vmem:[%s296 + $0x44] sm:$0xf]
        %v315 = vld [vmem:[%s296 + $0x48] sm:$0xf]
        %v316 = vld [vmem:[%s296 + $0x4c] sm:$0xf]
        %v317 = vld [vmem:[%s1] sm:$0xf]
        %v318 = vld [vmem:[%s1 + $0x4] sm:$0xf]
        %v319 = vld [vmem:[%s2] sm:$0x1]
        %v321 = vlaneseq
        %v322 = vshrl.u32 %v321, 7
        %v323 = vsub.s32 0, %v322
        %v324 = vrot.slane %v319, %v323
        %v346 = vunpack.c.l.b16 %v297
        %v347 = vunpack.c.l.b16 %v298
        %v348 = vunpack.c.l.b16 %v299
        %v349 = vunpack.c.l.b16 %v300
        %v350 = vunpack.c.l.b16 %v301
        %v351 = vunpack.c.l.b16 %v302
        %v352 = vunpack.c.l.b16 %v303
        %v353 = vunpack.c.l.b16 %v304
        %v354 = vunpack.c.l.b16 %v305
        %v355 = vunpack.c.l.b16 %v306
        %v356 = vunpack.c.l.b16 %v307
        %v357 = vunpack.c.l.b16 %v308
        %v358 = vunpack.c.l.b16 %v309
        %v359 = vunpack.c.l.b16 %v310
        %v360 = vunpack.c.l.b16 %v311
        %v361 = vunpack.c.l.b16 %v312
        %v362 = vunpack.c.l.b16 %v313
        %v363 = vunpack.c.l.b16 %v314
        %v364 = vunpack.c.l.b16 %v315
        %v365 = vunpack.c.l.b16 %v316
        %v366 = vpack.c.b16 %v347, %v346
        %v367 = vpack.c.b16 %v349, %v348
        %v368 = vpack.c.b16 %v351, %v350
        %v369 = vpack.c.b16 %v353, %v352
        %v370 = vpack.c.b16 %v355, %v354
        %v371 = vpack.c.b16 %v357, %v356
        %v372 = vpack.c.b16 %v359, %v358
        %v373 = vpack.c.b16 %v361, %v360
        %v374 = vpack.c.b16 %v363, %v362
        %v375 = vpack.c.b16 %v365, %v364
        %v378 = vunpack.c.l.b16 %v317
        %v379 = vunpack.c.l.b16 %v318
        %v380 = vpack.c.b16 %v379, %v378
        %vm382 = vcmask 130048
        %v384 = vsel %vm382, %v366, 0
        %v387 = vsel %vm382, %v367, 0
        %v390 = vsel %vm382, %v368, 0
        %v393 = vsel %vm382, %v369, 0
        %v396 = vsel %vm382, %v370, 0
        %v399 = vsel %vm382, %v371, 0
        %v402 = vsel %vm382, %v372, 0
        %v405 = vsel %vm382, %v373, 0
        %v408 = vsel %vm382, %v374, 0
        %v411 = vsel %vm382, %v375, 0
        %413 = vmatprep.subr.bf16.mxu0 0
        %414 = vmatpush1.bf16.msra.mxu0 %v380
        %415 = vmatprep.subr.bf16.mxu0 0
        %416 = vmatpush1.bf16.msra.mxu0 0
        %417 = vmatprep.subr.bf16.mxu0 0
        %418 = vmatpush1.bf16.msra.mxu0 0
        %419 = vmatprep.subr.bf16.mxu0 0
        %420 = vmatpush1.bf16.msra.mxu0 0
        %421 = vmatprep.subr.bf16.mxu0 0
        %422 = vmatpush1.bf16.msra.mxu0 0
        %423 = vmatprep.subr.bf16.mxu0 0
        %424 = vmatpush1.bf16.msra.mxu0 0
        %425 = vmatprep.subr.bf16.mxu0 0
        %426 = vmatpush1.bf16.msra.mxu0 0
        %427 = vmatprep.subr.bf16.mxu0 0
        %428 = vmatpush1.bf16.msra.mxu0 0
        %429 = vmatprep.subr.bf16.mxu0 0
        %430 = vmatpush1.bf16.msra.mxu0 0
        %431 = vmatprep.subr.bf16.mxu0 0
        %432 = vmatpush1.bf16.msra.mxu0 0
        %433 = vmatprep.subr.bf16.mxu0 0
        %434 = vmatpush1.bf16.msra.mxu0 0
        %435 = vmatprep.subr.bf16.mxu0 0
        %436 = vmatpush1.bf16.msra.mxu0 0
        %437 = vmatprep.subr.bf16.mxu0 0
        %438 = vmatpush1.bf16.msra.mxu0 0
        %439 = vmatprep.subr.bf16.mxu0 0
        %440 = vmatpush1.bf16.msra.mxu0 0
        %441 = vmatprep.subr.bf16.mxu0 0
        %442 = vmatpush1.bf16.msra.mxu0 0
        %443 = vmatprep.subr.bf16.mxu0 0
        %444 = vmatpush1.bf16.msra.mxu0 0
        %445 = vmatprep.mubr.bf16.mxu0 0
        %446 = vmatmul.mubr.bf16.gmra.mrb[0].mxu0 %v384
        %v447 = vpop.f32.mrb[0].mxu0
        %v448 = vadd.f32 %v324, %v447
        %v449 = vpop.f32.mrb[0].mxu0
        %v450 = vpop.f32.mrb[0].mxu0
        %v451 = vadd.f32 %v324, %v450
        %v452 = vpop.f32.mrb[0].mxu0
        %453 = vmatprep.mubr.bf16.mxu0 0
        %454 = vmatmul.mubr.bf16.gmra.mrb[0].mxu0 %v387
        %v455 = vpop.f32.mrb[0].mxu0
        %v456 = vadd.f32 %v324, %v455
        %v457 = vpop.f32.mrb[0].mxu0
        %v458 = vpop.f32.mrb[0].mxu0
        %v459 = vadd.f32 %v324, %v458
        %v460 = vpop.f32.mrb[0].mxu0
        %461 = vmatprep.mubr.bf16.mxu0 0
        %462 = vmatmul.mubr.bf16.gmra.mrb[0].mxu0 %v390
        %v463 = vpop.f32.mrb[0].mxu0
        %v464 = vadd.f32 %v324, %v463
        %v465 = vpop.f32.mrb[0].mxu0
        %v466 = vpop.f32.mrb[0].mxu0
        %v467 = vadd.f32 %v324, %v466
        %v468 = vpop.f32.mrb[0].mxu0
        %469 = vmatprep.mubr.bf16.mxu0 0
        %470 = vmatmul.mubr.bf16.gmra.mrb[0].mxu0 %v393
        %v471 = vpop.f32.mrb[0].mxu0
        %v472 = vadd.f32 %v324, %v471
        %v473 = vpop.f32.mrb[0].mxu0
        %v474 = vpop.f32.mrb[0].mxu0
        %v475 = vadd.f32 %v324, %v474
        %v476 = vpop.f32.mrb[0].mxu0
        %477 = vmatprep.mubr.bf16.mxu0 0
        %478 = vmatmul.mubr.bf16.gmra.mrb[0].mxu0 %v396
        %v479 = vpop.f32.mrb[0].mxu0
        %v480 = vadd.f32 %v324, %v479
        %v481 = vpop.f32.mrb[0].mxu0
        %v482 = vpop.f32.mrb[0].mxu0
        %v483 = vadd.f32 %v324, %v482
        %v484 = vpop.f32.mrb[0].mxu0
        %485 = vmatprep.mubr.bf16.mxu0 0
        %486 = vmatmul.mubr.bf16.gmra.mrb[0].mxu0 %v399
        %v487 = vpop.f32.mrb[0].mxu0
        %v488 = vadd.f32 %v324, %v487
        %v489 = vpop.f32.mrb[0].mxu0
        %v490 = vpop.f32.mrb[0].mxu0
        %v491 = vadd.f32 %v324, %v490
        %v492 = vpop.f32.mrb[0].mxu0
        %493 = vmatprep.mubr.bf16.mxu0 0
        %494 = vmatmul.mubr.bf16.gmra.mrb[0].mxu0 %v402
        %v495 = vpop.f32.mrb[0].mxu0
        %v496 = vadd.f32 %v324, %v495
        %v497 = vpop.f32.mrb[0].mxu0
        %v498 = vpop.f32.mrb[0].mxu0
        %v499 = vadd.f32 %v324, %v498
        %v500 = vpop.f32.mrb[0].mxu0
        %501 = vmatprep.mubr.bf16.mxu0 0
        %502 = vmatmul.mubr.bf16.gmra.mrb[0].mxu0 %v405
        %v503 = vpop.f32.mrb[0].mxu0
        %v504 = vadd.f32 %v324, %v503
        %v505 = vpop.f32.mrb[0].mxu0
        %v506 = vpop.f32.mrb[0].mxu0
        %v507 = vadd.f32 %v324, %v506
        %v508 = vpop.f32.mrb[0].mxu0
        %509 = vmatprep.mubr.bf16.mxu0 0
        %510 = vmatmul.mubr.bf16.gmra.mrb[0].mxu0 %v408
        %v511 = vpop.f32.mrb[0].mxu0
        %v512 = vadd.f32 %v324, %v511
        %v513 = vpop.f32.mrb[0].mxu0
        %v514 = vpop.f32.mrb[0].mxu0
        %v515 = vadd.f32 %v324, %v514
        %v516 = vpop.f32.mrb[0].mxu0
        %517 = vmatprep.mubr.bf16.mxu0 0
        %518 = vmatmul.mubr.bf16.gmra.mrb[0].mxu0 %v411
        %v519 = vpop.f32.mrb[0].mxu0
        %v520 = vadd.f32 %v324, %v519
        %v521 = vpop.f32.mrb[0].mxu0
        %v522 = vpop.f32.mrb[0].mxu0
        %v523 = vadd.f32 %v324, %v522
        %v524 = vpop.f32.mrb[0].mxu0
        %525 = vdwg.mxu0
        %v526 = vmax.f32 %v448, 0.0
        %v527 = vmax.f32 %v451, 0.0
        %v528 = vmax.f32 %v456, 0.0
        %v529 = vmax.f32 %v459, 0.0
        %v530 = vmax.f32 %v464, 0.0
        %v531 = vmax.f32 %v467, 0.0
        %v532 = vmax.f32 %v472, 0.0
        %v533 = vmax.f32 %v475, 0.0
        %v534 = vmax.f32 %v480, 0.0
        %v535 = vmax.f32 %v483, 0.0
        %v536 = vmax.f32 %v488, 0.0
        %v537 = vmax.f32 %v491, 0.0
        %v538 = vmax.f32 %v496, 0.0
        %v539 = vmax.f32 %v499, 0.0
        %v540 = vmax.f32 %v504, 0.0
        %v541 = vmax.f32 %v507, 0.0
        %v542 = vmax.f32 %v512, 0.0
        %v543 = vmax.f32 %v515, 0.0
        %v544 = vmax.f32 %v520, 0.0
        %v545 = vmax.f32 %v523, 0.0
        %v546 = vlaneseq
        %v547 = vshrl.u32 %v546, 7
        %v548 = vadd.s32 %v547, 8
        %v549 = vadd.s32 %v547, 16
        %v550 = vadd.s32 %v547, 24
        %v551 = vadd.s32 %v547, 32
        %v552 = vadd.s32 %v547, 40
        %v553 = vadd.s32 %v547, 48
        %v554 = vadd.s32 %v547, 56
        %v555 = vadd.s32 %v547, 64
        %v556 = vadd.s32 %v547, 72
        %v557 = vadd.s32 %v547, 80
        %v558 = vadd.s32 %v547, 88
        %v559 = vadd.s32 %v547, 96
        %v560 = vadd.s32 %v547, 104
        %v561 = vadd.s32 %v547, 112
        %v562 = vadd.s32 %v547, 120
        %v563 = vadd.s32 %v547, 128
        %v564 = vadd.s32 %v547, 136
        %v565 = vadd.s32 %v547, 144
        %v566 = vadd.s32 %v547, 152
        %vm567 = vcmp.lt.s32.totalorder %v547, 0
        %v568 = vsub.s32 0, %v547
        %v569 = vsel %vm567, %v568, %v547
        %v570 = vshrl.u32 %v569, 4
        %v571 = vand.u32 %v569, 15
        %v572 = vsub.s32 0, %v571
        %v573 = vsel %vm567, %v572, %v571
        %vm574 = vcmp.lt.s32.totalorder %v548, 0
        %v575 = vsub.s32 0, %v548
        %v576 = vsel %vm574, %v575, %v548
        %v577 = vshrl.u32 %v576, 4
        %v578 = vand.u32 %v576, 15
        %v579 = vsub.s32 0, %v578
        %v580 = vsel %vm574, %v579, %v578
        %vm581 = vcmp.lt.s32.totalorder %v549, 0
        %v582 = vsub.s32 0, %v549
        %v583 = vsel %vm581, %v582, %v549
        %v584 = vshrl.u32 %v583, 4
        %v585 = vand.u32 %v583, 15
        %v586 = vsub.s32 0, %v585
        %v587 = vsel %vm581, %v586, %v585
        %vm588 = vcmp.lt.s32.totalorder %v550, 0
        %v589 = vsub.s32 0, %v550
        %v590 = vsel %vm588, %v589, %v550
        %v591 = vshrl.u32 %v590, 4
        %v592 = vand.u32 %v590, 15
        %v593 = vsub.s32 0, %v592
        %v594 = vsel %vm588, %v593, %v592
        %vm595 = vcmp.lt.s32.totalorder %v551, 0
        %v596 = vsub.s32 0, %v551
        %v597 = vsel %vm595, %v596, %v551
        %v598 = vshrl.u32 %v597, 4
        %v599 = vand.u32 %v597, 15
        %v600 = vsub.s32 0, %v599
        %v601 = vsel %vm595, %v600, %v599
        %vm602 = vcmp.lt.s32.totalorder %v552, 0
        %v603 = vsub.s32 0, %v552
        %v604 = vsel %vm602, %v603, %v552
        %v605 = vshrl.u32 %v604, 4
        %v606 = vand.u32 %v604, 15
        %v607 = vsub.s32 0, %v606
        %v608 = vsel %vm602, %v607, %v606
        %vm609 = vcmp.lt.s32.totalorder %v553, 0
        %v610 = vsub.s32 0, %v553
        %v611 = vsel %vm609, %v610, %v553
        %v612 = vshrl.u32 %v611, 4
        %v613 = vand.u32 %v611, 15
        %v614 = vsub.s32 0, %v613
        %v615 = vsel %vm609, %v614, %v613
        %vm616 = vcmp.lt.s32.totalorder %v554, 0
        %v617 = vsub.s32 0, %v554
        %v618 = vsel %vm616, %v617, %v554
        %v619 = vshrl.u32 %v618, 4
        %v620 = vand.u32 %v618, 15
        %v621 = vsub.s32 0, %v620
        %v622 = vsel %vm616, %v621, %v620
        %vm623 = vcmp.lt.s32.totalorder %v555, 0
        %v624 = vsub.s32 0, %v555
        %v625 = vsel %vm623, %v624, %v555
        %v626 = vshrl.u32 %v625, 4
        %v627 = vand.u32 %v625, 15
        %v628 = vsub.s32 0, %v627
        %v629 = vsel %vm623, %v628, %v627
        %vm630 = vcmp.lt.s32.totalorder %v556, 0
        %v631 = vsub.s32 0, %v556
        %v632 = vsel %vm630, %v631, %v556
        %v633 = vshrl.u32 %v632, 4
        %v634 = vand.u32 %v632, 15
        %v635 = vsub.s32 0, %v634
        %v636 = vsel %vm630, %v635, %v634
        %vm637 = vcmp.lt.s32.totalorder %v557, 0
        %v638 = vsub.s32 0, %v557
        %v639 = vsel %vm637, %v638, %v557
        %v640 = vshrl.u32 %v639, 4
        %v641 = vand.u32 %v639, 15
        %v642 = vsub.s32 0, %v641
        %v643 = vsel %vm637, %v642, %v641
        %vm644 = vcmp.lt.s32.totalorder %v558, 0
        %v645 = vsub.s32 0, %v558
        %v646 = vsel %vm644, %v645, %v558
        %v647 = vshrl.u32 %v646, 4
        %v648 = vand.u32 %v646, 15
        %v649 = vsub.s32 0, %v648
        %v650 = vsel %vm644, %v649, %v648
        %vm651 = vcmp.lt.s32.totalorder %v559, 0
        %v652 = vsub.s32 0, %v559
        %v653 = vsel %vm651, %v652, %v559
        %v654 = vshrl.u32 %v653, 4
        %v655 = vand.u32 %v653, 15
        %v656 = vsub.s32 0, %v655
        %v657 = vsel %vm651, %v656, %v655
        %vm658 = vcmp.lt.s32.totalorder %v560, 0
        %v659 = vsub.s32 0, %v560
        %v660 = vsel %vm658, %v659, %v560
        %v661 = vshrl.u32 %v660, 4
        %v662 = vand.u32 %v660, 15
        %v663 = vsub.s32 0, %v662
        %v664 = vsel %vm658, %v663, %v662
        %vm665 = vcmp.lt.s32.totalorder %v561, 0
        %v666 = vsub.s32 0, %v561
        %v667 = vsel %vm665, %v666, %v561
        %v668 = vshrl.u32 %v667, 4
        %v669 = vand.u32 %v667, 15
        %v670 = vsub.s32 0, %v669
        %v671 = vsel %vm665, %v670, %v669
        %vm672 = vcmp.lt.s32.totalorder %v562, 0
        %v673 = vsub.s32 0, %v562
        %v674 = vsel %vm672, %v673, %v562
        %v675 = vshrl.u32 %v674, 4
        %v676 = vand.u32 %v674, 15
        %v677 = vsub.s32 0, %v676
        %v678 = vsel %vm672, %v677, %v676
        %vm679 = vcmp.lt.s32.totalorder %v563, 0
        %v680 = vsub.s32 0, %v563
        %v681 = vsel %vm679, %v680, %v563
        %v682 = vshrl.u32 %v681, 4
        %v683 = vand.u32 %v681, 15
        %v684 = vsub.s32 0, %v683
        %v685 = vsel %vm679, %v684, %v683
        %vm686 = vcmp.lt.s32.totalorder %v564, 0
        %v687 = vsub.s32 0, %v564
        %v688 = vsel %vm686, %v687, %v564
        %v689 = vshrl.u32 %v688, 4
        %v690 = vand.u32 %v688, 15
        %v691 = vsub.s32 0, %v690
        %v692 = vsel %vm686, %v691, %v690
        %vm693 = vcmp.lt.s32.totalorder %v565, 0
        %v694 = vsub.s32 0, %v565
        %v695 = vsel %vm693, %v694, %v565
        %v696 = vshrl.u32 %v695, 4
        %v697 = vand.u32 %v695, 15
        %v698 = vsub.s32 0, %v697
        %v699 = vsel %vm693, %v698, %v697
        %vm700 = vcmp.lt.s32.totalorder %v566, 0
        %v701 = vsub.s32 0, %v566
        %v702 = vsel %vm700, %v701, %v566
        %v703 = vshrl.u32 %v702, 4
        %v704 = vand.u32 %v702, 15
        %v705 = vsub.s32 0, %v704
        %v706 = vsel %vm700, %v705, %v704
        %vm707 = vcmp.ne.s32.totalorder %v573, 0
        %vm708 = vcmp.ne.s32.totalorder %v580, 0
        %vm709 = vcmp.ne.s32.totalorder %v587, 0
        %vm710 = vcmp.ne.s32.totalorder %v594, 0
        %vm711 = vcmp.ne.s32.totalorder %v601, 0
        %vm712 = vcmp.ne.s32.totalorder %v608, 0
        %vm713 = vcmp.ne.s32.totalorder %v615, 0
        %vm714 = vcmp.ne.s32.totalorder %v622, 0
        %vm715 = vcmp.ne.s32.totalorder %v629, 0
        %vm716 = vcmp.ne.s32.totalorder %v636, 0
        %vm717 = vcmp.ne.s32.totalorder %v643, 0
        %vm718 = vcmp.ne.s32.totalorder %v650, 0
        %vm719 = vcmp.ne.s32.totalorder %v657, 0
        %vm720 = vcmp.ne.s32.totalorder %v664, 0
        %vm721 = vcmp.ne.s32.totalorder %v671, 0
        %vm722 = vcmp.ne.s32.totalorder %v678, 0
        %vm723 = vcmp.ne.s32.totalorder %v685, 0
        %vm724 = vcmp.ne.s32.totalorder %v692, 0
        %vm725 = vcmp.ne.s32.totalorder %v699, 0
        %vm726 = vcmp.ne.s32.totalorder %v706, 0
        %vm727 = vcmp.lt.s32.totalorder %v573, 0
        %vm728 = vcmp.lt.s32.totalorder %v580, 0
        %vm729 = vcmp.lt.s32.totalorder %v587, 0
        %vm730 = vcmp.lt.s32.totalorder %v594, 0
        %vm731 = vcmp.lt.s32.totalorder %v601, 0
        %vm732 = vcmp.lt.s32.totalorder %v608, 0
        %vm733 = vcmp.lt.s32.totalorder %v615, 0
        %vm734 = vcmp.lt.s32.totalorder %v622, 0
        %vm735 = vcmp.lt.s32.totalorder %v629, 0
        %vm736 = vcmp.lt.s32.totalorder %v636, 0
        %vm737 = vcmp.lt.s32.totalorder %v643, 0
        %vm738 = vcmp.lt.s32.totalorder %v650, 0
        %vm739 = vcmp.lt.s32.totalorder %v657, 0
        %vm740 = vcmp.lt.s32.totalorder %v664, 0
        %vm741 = vcmp.lt.s32.totalorder %v671, 0
        %vm742 = vcmp.lt.s32.totalorder %v678, 0
        %vm743 = vcmp.lt.s32.totalorder %v685, 0
        %vm744 = vcmp.lt.s32.totalorder %v692, 0
        %vm745 = vcmp.lt.s32.totalorder %v699, 0
        %vm746 = vcmp.lt.s32.totalorder %v706, 0
        %vm747 = vmand %vm727, %vm707
        %vm748 = vmand %vm728, %vm708
        %vm749 = vmand %vm729, %vm709
        %vm750 = vmand %vm730, %vm710
        %vm751 = vmand %vm731, %vm711
        %vm752 = vmand %vm732, %vm712
        %vm753 = vmand %vm733, %vm713
        %vm754 = vmand %vm734, %vm714
        %vm755 = vmand %vm735, %vm715
        %vm756 = vmand %vm736, %vm716
        %vm757 = vmand %vm737, %vm717
        %vm758 = vmand %vm738, %vm718
        %vm759 = vmand %vm739, %vm719
        %vm760 = vmand %vm740, %vm720
        %vm761 = vmand %vm741, %vm721
        %vm762 = vmand %vm742, %vm722
        %vm763 = vmand %vm743, %vm723
        %vm764 = vmand %vm744, %vm724
        %vm765 = vmand %vm745, %vm725
        %vm766 = vmand %vm746, %vm726
        %v767 = vadd.s32 %v573, 16
        %v768 = vadd.s32 %v580, 16
        %v769 = vadd.s32 %v587, 16
        %v770 = vadd.s32 %v594, 16
        %v771 = vadd.s32 %v601, 16
        %v772 = vadd.s32 %v608, 16
        %v773 = vadd.s32 %v615, 16
        %v774 = vadd.s32 %v622, 16
        %v775 = vadd.s32 %v629, 16
        %v776 = vadd.s32 %v636, 16
        %v777 = vadd.s32 %v643, 16
        %v778 = vadd.s32 %v650, 16
        %v779 = vadd.s32 %v657, 16
        %v780 = vadd.s32 %v664, 16
        %v781 = vadd.s32 %v671, 16
        %v782 = vadd.s32 %v678, 16
        %v783 = vadd.s32 %v685, 16
        %v784 = vadd.s32 %v692, 16
        %v785 = vadd.s32 %v699, 16
        %v786 = vadd.s32 %v706, 16
        %v787 = vsel %vm747, %v767, %v573
        %v788 = vsel %vm748, %v768, %v580
        %v789 = vsel %vm749, %v769, %v587
        %v790 = vsel %vm750, %v770, %v594
        %v791 = vsel %vm751, %v771, %v601
        %v792 = vsel %vm752, %v772, %v608
        %v793 = vsel %vm753, %v773, %v615
        %v794 = vsel %vm754, %v774, %v622
        %v795 = vsel %vm755, %v775, %v629
        %v796 = vsel %vm756, %v776, %v636
        %v797 = vsel %vm757, %v777, %v643
        %v798 = vsel %vm758, %v778, %v650
        %v799 = vsel %vm759, %v779, %v657
        %v800 = vsel %vm760, %v780, %v664
        %v801 = vsel %vm761, %v781, %v671
        %v802 = vsel %vm762, %v782, %v678
        %v803 = vsel %vm763, %v783, %v685
        %v804 = vsel %vm764, %v784, %v692
        %v805 = vsel %vm765, %v785, %v699
        %v806 = vsel %vm766, %v786, %v706
        %vm807 = vcmp.ge.s32.totalorder %v787, 1
        %vm808 = vcmp.ge.s32.totalorder %v788, 1
        %vm809 = vcmp.ge.s32.totalorder %v789, 1
        %vm810 = vcmp.ge.s32.totalorder %v790, 1
        %vm811 = vcmp.ge.s32.totalorder %v791, 1
        %vm812 = vcmp.ge.s32.totalorder %v792, 1
        %vm813 = vcmp.ge.s32.totalorder %v793, 1
        %vm814 = vcmp.ge.s32.totalorder %v794, 1
        %vm815 = vcmp.ge.s32.totalorder %v795, 1
        %vm816 = vcmp.ge.s32.totalorder %v796, 1
        %vm817 = vcmp.ge.s32.totalorder %v797, 1
        %vm818 = vcmp.ge.s32.totalorder %v798, 1
        %vm819 = vcmp.ge.s32.totalorder %v799, 1
        %vm820 = vcmp.ge.s32.totalorder %v800, 1
        %vm821 = vcmp.ge.s32.totalorder %v801, 1
        %vm822 = vcmp.ge.s32.totalorder %v802, 1
        %vm823 = vcmp.ge.s32.totalorder %v803, 1
        %vm824 = vcmp.ge.s32.totalorder %v804, 1
        %vm825 = vcmp.ge.s32.totalorder %v805, 1
        %vm826 = vcmp.ge.s32.totalorder %v806, 1
        %v827 = vrot.slane %v526, 7
        %v828 = vrot.slane %v527, 7
        %v829 = vrot.slane %v528, 7
        %v830 = vrot.slane %v529, 7
        %v831 = vrot.slane %v530, 7
        %v832 = vrot.slane %v531, 7
        %v833 = vrot.slane %v532, 7
        %v834 = vrot.slane %v533, 7
        %v835 = vrot.slane %v534, 7
        %v836 = vrot.slane %v535, 7
        %v837 = vrot.slane %v536, 7
        %v838 = vrot.slane %v537, 7
        %v839 = vrot.slane %v538, 7
        %v840 = vrot.slane %v539, 7
        %v841 = vrot.slane %v540, 7
        %v842 = vrot.slane %v541, 7
        %v843 = vrot.slane %v542, 7
        %v844 = vrot.slane %v543, 7
        %v845 = vrot.slane %v544, 7
        %v846 = vrot.slane %v545, 7
        %vm847 = vcmp.lt.s32.totalorder %v547, 1
        %v848 = vsel %vm847, %v845, %v846
        %v849 = vsel %vm847, %v844, %v845
        %v850 = vsel %vm847, %v843, %v844
        %v851 = vsel %vm847, %v842, %v843
        %v852 = vsel %vm847, %v841, %v842
        %v853 = vsel %vm847, %v840, %v841
        %v854 = vsel %vm847, %v839, %v840
        %v855 = vsel %vm847, %v838, %v839
        %v856 = vsel %vm847, %v837, %v838
        %v857 = vsel %vm847, %v836, %v837
        %v858 = vsel %vm847, %v835, %v836
        %v859 = vsel %vm847, %v834, %v835
        %v860 = vsel %vm847, %v833, %v834
        %v861 = vsel %vm847, %v832, %v833
        %v862 = vsel %vm847, %v831, %v832
        %v863 = vsel %vm847, %v830, %v831
        %v864 = vsel %vm847, %v829, %v830
        %v865 = vsel %vm847, %v828, %v829
        %v866 = vsel %vm847, %v827, %v828
        %v867 = vsel %vm847, %v846, %v827
        %v868 = vsel %vm807, 1, 0
        %v869 = vsel %vm808, 1, 0
        %v870 = vsel %vm809, 1, 0
        %v871 = vsel %vm810, 1, 0
        %v872 = vsel %vm811, 1, 0
        %v873 = vsel %vm812, 1, 0
        %v874 = vsel %vm813, 1, 0
        %v875 = vsel %vm814, 1, 0
        %v876 = vsel %vm815, 1, 0
        %v877 = vsel %vm816, 1, 0
        %v878 = vsel %vm817, 1, 0
        %v879 = vsel %vm818, 1, 0
        %v880 = vsel %vm819, 1, 0
        %v881 = vsel %vm820, 1, 0
        %v882 = vsel %vm821, 1, 0
        %v883 = vsel %vm822, 1, 0
        %v884 = vsel %vm823, 1, 0
        %v885 = vsel %vm824, 1, 0
        %v886 = vsel %vm825, 1, 0
        %v887 = vsel %vm826, 1, 0
        %vm888 = vcmp.eq.s32.totalorder %v868, 1
        %vm889 = vcmp.eq.s32.totalorder %v869, 1
        %vm890 = vcmp.eq.s32.totalorder %v870, 1
        %vm891 = vcmp.eq.s32.totalorder %v871, 1
        %vm892 = vcmp.eq.s32.totalorder %v872, 1
        %vm893 = vcmp.eq.s32.totalorder %v873, 1
        %vm894 = vcmp.eq.s32.totalorder %v874, 1
        %vm895 = vcmp.eq.s32.totalorder %v875, 1
        %vm896 = vcmp.eq.s32.totalorder %v876, 1
        %vm897 = vcmp.eq.s32.totalorder %v877, 1
        %vm898 = vcmp.eq.s32.totalorder %v878, 1
        %vm899 = vcmp.eq.s32.totalorder %v879, 1
        %vm900 = vcmp.eq.s32.totalorder %v880, 1
        %vm901 = vcmp.eq.s32.totalorder %v881, 1
        %vm902 = vcmp.eq.s32.totalorder %v882, 1
        %vm903 = vcmp.eq.s32.totalorder %v883, 1
        %vm904 = vcmp.eq.s32.totalorder %v884, 1
        %vm905 = vcmp.eq.s32.totalorder %v885, 1
        %vm906 = vcmp.eq.s32.totalorder %v886, 1
        %vm907 = vcmp.eq.s32.totalorder %v887, 1
        %v908 = vsel %vm888, %v867, 0.0
        %v909 = vsel %vm889, %v866, 0.0
        %v910 = vsel %vm890, %v865, 0.0
        %v911 = vsel %vm891, %v864, 0.0
        %v912 = vsel %vm892, %v863, 0.0
        %v913 = vsel %vm893, %v862, 0.0
        %v914 = vsel %vm894, %v861, 0.0
        %v915 = vsel %vm895, %v860, 0.0
        %v916 = vsel %vm896, %v859, 0.0
        %v917 = vsel %vm897, %v858, 0.0
        %v918 = vsel %vm898, %v857, 0.0
        %v919 = vsel %vm899, %v856, 0.0
        %v920 = vsel %vm900, %v855, 0.0
        %v921 = vsel %vm901, %v854, 0.0
        %v922 = vsel %vm902, %v853, 0.0
        %v923 = vsel %vm903, %v852, 0.0
        %v924 = vsel %vm904, %v851, 0.0
        %v925 = vsel %vm905, %v850, 0.0
        %v926 = vsel %vm906, %v849, 0.0
        %v927 = vsel %vm907, %v848, 0.0
        %vm928 = vcmp.lt.s32.totalorder %v787, 15
        %vm929 = vcmp.lt.s32.totalorder %v788, 15
        %vm930 = vcmp.lt.s32.totalorder %v789, 15
        %vm931 = vcmp.lt.s32.totalorder %v790, 15
        %vm932 = vcmp.lt.s32.totalorder %v791, 15
        %vm933 = vcmp.lt.s32.totalorder %v792, 15
        %vm934 = vcmp.lt.s32.totalorder %v793, 15
        %vm935 = vcmp.lt.s32.totalorder %v794, 15
        %vm936 = vcmp.lt.s32.totalorder %v795, 15
        %vm937 = vcmp.lt.s32.totalorder %v796, 15
        %vm938 = vcmp.lt.s32.totalorder %v797, 15
        %vm939 = vcmp.lt.s32.totalorder %v798, 15
        %vm940 = vcmp.lt.s32.totalorder %v799, 15
        %vm941 = vcmp.lt.s32.totalorder %v800, 15
        %vm942 = vcmp.lt.s32.totalorder %v801, 15
        %vm943 = vcmp.lt.s32.totalorder %v802, 15
        %vm944 = vcmp.lt.s32.totalorder %v803, 15
        %vm945 = vcmp.lt.s32.totalorder %v804, 15
        %vm946 = vcmp.lt.s32.totalorder %v805, 15
        %vm947 = vcmp.lt.s32.totalorder %v806, 15
        %v948 = vrot.slane %v526, 1
        %v949 = vrot.slane %v527, 1
        %v950 = vrot.slane %v528, 1
        %v951 = vrot.slane %v529, 1
        %v952 = vrot.slane %v530, 1
        %v953 = vrot.slane %v531, 1
        %v954 = vrot.slane %v532, 1
        %v955 = vrot.slane %v533, 1
        %v956 = vrot.slane %v534, 1
        %v957 = vrot.slane %v535, 1
        %v958 = vrot.slane %v536, 1
        %v959 = vrot.slane %v537, 1
        %v960 = vrot.slane %v538, 1
        %v961 = vrot.slane %v539, 1
        %v962 = vrot.slane %v540, 1
        %v963 = vrot.slane %v541, 1
        %v964 = vrot.slane %v542, 1
        %v965 = vrot.slane %v543, 1
        %v966 = vrot.slane %v544, 1
        %v967 = vrot.slane %v545, 1
        %vm968 = vcmp.lt.s32.totalorder %v547, 7
        %v969 = vsel %vm968, %v966, %v967
        %v970 = vsel %vm968, %v965, %v966
        %v971 = vsel %vm968, %v964, %v965
        %v972 = vsel %vm968, %v963, %v964
        %v973 = vsel %vm968, %v962, %v963
        %v974 = vsel %vm968, %v961, %v962
        %v975 = vsel %vm968, %v960, %v961
        %v976 = vsel %vm968, %v959, %v960
        %v977 = vsel %vm968, %v958, %v959
        %v978 = vsel %vm968, %v957, %v958
        %v979 = vsel %vm968, %v956, %v957
        %v980 = vsel %vm968, %v955, %v956
        %v981 = vsel %vm968, %v954, %v955
        %v982 = vsel %vm968, %v953, %v954
        %v983 = vsel %vm968, %v952, %v953
        %v984 = vsel %vm968, %v951, %v952
        %v985 = vsel %vm968, %v950, %v951
        %v986 = vsel %vm968, %v949, %v950
        %v987 = vsel %vm968, %v948, %v949
        %v988 = vsel %vm968, %v967, %v948
        %v989 = vsel %vm928, 1, 0
        %v990 = vsel %vm929, 1, 0
        %v991 = vsel %vm930, 1, 0
        %v992 = vsel %vm931, 1, 0
        %v993 = vsel %vm932, 1, 0
        %v994 = vsel %vm933, 1, 0
        %v995 = vsel %vm934, 1, 0
        %v996 = vsel %vm935, 1, 0
        %v997 = vsel %vm936, 1, 0
        %v998 = vsel %vm937, 1, 0
        %v999 = vsel %vm938, 1, 0
        %v1000 = vsel %vm939, 1, 0
        %v1001 = vsel %vm940, 1, 0
        %v1002 = vsel %vm941, 1, 0
        %v1003 = vsel %vm942, 1, 0
        %v1004 = vsel %vm943, 1, 0
        %v1005 = vsel %vm944, 1, 0
        %v1006 = vsel %vm945, 1, 0
        %v1007 = vsel %vm946, 1, 0
        %v1008 = vsel %vm947, 1, 0
        %vm1009 = vcmp.eq.s32.totalorder %v989, 1
        %vm1010 = vcmp.eq.s32.totalorder %v990, 1
        %vm1011 = vcmp.eq.s32.totalorder %v991, 1
        %vm1012 = vcmp.eq.s32.totalorder %v992, 1
        %vm1013 = vcmp.eq.s32.totalorder %v993, 1
        %vm1014 = vcmp.eq.s32.totalorder %v994, 1
        %vm1015 = vcmp.eq.s32.totalorder %v995, 1
        %vm1016 = vcmp.eq.s32.totalorder %v996, 1
        %vm1017 = vcmp.eq.s32.totalorder %v997, 1
        %vm1018 = vcmp.eq.s32.totalorder %v998, 1
        %vm1019 = vcmp.eq.s32.totalorder %v999, 1
        %vm1020 = vcmp.eq.s32.totalorder %v1000, 1
        %vm1021 = vcmp.eq.s32.totalorder %v1001, 1
        %vm1022 = vcmp.eq.s32.totalorder %v1002, 1
        %vm1023 = vcmp.eq.s32.totalorder %v1003, 1
        %vm1024 = vcmp.eq.s32.totalorder %v1004, 1
        %vm1025 = vcmp.eq.s32.totalorder %v1005, 1
        %vm1026 = vcmp.eq.s32.totalorder %v1006, 1
        %vm1027 = vcmp.eq.s32.totalorder %v1007, 1
        %vm1028 = vcmp.eq.s32.totalorder %v1008, 1
        %v1029 = vsel %vm1009, %v987, 0.0
        %v1030 = vsel %vm1010, %v986, 0.0
        %v1031 = vsel %vm1011, %v985, 0.0
        %v1032 = vsel %vm1012, %v984, 0.0
        %v1033 = vsel %vm1013, %v983, 0.0
        %v1034 = vsel %vm1014, %v982, 0.0
        %v1035 = vsel %vm1015, %v981, 0.0
        %v1036 = vsel %vm1016, %v980, 0.0
        %v1037 = vsel %vm1017, %v979, 0.0
        %v1038 = vsel %vm1018, %v978, 0.0
        %v1039 = vsel %vm1019, %v977, 0.0
        %v1040 = vsel %vm1020, %v976, 0.0
        %v1041 = vsel %vm1021, %v975, 0.0
        %v1042 = vsel %vm1022, %v974, 0.0
        %v1043 = vsel %vm1023, %v973, 0.0
        %v1044 = vsel %vm1024, %v972, 0.0
        %v1045 = vsel %vm1025, %v971, 0.0
        %v1046 = vsel %vm1026, %v970, 0.0
        %v1047 = vsel %vm1027, %v969, 0.0
        %v1048 = vsel %vm1028, %v988, 0.0
        %v1049 = vpack.c.bf16 %v909, %v908
        %v1050 = vpack.c.bf16 %v911, %v910
        %v1051 = vpack.c.bf16 %v913, %v912
        %v1052 = vpack.c.bf16 %v915, %v914
        %v1053 = vpack.c.bf16 %v917, %v916
        %v1054 = vpack.c.bf16 %v919, %v918
        %v1055 = vpack.c.bf16 %v921, %v920
        %v1056 = vpack.c.bf16 %v923, %v922
        %v1057 = vpack.c.bf16 %v925, %v924
        %v1058 = vpack.c.bf16 %v927, %v926
        %vm1059 = vcmask 31744
        %1060 = vst.msk [vmem:[#allocation2] sm:$0xff] %vm1059, %v1049
        %1061 = vst.msk [vmem:[#allocation2 + $0x8] sm:$0xff] %vm1059, %v1050
        %1062 = vst.msk [vmem:[#allocation2 + $0x10] sm:$0xff] %vm1059, %v1051
        %1063 = vst.msk [vmem:[#allocation2 + $0x18] sm:$0xff] %vm1059, %v1052
        %1064 = vst.msk [vmem:[#allocation2 + $0x20] sm:$0xff] %vm1059, %v1053
        %1065 = vst.msk [vmem:[#allocation2 + $0x28] sm:$0xff] %vm1059, %v1054
        %1066 = vst.msk [vmem:[#allocation2 + $0x30] sm:$0xff] %vm1059, %v1055
        %1067 = vst.msk [vmem:[#allocation2 + $0x38] sm:$0xff] %vm1059, %v1056
        %1068 = vst.msk [vmem:[#allocation2 + $0x40] sm:$0xff] %vm1059, %v1057
        %1069 = vst.msk [vmem:[#allocation2 + $0x48] sm:$0xff] %vm1059, %v1058
        %v1070 = vpack.c.bf16 %v527, %v526
        %v1071 = vpack.c.bf16 %v529, %v528
        %v1072 = vpack.c.bf16 %v531, %v530
        %v1073 = vpack.c.bf16 %v533, %v532
        %v1074 = vpack.c.bf16 %v535, %v534
        %v1075 = vpack.c.bf16 %v537, %v536
        %v1076 = vpack.c.bf16 %v539, %v538
        %v1077 = vpack.c.bf16 %v541, %v540
        %v1078 = vpack.c.bf16 %v543, %v542
        %v1079 = vpack.c.bf16 %v545, %v544
        %s1080 = scalar_lea.vmem [#allocation2], 80
        %1081 = vst.msk [vmem:[%s1080] sm:$0xff] %vm1059, %v1070
        %1082 = vst.msk [vmem:[%s1080 + $0x8] sm:$0xff] %vm1059, %v1071
        %1083 = vst.msk [vmem:[%s1080 + $0x10] sm:$0xff] %vm1059, %v1072
        %1084 = vst.msk [vmem:[%s1080 + $0x18] sm:$0xff] %vm1059, %v1073
        %1085 = vst.msk [vmem:[%s1080 + $0x20] sm:$0xff] %vm1059, %v1074
        %1086 = vst.msk [vmem:[%s1080 + $0x28] sm:$0xff] %vm1059, %v1075
        %1087 = vst.msk [vmem:[%s1080 + $0x30] sm:$0xff] %vm1059, %v1076
        %1088 = vst.msk [vmem:[%s1080 + $0x38] sm:$0xff] %vm1059, %v1077
        %1089 = vst.msk [vmem:[%s1080 + $0x40] sm:$0xff] %vm1059, %v1078
        %1090 = vst.msk [vmem:[%s1080 + $0x48] sm:$0xff] %vm1059, %v1079
        %v1091 = vpack.c.bf16 %v1030, %v1029
        %v1092 = vpack.c.bf16 %v1032, %v1031
        %v1093 = vpack.c.bf16 %v1034, %v1033
        %v1094 = vpack.c.bf16 %v1036, %v1035
        %v1095 = vpack.c.bf16 %v1038, %v1037
        %v1096 = vpack.c.bf16 %v1040, %v1039
        %v1097 = vpack.c.bf16 %v1042, %v1041
        %v1098 = vpack.c.bf16 %v1044, %v1043
        %v1099 = vpack.c.bf16 %v1046, %v1045
        %v1100 = vpack.c.bf16 %v1048, %v1047
        %s1101 = scalar_lea.vmem [#allocation2], 160
        %1102 = vst.msk [vmem:[%s1101] sm:$0xff] %vm1059, %v1091
        %1103 = vst.msk [vmem:[%s1101 + $0x8] sm:$0xff] %vm1059, %v1092
        %1104 = vst.msk [vmem:[%s1101 + $0x10] sm:$0xff] %vm1059, %v1093
        %1105 = vst.msk [vmem:[%s1101 + $0x18] sm:$0xff] %vm1059, %v1094
        %1106 = vst.msk [vmem:[%s1101 + $0x20] sm:$0xff] %vm1059, %v1095
        %1107 = vst.msk [vmem:[%s1101 + $0x28] sm:$0xff] %vm1059, %v1096
        %1108 = vst.msk [vmem:[%s1101 + $0x30] sm:$0xff] %vm1059, %v1097
        %1109 = vst.msk [vmem:[%s1101 + $0x38] sm:$0xff] %vm1059, %v1098
        %1110 = vst.msk [vmem:[%s1101 + $0x40] sm:$0xff] %vm1059, %v1099
        %1111 = vst.msk [vmem:[%s1101 + $0x48] sm:$0xff] %vm1059, %v1100
        %p1112 = scmp.eq.s32.totalorder %s26, 0
        // Predicated region
        $region49: #{tpu_custom_call.1} parent=47 // pred_check
          %p1113 = pneg %p1112
        $region50: #{tpu_custom_call.1} parent=47 // pred_check_branch
          %1115 = sbr.rel (%p1113) target = $region52
        $region51: #{tpu_custom_call.1} parent=47 // pred_region
          %1116 = vst.msk [vmem:[#allocation2] sm:$0xff] %vm1059, 0
          %1117 = vst.msk [vmem:[#allocation2 + $0x50] sm:$0xff] %vm1059, 0
          %1118 = vst.msk [vmem:[#allocation2 + $0xa0] sm:$0xff] %vm1059, 0
        $region52: #{tpu_custom_call.1} parent=47 // pred_fallthru
          _
        %p1119 = scmp.eq.s32.totalorder %s26, 1
        // Predicated region
        $region53: #{tpu_custom_call.1} parent=47 // pred_check
          %p1120 = pneg %p1119
        $region54: #{tpu_custom_call.1} parent=47 // pred_check_branch
          %1122 = sbr.rel (%p1120) target = $region56
        $region55: #{tpu_custom_call.1} parent=47 // pred_region
          %s1123 = scalar_lea.vmem [#allocation2], 72
          %1124 = vst.msk [vmem:[%s1123] sm:$0xff] %vm1059, 0
          %1125 = vst.msk [vmem:[%s1123 + $0x50] sm:$0xff] %vm1059, 0
          %1126 = vst.msk [vmem:[%s1123 + $0xa0] sm:$0xff] %vm1059, 0
        $region56: #{tpu_custom_call.1} parent=47 // pred_fallthru
          _
        %v1127 = vld [vmem:[#allocation2] sm:$0xff]
        %v1128 = vld [vmem:[#allocation2 + $0x8] sm:$0xff]
        %v1129 = vld [vmem:[#allocation2 + $0x10] sm:$0xff]
        %v1130 = vld [vmem:[#allocation2 + $0x18] sm:$0xff]
        %v1131 = vld [vmem:[#allocation2 + $0x20] sm:$0xff]
        %v1132 = vld [vmem:[#allocation2 + $0x28] sm:$0xff]
        %v1133 = vld [vmem:[#allocation2 + $0x30] sm:$0xff]
        %v1134 = vld [vmem:[#allocation2 + $0x38] sm:$0xff]
        %v1135 = vld [vmem:[%s1080] sm:$0xff]
        %v1136 = vld [vmem:[%s1080 + $0x8] sm:$0xff]
        %v1137 = vld [vmem:[%s1080 + $0x10] sm:$0xff]
        %v1138 = vld [vmem:[%s1080 + $0x18] sm:$0xff]
        %v1139 = vld [vmem:[%s1080 + $0x20] sm:$0xff]
        %v1140 = vld [vmem:[%s1080 + $0x28] sm:$0xff]
        %v1141 = vld [vmem:[%s1080 + $0x30] sm:$0xff]
        %v1142 = vld [vmem:[%s1080 + $0x38] sm:$0xff]
        %v1143 = vld [vmem:[%s1101] sm:$0xff]
        %v1144 = vld [vmem:[%s1101 + $0x8] sm:$0xff]
        %v1145 = vld [vmem:[%s1101 + $0x10] sm:$0xff]
        %v1146 = vld [vmem:[%s1101 + $0x18] sm:$0xff]
        %v1147 = vld [vmem:[%s1101 + $0x20] sm:$0xff]
        %v1148 = vld [vmem:[%s1101 + $0x28] sm:$0xff]
        %v1149 = vld [vmem:[%s1101 + $0x30] sm:$0xff]
        %v1150 = vld [vmem:[%s1101 + $0x38] sm:$0xff]
        %1159 = vrot.lane.b32.xlu0 %v1135, 4
        %v1160 = vpop.permute.xlu0 %1159
        %1161 = vrot.lane.b32.xlu0 %v1136, 4
        %v1162 = vpop.permute.xlu0 %1161
        %1163 = vrot.lane.b32.xlu0 %v1137, 4
        %v1164 = vpop.permute.xlu0 %1163
        %1165 = vrot.lane.b32.xlu0 %v1138, 4
        %v1166 = vpop.permute.xlu0 %1165
        %1167 = vrot.lane.b32.xlu0 %v1139, 4
        %v1168 = vpop.permute.xlu0 %1167
        %1169 = vrot.lane.b32.xlu0 %v1140, 4
        %v1170 = vpop.permute.xlu0 %1169
        %1171 = vrot.lane.b32.xlu0 %v1141, 4
        %v1172 = vpop.permute.xlu0 %1171
        %1173 = vrot.lane.b32.xlu0 %v1142, 4
        %v1174 = vpop.permute.xlu0 %1173
        %1183 = vrot.lane.b32.xlu0 %v1143, 8
        %v1184 = vpop.permute.xlu0 %1183
        %1185 = vrot.lane.b32.xlu0 %v1144, 8
        %v1186 = vpop.permute.xlu0 %1185
        %1187 = vrot.lane.b32.xlu0 %v1145, 8
        %v1188 = vpop.permute.xlu0 %1187
        %1189 = vrot.lane.b32.xlu0 %v1146, 8
        %v1190 = vpop.permute.xlu0 %1189
        %1191 = vrot.lane.b32.xlu0 %v1147, 8
        %v1192 = vpop.permute.xlu0 %1191
        %1193 = vrot.lane.b32.xlu0 %v1148, 8
        %v1194 = vpop.permute.xlu0 %1193
        %1195 = vrot.lane.b32.xlu0 %v1149, 8
        %v1196 = vpop.permute.xlu0 %1195
        %1197 = vrot.lane.b32.xlu0 %v1150, 8
        %v1198 = vpop.permute.xlu0 %1197
        %v1201 = vsel %vm1059, %v1127, %v1160
        %v1204 = vsel %vm1059, %v1128, %v1162
        %v1207 = vsel %vm1059, %v1129, %v1164
        %v1210 = vsel %vm1059, %v1130, %v1166
        %v1213 = vsel %vm1059, %v1131, %v1168
        %v1216 = vsel %vm1059, %v1132, %v1170
        %v1219 = vsel %vm1059, %v1133, %v1172
        %v1222 = vsel %vm1059, %v1134, %v1174
        %vm1223 = vcmask 64512
        %v1225 = vsel %vm1223, %v1201, %v1184
        %v1227 = vsel %vm1223, %v1204, %v1186
        %v1229 = vsel %vm1223, %v1207, %v1188
        %v1231 = vsel %vm1223, %v1210, %v1190
        %v1233 = vsel %vm1223, %v1213, %v1192
        %v1235 = vsel %vm1223, %v1216, %v1194
        %v1237 = vsel %vm1223, %v1219, %v1196
        %v1239 = vsel %vm1223, %v1222, %v1198
        %v1240 = vld [vmem:[%s3] sm:$0xf]
        %v1241 = vld [vmem:[%s3 + $0x4] sm:$0x3]
        %s1242 = scalar_lea.vmem [#allocation2], 8
        %v1243 = vld [vmem:[%s1242] sm:$0xff]
        %v1244 = vld [vmem:[%s1242 + $0x8] sm:$0xff]
        %v1245 = vld [vmem:[%s1242 + $0x10] sm:$0xff]
        %v1246 = vld [vmem:[%s1242 + $0x18] sm:$0xff]
        %v1247 = vld [vmem:[%s1242 + $0x20] sm:$0xff]
        %v1248 = vld [vmem:[%s1242 + $0x28] sm:$0xff]
        %v1249 = vld [vmem:[%s1242 + $0x30] sm:$0xff]
        %v1250 = vld [vmem:[%s1242 + $0x38] sm:$0xff]
        %s1251 = scalar_lea.vmem [#allocation2], 88
        %v1252 = vld [vmem:[%s1251] sm:$0xff]
        %v1253 = vld [vmem:[%s1251 + $0x8] sm:$0xff]
        %v1254 = vld [vmem:[%s1251 + $0x10] sm:$0xff]
        %v1255 = vld [vmem:[%s1251 + $0x18] sm:$0xff]
        %v1256 = vld [vmem:[%s1251 + $0x20] sm:$0xff]
        %v1257 = vld [vmem:[%s1251 + $0x28] sm:$0xff]
        %v1258 = vld [vmem:[%s1251 + $0x30] sm:$0xff]
        %v1259 = vld [vmem:[%s1251 + $0x38] sm:$0xff]
        %s1260 = scalar_lea.vmem [#allocation2], 168
        %v1261 = vld [vmem:[%s1260] sm:$0xff]
        %v1262 = vld [vmem:[%s1260 + $0x8] sm:$0xff]
        %v1263 = vld [vmem:[%s1260 + $0x10] sm:$0xff]
        %v1264 = vld [vmem:[%s1260 + $0x18] sm:$0xff]
        %v1265 = vld [vmem:[%s1260 + $0x20] sm:$0xff]
        %v1266 = vld [vmem:[%s1260 + $0x28] sm:$0xff]
        %v1267 = vld [vmem:[%s1260 + $0x30] sm:$0xff]
        %v1268 = vld [vmem:[%s1260 + $0x38] sm:$0xff]
        %1277 = vrot.lane.b32.xlu0 %v1252, 4
        %v1278 = vpop.permute.xlu0 %1277
        %1279 = vrot.lane.b32.xlu0 %v1253, 4
        %v1280 = vpop.permute.xlu0 %1279
        %1281 = vrot.lane.b32.xlu0 %v1254, 4
        %v1282 = vpop.permute.xlu0 %1281
        %1283 = vrot.lane.b32.xlu0 %v1255, 4
        %v1284 = vpop.permute.xlu0 %1283
        %1285 = vrot.lane.b32.xlu0 %v1256, 4
        %v1286 = vpop.permute.xlu0 %1285
        %1287 = vrot.lane.b32.xlu0 %v1257, 4
        %v1288 = vpop.permute.xlu0 %1287
        %1289 = vrot.lane.b32.xlu0 %v1258, 4
        %v1290 = vpop.permute.xlu0 %1289
        %1291 = vrot.lane.b32.xlu0 %v1259, 4
        %v1292 = vpop.permute.xlu0 %1291
        %1301 = vrot.lane.b32.xlu0 %v1261, 8
        %v1302 = vpop.permute.xlu0 %1301
        %1303 = vrot.lane.b32.xlu0 %v1262, 8
        %v1304 = vpop.permute.xlu0 %1303
        %1305 = vrot.lane.b32.xlu0 %v1263, 8
        %v1306 = vpop.permute.xlu0 %1305
        %1307 = vrot.lane.b32.xlu0 %v1264, 8
        %v1308 = vpop.permute.xlu0 %1307
        %1309 = vrot.lane.b32.xlu0 %v1265, 8
        %v1310 = vpop.permute.xlu0 %1309
        %1311 = vrot.lane.b32.xlu0 %v1266, 8
        %v1312 = vpop.permute.xlu0 %1311
        %1313 = vrot.lane.b32.xlu0 %v1267, 8
        %v1314 = vpop.permute.xlu0 %1313
        %1315 = vrot.lane.b32.xlu0 %v1268, 8
        %v1316 = vpop.permute.xlu0 %1315
        %v1319 = vsel %vm1059, %v1243, %v1278
        %v1322 = vsel %vm1059, %v1244, %v1280
        %v1325 = vsel %vm1059, %v1245, %v1282
        %v1328 = vsel %vm1059, %v1246, %v1284
        %v1331 = vsel %vm1059, %v1247, %v1286
        %v1334 = vsel %vm1059, %v1248, %v1288
        %v1337 = vsel %vm1059, %v1249, %v1290
        %v1340 = vsel %vm1059, %v1250, %v1292
        %v1342 = vsel %vm1223, %v1319, %v1302
        %v1344 = vsel %vm1223, %v1322, %v1304
        %v1346 = vsel %vm1223, %v1325, %v1306
        %v1348 = vsel %vm1223, %v1328, %v1308
        %v1350 = vsel %vm1223, %v1331, %v1310
        %v1352 = vsel %vm1223, %v1334, %v1312
        %v1354 = vsel %vm1223, %v1337, %v1314
        %v1356 = vsel %vm1223, %v1340, %v1316
        %s1357 = scalar_lea.vmem %s3, 8
        %v1358 = vld [vmem:[%s1357] sm:$0xf]
        %v1359 = vld [vmem:[%s1357 + $0x4] sm:$0x3]
        %v1362 = vunpack.c.l.b16 %v1358
        %v1363 = vunpack.c.l.b16 %v1359
        %v1364 = vpack.c.b16 %v1363, %v1362
        %vm1365 = vcmask 97280
        %v1366 = vsel %vm1365, %v1342, 0
        %v1368 = vsel %vm1365, %v1344, 0
        %v1370 = vsel %vm1365, %v1346, 0
        %v1372 = vsel %vm1365, %v1348, 0
        %v1374 = vsel %vm1365, %v1350, 0
        %v1376 = vsel %vm1365, %v1352, 0
        %v1378 = vsel %vm1365, %v1354, 0
        %v1380 = vsel %vm1365, %v1356, 0
        %vm1382 = vcmask 1045504
        %v1384 = vsel %vm1382, %v1364, 0
        %1386 = vmatprep.subr.bf16.mxu0 0
        %1387 = vmatpush1.bf16.msra.mxu0 %v1384
        %1388 = vmatprep.subr.bf16.mxu0 0
        %1389 = vmatpush1.bf16.msra.mxu0 0
        %1390 = vmatprep.subr.bf16.mxu0 0
        %1391 = vmatpush1.bf16.msra.mxu0 0
        %1392 = vmatprep.subr.bf16.mxu0 0
        %1393 = vmatpush1.bf16.msra.mxu0 0
        %1394 = vmatprep.subr.bf16.mxu0 0
        %1395 = vmatpush1.bf16.msra.mxu0 0
        %1396 = vmatprep.subr.bf16.mxu0 0
        %1397 = vmatpush1.bf16.msra.mxu0 0
        %1398 = vmatprep.subr.bf16.mxu0 0
        %1399 = vmatpush1.bf16.msra.mxu0 0
        %1400 = vmatprep.subr.bf16.mxu0 0
        %1401 = vmatpush1.bf16.msra.mxu0 0
        %1402 = vmatprep.subr.bf16.mxu0 0
        %1403 = vmatpush1.bf16.msra.mxu0 0
        %1404 = vmatprep.subr.bf16.mxu0 0
        %1405 = vmatpush1.bf16.msra.mxu0 0
        %1406 = vmatprep.subr.bf16.mxu0 0
        %1407 = vmatpush1.bf16.msra.mxu0 0
        %1408 = vmatprep.subr.bf16.mxu0 0
        %1409 = vmatpush1.bf16.msra.mxu0 0
        %1410 = vmatprep.subr.bf16.mxu0 0
        %1411 = vmatpush1.bf16.msra.mxu0 0
        %1412 = vmatprep.subr.bf16.mxu0 0
        %1413 = vmatpush1.bf16.msra.mxu0 0
        %1414 = vmatprep.subr.bf16.mxu0 0
        %1415 = vmatpush1.bf16.msra.mxu0 0
        %1416 = vmatprep.subr.bf16.mxu0 0
        %1417 = vmatpush1.bf16.msra.mxu0 0
        %1418 = vmatprep.mubr.bf16.mxu0 0
        %1419 = vmatmul.mubr.bf16.gmra.mrb[0].mxu0 %v1366
        %v1420 = vpop.f32.mrb[0].mxu0
        %v1421 = vadd.f32 0.0, %v1420
        %v1422 = vpop.f32.mrb[0].mxu0
        %v1423 = vpop.f32.mrb[0].mxu0
        %v1424 = vadd.f32 0.0, %v1423
        %v1425 = vpop.f32.mrb[0].mxu0
        %1426 = vmatprep.mubr.bf16.mxu0 0
        %1427 = vmatmul.mubr.bf16.gmra.mrb[0].mxu0 %v1368
        %v1428 = vpop.f32.mrb[0].mxu0
        %v1429 = vadd.f32 0.0, %v1428
        %v1430 = vpop.f32.mrb[0].mxu0
        %v1431 = vpop.f32.mrb[0].mxu0
        %v1432 = vadd.f32 0.0, %v1431
        %v1433 = vpop.f32.mrb[0].mxu0
        %1434 = vmatprep.mubr.bf16.mxu0 0
        %1435 = vmatmul.mubr.bf16.gmra.mrb[0].mxu0 %v1370
        %v1436 = vpop.f32.mrb[0].mxu0
        %v1437 = vadd.f32 0.0, %v1436
        %v1438 = vpop.f32.mrb[0].mxu0
        %v1439 = vpop.f32.mrb[0].mxu0
        %v1440 = vadd.f32 0.0, %v1439
        %v1441 = vpop.f32.mrb[0].mxu0
        %1442 = vmatprep.mubr.bf16.mxu0 0
        %1443 = vmatmul.mubr.bf16.gmra.mrb[0].mxu0 %v1372
        %v1444 = vpop.f32.mrb[0].mxu0
        %v1445 = vadd.f32 0.0, %v1444
        %v1446 = vpop.f32.mrb[0].mxu0
        %v1447 = vpop.f32.mrb[0].mxu0
        %v1448 = vadd.f32 0.0, %v1447
        %v1449 = vpop.f32.mrb[0].mxu0
        %1450 = vmatprep.mubr.bf16.mxu0 0
        %1451 = vmatmul.mubr.bf16.gmra.mrb[0].mxu0 %v1374
        %v1452 = vpop.f32.mrb[0].mxu0
        %v1453 = vadd.f32 0.0, %v1452
        %v1454 = vpop.f32.mrb[0].mxu0
        %v1455 = vpop.f32.mrb[0].mxu0
        %v1456 = vadd.f32 0.0, %v1455
        %v1457 = vpop.f32.mrb[0].mxu0
        %1458 = vmatprep.mubr.bf16.mxu0 0
        %1459 = vmatmul.mubr.bf16.gmra.mrb[0].mxu0 %v1376
        %v1460 = vpop.f32.mrb[0].mxu0
        %v1461 = vadd.f32 0.0, %v1460
        %v1462 = vpop.f32.mrb[0].mxu0
        %v1463 = vpop.f32.mrb[0].mxu0
        %v1464 = vadd.f32 0.0, %v1463
        %v1465 = vpop.f32.mrb[0].mxu0
        %1466 = vmatprep.mubr.bf16.mxu0 0
        %1467 = vmatmul.mubr.bf16.gmra.mrb[0].mxu0 %v1378
        %v1468 = vpop.f32.mrb[0].mxu0
        %v1469 = vadd.f32 0.0, %v1468
        %v1470 = vpop.f32.mrb[0].mxu0
        %v1471 = vpop.f32.mrb[0].mxu0
        %v1472 = vadd.f32 0.0, %v1471
        %v1473 = vpop.f32.mrb[0].mxu0
        %1474 = vmatprep.mubr.bf16.mxu0 0
        %1475 = vmatmul.mubr.bf16.gmra.mrb[0].mxu0 %v1380
        %v1476 = vpop.f32.mrb[0].mxu0
        %v1477 = vadd.f32 0.0, %v1476
        %v1478 = vpop.f32.mrb[0].mxu0
        %v1479 = vpop.f32.mrb[0].mxu0
        %v1480 = vadd.f32 0.0, %v1479
        %v1481 = vpop.f32.mrb[0].mxu0
        %1482 = vdwg.mxu0
        %v1485 = vunpack.c.l.b16 %v1240
        %v1486 = vunpack.c.l.b16 %v1241
        %v1487 = vpack.c.b16 %v1486, %v1485
        %v1488 = vsel %vm1365, %v1225, 0
        %v1490 = vsel %vm1365, %v1227, 0
        %v1492 = vsel %vm1365, %v1229, 0
        %v1494 = vsel %vm1365, %v1231, 0
        %v1496 = vsel %vm1365, %v1233, 0
        %v1498 = vsel %vm1365, %v1235, 0
        %v1500 = vsel %vm1365, %v1237, 0
        %v1502 = vsel %vm1365, %v1239, 0
        %v1505 = vsel %vm1382, %v1487, 0
        %1507 = vmatprep.subr.bf16.mxu0 0
        %1508 = vmatpush1.bf16.msra.mxu0 %v1505
        %1509 = vmatprep.subr.bf16.mxu0 0
        %1510 = vmatpush1.bf16.msra.mxu0 0
        %1511 = vmatprep.subr.bf16.mxu0 0
        %1512 = vmatpush1.bf16.msra.mxu0 0
        %1513 = vmatprep.subr.bf16.mxu0 0
        %1514 = vmatpush1.bf16.msra.mxu0 0
        %1515 = vmatprep.subr.bf16.mxu0 0
        %1516 = vmatpush1.bf16.msra.mxu0 0
        %1517 = vmatprep.subr.bf16.mxu0 0
        %1518 = vmatpush1.bf16.msra.mxu0 0
        %1519 = vmatprep.subr.bf16.mxu0 0
        %1520 = vmatpush1.bf16.msra.mxu0 0
        %1521 = vmatprep.subr.bf16.mxu0 0
        %1522 = vmatpush1.bf16.msra.mxu0 0
        %1523 = vmatprep.subr.bf16.mxu0 0
        %1524 = vmatpush1.bf16.msra.mxu0 0
        %1525 = vmatprep.subr.bf16.mxu0 0
        %1526 = vmatpush1.bf16.msra.mxu0 0
        %1527 = vmatprep.subr.bf16.mxu0 0
        %1528 = vmatpush1.bf16.msra.mxu0 0
        %1529 = vmatprep.subr.bf16.mxu0 0
        %1530 = vmatpush1.bf16.msra.mxu0 0
        %1531 = vmatprep.subr.bf16.mxu0 0
        %1532 = vmatpush1.bf16.msra.mxu0 0
        %1533 = vmatprep.subr.bf16.mxu0 0
        %1534 = vmatpush1.bf16.msra.mxu0 0
        %1535 = vmatprep.subr.bf16.mxu0 0
        %1536 = vmatpush1.bf16.msra.mxu0 0
        %1537 = vmatprep.subr.bf16.mxu0 0
        %1538 = vmatpush1.bf16.msra.mxu0 0
        %1539 = vmatprep.mubr.bf16.mxu0 0
        %1540 = vmatmul.mubr.bf16.gmra.mrb[0].mxu0 %v1488
        %v1541 = vpop.f32.mrb[0].mxu0
        %v1542 = vadd.f32 %v1421, %v1541
        %v1543 = vpop.f32.mrb[0].mxu0
        %v1544 = vpop.f32.mrb[0].mxu0
        %v1545 = vadd.f32 %v1424, %v1544
        %v1546 = vpop.f32.mrb[0].mxu0
        %1547 = vmatprep.mubr.bf16.mxu0 0
        %1548 = vmatmul.mubr.bf16.gmra.mrb[0].mxu0 %v1490
        %v1549 = vpop.f32.mrb[0].mxu0
        %v1550 = vadd.f32 %v1429, %v1549
        %v1551 = vpop.f32.mrb[0].mxu0
        %v1552 = vpop.f32.mrb[0].mxu0
        %v1553 = vadd.f32 %v1432, %v1552
        %v1554 = vpop.f32.mrb[0].mxu0
        %1555 = vmatprep.mubr.bf16.mxu0 0
        %1556 = vmatmul.mubr.bf16.gmra.mrb[0].mxu0 %v1492
        %v1557 = vpop.f32.mrb[0].mxu0
        %v1558 = vadd.f32 %v1437, %v1557
        %v1559 = vpop.f32.mrb[0].mxu0
        %v1560 = vpop.f32.mrb[0].mxu0
        %v1561 = vadd.f32 %v1440, %v1560
        %v1562 = vpop.f32.mrb[0].mxu0
        %1563 = vmatprep.mubr.bf16.mxu0 0
        %1564 = vmatmul.mubr.bf16.gmra.mrb[0].mxu0 %v1494
        %v1565 = vpop.f32.mrb[0].mxu0
        %v1566 = vadd.f32 %v1445, %v1565
        %v1567 = vpop.f32.mrb[0].mxu0
        %v1568 = vpop.f32.mrb[0].mxu0
        %v1569 = vadd.f32 %v1448, %v1568
        %v1570 = vpop.f32.mrb[0].mxu0
        %1571 = vmatprep.mubr.bf16.mxu0 0
        %1572 = vmatmul.mubr.bf16.gmra.mrb[0].mxu0 %v1496
        %v1573 = vpop.f32.mrb[0].mxu0
        %v1574 = vadd.f32 %v1453, %v1573
        %v1575 = vpop.f32.mrb[0].mxu0
        %v1576 = vpop.f32.mrb[0].mxu0
        %v1577 = vadd.f32 %v1456, %v1576
        %v1578 = vpop.f32.mrb[0].mxu0
        %1579 = vmatprep.mubr.bf16.mxu0 0
        %1580 = vmatmul.mubr.bf16.gmra.mrb[0].mxu0 %v1498
        %v1581 = vpop.f32.mrb[0].mxu0
        %v1582 = vadd.f32 %v1461, %v1581
        %v1583 = vpop.f32.mrb[0].mxu0
        %v1584 = vpop.f32.mrb[0].mxu0
        %v1585 = vadd.f32 %v1464, %v1584
        %v1586 = vpop.f32.mrb[0].mxu0
        %1587 = vmatprep.mubr.bf16.mxu0 0
        %1588 = vmatmul.mubr.bf16.gmra.mrb[0].mxu0 %v1500
        %v1589 = vpop.f32.mrb[0].mxu0
        %v1590 = vadd.f32 %v1469, %v1589
        %v1591 = vpop.f32.mrb[0].mxu0
        %v1592 = vpop.f32.mrb[0].mxu0
        %v1593 = vadd.f32 %v1472, %v1592
        %v1594 = vpop.f32.mrb[0].mxu0
        %1595 = vmatprep.mubr.bf16.mxu0 0
        %1596 = vmatmul.mubr.bf16.gmra.mrb[0].mxu0 %v1502
        %v1597 = vpop.f32.mrb[0].mxu0
        %v1598 = vadd.f32 %v1477, %v1597
        %v1599 = vpop.f32.mrb[0].mxu0
        %v1600 = vpop.f32.mrb[0].mxu0
        %v1601 = vadd.f32 %v1480, %v1600
        %v1602 = vpop.f32.mrb[0].mxu0
        %1603 = vdwg.mxu0
        %s1604 = scalar_lea.vmem [#allocation2], 16
        %v1605 = vld [vmem:[%s1604] sm:$0xff]
        %v1606 = vld [vmem:[%s1604 + $0x8] sm:$0xff]
        %v1607 = vld [vmem:[%s1604 + $0x10] sm:$0xff]
        %v1608 = vld [vmem:[%s1604 + $0x18] sm:$0xff]
        %v1609 = vld [vmem:[%s1604 + $0x20] sm:$0xff]
        %v1610 = vld [vmem:[%s1604 + $0x28] sm:$0xff]
        %v1611 = vld [vmem:[%s1604 + $0x30] sm:$0xff]
        %v1612 = vld [vmem:[%s1604 + $0x38] sm:$0xff]
        %s1613 = scalar_lea.vmem [#allocation2], 96
        %v1614 = vld [vmem:[%s1613] sm:$0xff]
        %v1615 = vld [vmem:[%s1613 + $0x8] sm:$0xff]
        %v1616 = vld [vmem:[%s1613 + $0x10] sm:$0xff]
        %v1617 = vld [vmem:[%s1613 + $0x18] sm:$0xff]
        %v1618 = vld [vmem:[%s1613 + $0x20] sm:$0xff]
        %v1619 = vld [vmem:[%s1613 + $0x28] sm:$0xff]
        %v1620 = vld [vmem:[%s1613 + $0x30] sm:$0xff]
        %v1621 = vld [vmem:[%s1613 + $0x38] sm:$0xff]
        %s1622 = scalar_lea.vmem [#allocation2], 176
        %v1623 = vld [vmem:[%s1622] sm:$0xff]
        %v1624 = vld [vmem:[%s1622 + $0x8] sm:$0xff]
        %v1625 = vld [vmem:[%s1622 + $0x10] sm:$0xff]
        %v1626 = vld [vmem:[%s1622 + $0x18] sm:$0xff]
        %v1627 = vld [vmem:[%s1622 + $0x20] sm:$0xff]
        %v1628 = vld [vmem:[%s1622 + $0x28] sm:$0xff]
        %v1629 = vld [vmem:[%s1622 + $0x30] sm:$0xff]
        %v1630 = vld [vmem:[%s1622 + $0x38] sm:$0xff]
        %1639 = vrot.lane.b32.xlu0 %v1614, 4
        %v1640 = vpop.permute.xlu0 %1639
        %1641 = vrot.lane.b32.xlu0 %v1615, 4
        %v1642 = vpop.permute.xlu0 %1641
        %1643 = vrot.lane.b32.xlu0 %v1616, 4
        %v1644 = vpop.permute.xlu0 %1643
        %1645 = vrot.lane.b32.xlu0 %v1617, 4
        %v1646 = vpop.permute.xlu0 %1645
        %1647 = vrot.lane.b32.xlu0 %v1618, 4
        %v1648 = vpop.permute.xlu0 %1647
        %1649 = vrot.lane.b32.xlu0 %v1619, 4
        %v1650 = vpop.permute.xlu0 %1649
        %1651 = vrot.lane.b32.xlu0 %v1620, 4
        %v1652 = vpop.permute.xlu0 %1651
        %1653 = vrot.lane.b32.xlu0 %v1621, 4
        %v1654 = vpop.permute.xlu0 %1653
        %1663 = vrot.lane.b32.xlu0 %v1623, 8
        %v1664 = vpop.permute.xlu0 %1663
        %1665 = vrot.lane.b32.xlu0 %v1624, 8
        %v1666 = vpop.permute.xlu0 %1665
        %1667 = vrot.lane.b32.xlu0 %v1625, 8
        %v1668 = vpop.permute.xlu0 %1667
        %1669 = vrot.lane.b32.xlu0 %v1626, 8
        %v1670 = vpop.permute.xlu0 %1669
        %1671 = vrot.lane.b32.xlu0 %v1627, 8
        %v1672 = vpop.permute.xlu0 %1671
        %1673 = vrot.lane.b32.xlu0 %v1628, 8
        %v1674 = vpop.permute.xlu0 %1673
        %1675 = vrot.lane.b32.xlu0 %v1629, 8
        %v1676 = vpop.permute.xlu0 %1675
        %1677 = vrot.lane.b32.xlu0 %v1630, 8
        %v1678 = vpop.permute.xlu0 %1677
        %v1681 = vsel %vm1059, %v1605, %v1640
        %v1684 = vsel %vm1059, %v1606, %v1642
        %v1687 = vsel %vm1059, %v1607, %v1644
        %v1690 = vsel %vm1059, %v1608, %v1646
        %v1693 = vsel %vm1059, %v1609, %v1648
        %v1696 = vsel %vm1059, %v1610, %v1650
        %v1699 = vsel %vm1059, %v1611, %v1652
        %v1702 = vsel %vm1059, %v1612, %v1654
        %v1704 = vsel %vm1223, %v1681, %v1664
        %v1706 = vsel %vm1223, %v1684, %v1666
        %v1708 = vsel %vm1223, %v1687, %v1668
        %v1710 = vsel %vm1223, %v1690, %v1670
        %v1712 = vsel %vm1223, %v1693, %v1672
        %v1714 = vsel %vm1223, %v1696, %v1674
        %v1716 = vsel %vm1223, %v1699, %v1676
        %v1718 = vsel %vm1223, %v1702, %v1678
        %s1719 = scalar_lea.vmem %s3, 16
        %v1720 = vld [vmem:[%s1719] sm:$0xf]
        %v1721 = vld [vmem:[%s1719 + $0x4] sm:$0x3]
        %v1724 = vunpack.c.l.b16 %v1720
        %v1725 = vunpack.c.l.b16 %v1721
        %v1726 = vpack.c.b16 %v1725, %v1724
        %v1727 = vsel %vm1365, %v1704, 0
        %v1729 = vsel %vm1365, %v1706, 0
        %v1731 = vsel %vm1365, %v1708, 0
        %v1733 = vsel %vm1365, %v1710, 0
        %v1735 = vsel %vm1365, %v1712, 0
        %v1737 = vsel %vm1365, %v1714, 0
        %v1739 = vsel %vm1365, %v1716, 0
        %v1741 = vsel %vm1365, %v1718, 0
        %v1744 = vsel %vm1382, %v1726, 0
        %1746 = vmatprep.subr.bf16.mxu0 0
        %1747 = vmatpush1.bf16.msra.mxu0 %v1744
        %1748 = vmatprep.subr.bf16.mxu0 0
        %1749 = vmatpush1.bf16.msra.mxu0 0
        %1750 = vmatprep.subr.bf16.mxu0 0
        %1751 = vmatpush1.bf16.msra.mxu0 0
        %1752 = vmatprep.subr.bf16.mxu0 0
        %1753 = vmatpush1.bf16.msra.mxu0 0
        %1754 = vmatprep.subr.bf16.mxu0 0
        %1755 = vmatpush1.bf16.msra.mxu0 0
        %1756 = vmatprep.subr.bf16.mxu0 0
        %1757 = vmatpush1.bf16.msra.mxu0 0
        %1758 = vmatprep.subr.bf16.mxu0 0
        %1759 = vmatpush1.bf16.msra.mxu0 0
        %1760 = vmatprep.subr.bf16.mxu0 0
        %1761 = vmatpush1.bf16.msra.mxu0 0
        %1762 = vmatprep.subr.bf16.mxu0 0
        %1763 = vmatpush1.bf16.msra.mxu0 0
        %1764 = vmatprep.subr.bf16.mxu0 0
        %1765 = vmatpush1.bf16.msra.mxu0 0
        %1766 = vmatprep.subr.bf16.mxu0 0
        %1767 = vmatpush1.bf16.msra.mxu0 0
        %1768 = vmatprep.subr.bf16.mxu0 0
        %1769 = vmatpush1.bf16.msra.mxu0 0
        %1770 = vmatprep.subr.bf16.mxu0 0
        %1771 = vmatpush1.bf16.msra.mxu0 0
        %1772 = vmatprep.subr.bf16.mxu0 0
        %1773 = vmatpush1.bf16.msra.mxu0 0
        %1774 = vmatprep.subr.bf16.mxu0 0
        %1775 = vmatpush1.bf16.msra.mxu0 0
        %1776 = vmatprep.subr.bf16.mxu0 0
        %1777 = vmatpush1.bf16.msra.mxu0 0
        %1778 = vmatprep.mubr.bf16.mxu0 0
        %1779 = vmatmul.mubr.bf16.gmra.mrb[0].mxu0 %v1727
        %v1780 = vpop.f32.mrb[0].mxu0
        %v1781 = vadd.f32 0.0, %v1780
        %v1782 = vpop.f32.mrb[0].mxu0
        %v1783 = vpop.f32.mrb[0].mxu0
        %v1784 = vadd.f32 0.0, %v1783
        %v1785 = vpop.f32.mrb[0].mxu0
        %1786 = vmatprep.mubr.bf16.mxu0 0
        %1787 = vmatmul.mubr.bf16.gmra.mrb[0].mxu0 %v1729
        %v1788 = vpop.f32.mrb[0].mxu0
        %v1789 = vadd.f32 0.0, %v1788
        %v1790 = vpop.f32.mrb[0].mxu0
        %v1791 = vpop.f32.mrb[0].mxu0
        %v1792 = vadd.f32 0.0, %v1791
        %v1793 = vpop.f32.mrb[0].mxu0
        %1794 = vmatprep.mubr.bf16.mxu0 0
        %1795 = vmatmul.mubr.bf16.gmra.mrb[0].mxu0 %v1731
        %v1796 = vpop.f32.mrb[0].mxu0
        %v1797 = vadd.f32 0.0, %v1796
        %v1798 = vpop.f32.mrb[0].mxu0
        %v1799 = vpop.f32.mrb[0].mxu0
        %v1800 = vadd.f32 0.0, %v1799
        %v1801 = vpop.f32.mrb[0].mxu0
        %1802 = vmatprep.mubr.bf16.mxu0 0
        %1803 = vmatmul.mubr.bf16.gmra.mrb[0].mxu0 %v1733
        %v1804 = vpop.f32.mrb[0].mxu0
        %v1805 = vadd.f32 0.0, %v1804
        %v1806 = vpop.f32.mrb[0].mxu0
        %v1807 = vpop.f32.mrb[0].mxu0
        %v1808 = vadd.f32 0.0, %v1807
        %v1809 = vpop.f32.mrb[0].mxu0
        %1810 = vmatprep.mubr.bf16.mxu0 0
        %1811 = vmatmul.mubr.bf16.gmra.mrb[0].mxu0 %v1735
        %v1812 = vpop.f32.mrb[0].mxu0
        %v1813 = vadd.f32 0.0, %v1812
        %v1814 = vpop.f32.mrb[0].mxu0
        %v1815 = vpop.f32.mrb[0].mxu0
        %v1816 = vadd.f32 0.0, %v1815
        %v1817 = vpop.f32.mrb[0].mxu0
        %1818 = vmatprep.mubr.bf16.mxu0 0
        %1819 = vmatmul.mubr.bf16.gmra.mrb[0].mxu0 %v1737
        %v1820 = vpop.f32.mrb[0].mxu0
        %v1821 = vadd.f32 0.0, %v1820
        %v1822 = vpop.f32.mrb[0].mxu0
        %v1823 = vpop.f32.mrb[0].mxu0
        %v1824 = vadd.f32 0.0, %v1823
        %v1825 = vpop.f32.mrb[0].mxu0
        %1826 = vmatprep.mubr.bf16.mxu0 0
        %1827 = vmatmul.mubr.bf16.gmra.mrb[0].mxu0 %v1739
        %v1828 = vpop.f32.mrb[0].mxu0
        %v1829 = vadd.f32 0.0, %v1828
        %v1830 = vpop.f32.mrb[0].mxu0
        %v1831 = vpop.f32.mrb[0].mxu0
        %v1832 = vadd.f32 0.0, %v1831
        %v1833 = vpop.f32.mrb[0].mxu0
        %1834 = vmatprep.mubr.bf16.mxu0 0
        %1835 = vmatmul.mubr.bf16.gmra.mrb[0].mxu0 %v1741
        %v1836 = vpop.f32.mrb[0].mxu0
        %v1837 = vadd.f32 0.0, %v1836
        %v1838 = vpop.f32.mrb[0].mxu0
        %v1839 = vpop.f32.mrb[0].mxu0
        %v1840 = vadd.f32 0.0, %v1839
        %v1841 = vpop.f32.mrb[0].mxu0
        %1842 = vdwg.mxu0
        %v1843 = vadd.f32 %v1542, %v1781
        %v1844 = vadd.f32 %v1545, %v1784
        %v1845 = vadd.f32 %v1550, %v1789
        %v1846 = vadd.f32 %v1553, %v1792
        %v1847 = vadd.f32 %v1558, %v1797
        %v1848 = vadd.f32 %v1561, %v1800
        %v1849 = vadd.f32 %v1566, %v1805
        %v1850 = vadd.f32 %v1569, %v1808
        %v1851 = vadd.f32 %v1574, %v1813
        %v1852 = vadd.f32 %v1577, %v1816
        %v1853 = vadd.f32 %v1582, %v1821
        %v1854 = vadd.f32 %v1585, %v1824
        %v1855 = vadd.f32 %v1590, %v1829
        %v1856 = vadd.f32 %v1593, %v1832
        %v1857 = vadd.f32 %v1598, %v1837
        %v1858 = vadd.f32 %v1601, %v1840
        %v1859 = vld [vmem:[%s4] sm:$0x1]
        %v1861 = vlaneseq
        %v1862 = vshrl.u32 %v1861, 7
        %v1863 = vsub.s32 0, %v1862
        %v1864 = vrot.slane %v1859, %v1863
        %v1866 = vadd.f32 %v1843, %v1864
        %v1867 = vadd.f32 %v1844, %v1864
        %v1868 = vadd.f32 %v1845, %v1864
        %v1869 = vadd.f32 %v1846, %v1864
        %v1870 = vadd.f32 %v1847, %v1864
        %v1871 = vadd.f32 %v1848, %v1864
        %v1872 = vadd.f32 %v1849, %v1864
        %v1873 = vadd.f32 %v1850, %v1864
        %v1874 = vadd.f32 %v1851, %v1864
        %v1875 = vadd.f32 %v1852, %v1864
        %v1876 = vadd.f32 %v1853, %v1864
        %v1877 = vadd.f32 %v1854, %v1864
        %v1878 = vadd.f32 %v1855, %v1864
        %v1879 = vadd.f32 %v1856, %v1864
        %v1880 = vadd.f32 %v1857, %v1864
        %v1881 = vadd.f32 %v1858, %v1864
        %v1882 = vmax.f32 %v1866, 0.0
        %v1883 = vmax.f32 %v1867, 0.0
        %v1884 = vmax.f32 %v1868, 0.0
        %v1885 = vmax.f32 %v1869, 0.0
        %v1886 = vmax.f32 %v1870, 0.0
        %v1887 = vmax.f32 %v1871, 0.0
        %v1888 = vmax.f32 %v1872, 0.0
        %v1889 = vmax.f32 %v1873, 0.0
        %v1890 = vmax.f32 %v1874, 0.0
        %v1891 = vmax.f32 %v1875, 0.0
        %v1892 = vmax.f32 %v1876, 0.0
        %v1893 = vmax.f32 %v1877, 0.0
        %v1894 = vmax.f32 %v1878, 0.0
        %v1895 = vmax.f32 %v1879, 0.0
        %v1896 = vmax.f32 %v1880, 0.0
        %v1897 = vmax.f32 %v1881, 0.0
        %v1898 = vpack.c.bf16 %v1883, %v1882
        %v1899 = vpack.c.bf16 %v1885, %v1884
        %v1900 = vpack.c.bf16 %v1887, %v1886
        %v1901 = vpack.c.bf16 %v1889, %v1888
        %v1902 = vpack.c.bf16 %v1891, %v1890
        %v1903 = vpack.c.bf16 %v1893, %v1892
        %v1904 = vpack.c.bf16 %v1895, %v1894
        %v1905 = vpack.c.bf16 %v1897, %v1896
        %v1906 = vld [vmem:[%s5] sm:$0x3]
        %v1907 = vld [vmem:[%s6] sm:$0x1]
        %v1909 = vlaneseq
        %v1910 = vshrl.u32 %v1909, 7
        %v1911 = vsub.s32 0, %v1910
        %v1912 = vrot.slane %v1907, %v1911
        %v1915 = vsel %vm1059, %v1898, 0
        %v1918 = vsel %vm1059, %v1899, 0
        %v1921 = vsel %vm1059, %v1900, 0
        %v1924 = vsel %vm1059, %v1901, 0
        %v1927 = vsel %vm1059, %v1902, 0
        %v1930 = vsel %vm1059, %v1903, 0
        %v1933 = vsel %vm1059, %v1904, 0
        %v1936 = vsel %vm1059, %v1905, 0
        %vm1938 = vcmask 1041408
        %v1940 = vsel %vm1938, %v1906, 0
        %1942 = vmatprep.subr.bf16.mxu0 0
        %1943 = vmatpush1.bf16.msra.mxu0 %v1940
        %1944 = vmatprep.subr.bf16.mxu0 0
        %1945 = vmatpush1.bf16.msra.mxu0 0
        %1946 = vmatprep.subr.bf16.mxu0 0
        %1947 = vmatpush1.bf16.msra.mxu0 0
        %1948 = vmatprep.subr.bf16.mxu0 0
        %1949 = vmatpush1.bf16.msra.mxu0 0
        %1950 = vmatprep.subr.bf16.mxu0 0
        %1951 = vmatpush1.bf16.msra.mxu0 0
        %1952 = vmatprep.subr.bf16.mxu0 0
        %1953 = vmatpush1.bf16.msra.mxu0 0
        %1954 = vmatprep.subr.bf16.mxu0 0
        %1955 = vmatpush1.bf16.msra.mxu0 0
        %1956 = vmatprep.subr.bf16.mxu0 0
        %1957 = vmatpush1.bf16.msra.mxu0 0
        %1958 = vmatprep.subr.bf16.mxu0 0
        %1959 = vmatpush1.bf16.msra.mxu0 0
        %1960 = vmatprep.subr.bf16.mxu0 0
        %1961 = vmatpush1.bf16.msra.mxu0 0
        %1962 = vmatprep.subr.bf16.mxu0 0
        %1963 = vmatpush1.bf16.msra.mxu0 0
        %1964 = vmatprep.subr.bf16.mxu0 0
        %1965 = vmatpush1.bf16.msra.mxu0 0
        %1966 = vmatprep.subr.bf16.mxu0 0
        %1967 = vmatpush1.bf16.msra.mxu0 0
        %1968 = vmatprep.subr.bf16.mxu0 0
        %1969 = vmatpush1.bf16.msra.mxu0 0
        %1970 = vmatprep.subr.bf16.mxu0 0
        %1971 = vmatpush1.bf16.msra.mxu0 0
        %1972 = vmatprep.subr.bf16.mxu0 0
        %1973 = vmatpush1.bf16.msra.mxu0 0
        %1974 = vmatprep.mubr.bf16.mxu0 0
        %1975 = vmatmul.mubr.bf16.gmra.mrb[0].mxu0 %v1915
        %v1976 = vpop.f32.mrb[0].mxu0
        %v1977 = vadd.f32 %v1912, %v1976
        %v1978 = vpop.f32.mrb[0].mxu0
        %v1979 = vpop.f32.mrb[0].mxu0
        %v1980 = vadd.f32 %v1912, %v1979
        %v1981 = vpop.f32.mrb[0].mxu0
        %1982 = vmatprep.mubr.bf16.mxu0 0
        %1983 = vmatmul.mubr.bf16.gmra.mrb[0].mxu0 %v1918
        %v1984 = vpop.f32.mrb[0].mxu0
        %v1985 = vadd.f32 %v1912, %v1984
        %v1986 = vpop.f32.mrb[0].mxu0
        %v1987 = vpop.f32.mrb[0].mxu0
        %v1988 = vadd.f32 %v1912, %v1987
        %v1989 = vpop.f32.mrb[0].mxu0
        %1990 = vmatprep.mubr.bf16.mxu0 0
        %1991 = vmatmul.mubr.bf16.gmra.mrb[0].mxu0 %v1921
        %v1992 = vpop.f32.mrb[0].mxu0
        %v1993 = vadd.f32 %v1912, %v1992
        %v1994 = vpop.f32.mrb[0].mxu0
        %v1995 = vpop.f32.mrb[0].mxu0
        %v1996 = vadd.f32 %v1912, %v1995
        %v1997 = vpop.f32.mrb[0].mxu0
        %1998 = vmatprep.mubr.bf16.mxu0 0
        %1999 = vmatmul.mubr.bf16.gmra.mrb[0].mxu0 %v1924
        %v2000 = vpop.f32.mrb[0].mxu0
        %v2001 = vadd.f32 %v1912, %v2000
        %v2002 = vpop.f32.mrb[0].mxu0
        %v2003 = vpop.f32.mrb[0].mxu0
        %v2004 = vadd.f32 %v1912, %v2003
        %v2005 = vpop.f32.mrb[0].mxu0
        %2006 = vmatprep.mubr.bf16.mxu0 0
        %2007 = vmatmul.mubr.bf16.gmra.mrb[0].mxu0 %v1927
        %v2008 = vpop.f32.mrb[0].mxu0
        %v2009 = vadd.f32 %v1912, %v2008
        %v2010 = vpop.f32.mrb[0].mxu0
        %v2011 = vpop.f32.mrb[0].mxu0
        %v2012 = vadd.f32 %v1912, %v2011
        %v2013 = vpop.f32.mrb[0].mxu0
        %2014 = vmatprep.mubr.bf16.mxu0 0
        %2015 = vmatmul.mubr.bf16.gmra.mrb[0].mxu0 %v1930
        %v2016 = vpop.f32.mrb[0].mxu0
        %v2017 = vadd.f32 %v1912, %v2016
        %v2018 = vpop.f32.mrb[0].mxu0
        %v2019 = vpop.f32.mrb[0].mxu0
        %v2020 = vadd.f32 %v1912, %v2019
        %v2021 = vpop.f32.mrb[0].mxu0
        %2022 = vmatprep.mubr.bf16.mxu0 0
        %2023 = vmatmul.mubr.bf16.gmra.mrb[0].mxu0 %v1933
        %v2024 = vpop.f32.mrb[0].mxu0
        %v2025 = vadd.f32 %v1912, %v2024
        %v2026 = vpop.f32.mrb[0].mxu0
        %v2027 = vpop.f32.mrb[0].mxu0
        %v2028 = vadd.f32 %v1912, %v2027
        %v2029 = vpop.f32.mrb[0].mxu0
        %2030 = vmatprep.mubr.bf16.mxu0 0
        %2031 = vmatmul.mubr.bf16.gmra.mrb[0].mxu0 %v1936
        %v2032 = vpop.f32.mrb[0].mxu0
        %v2033 = vadd.f32 %v1912, %v2032
        %v2034 = vpop.f32.mrb[0].mxu0
        %v2035 = vpop.f32.mrb[0].mxu0
        %v2036 = vadd.f32 %v1912, %v2035
        %v2037 = vpop.f32.mrb[0].mxu0
        %2038 = vdwg.mxu0
        %s2039 = sadd.s32 %s293, 1
        %s2040 = smul.u32 %s2039, 2
        %s2041 = smul.addr %s2040, 4
        %s2042 = scalar_lea.vmem %s290, %s2041
        %v2043 = vld [vmem:[%s2042] sm:$0xf]
        %v2044 = vld [vmem:[%s2042 + $0x4] sm:$0xf]
        %v2045 = vld [vmem:[%s2042 + $0x8] sm:$0xf]
        %v2046 = vld [vmem:[%s2042 + $0xc] sm:$0xf]
        %v2047 = vld [vmem:[%s2042 + $0x10] sm:$0xf]
        %v2048 = vld [vmem:[%s2042 + $0x14] sm:$0xf]
        %v2049 = vld [vmem:[%s2042 + $0x18] sm:$0xf]
        %v2050 = vld [vmem:[%s2042 + $0x1c] sm:$0xf]
        %v2051 = vld [vmem:[%s2042 + $0x20] sm:$0xf]
        %v2052 = vld [vmem:[%s2042 + $0x24] sm:$0xf]
        %v2053 = vld [vmem:[%s2042 + $0x28] sm:$0xf]
        %v2054 = vld [vmem:[%s2042 + $0x2c] sm:$0xf]
        %v2055 = vld [vmem:[%s2042 + $0x30] sm:$0xf]
        %v2056 = vld [vmem:[%s2042 + $0x34] sm:$0xf]
        %v2057 = vld [vmem:[%s2042 + $0x38] sm:$0xf]
        %v2058 = vld [vmem:[%s2042 + $0x3c] sm:$0xf]
        %v2059 = vunpack.c.l.bf16 %v2043
        %v2060 = vunpack.c.l.bf16 %v2044
        %v2061 = vunpack.c.l.bf16 %v2045
        %v2062 = vunpack.c.l.bf16 %v2046
        %v2063 = vunpack.c.l.bf16 %v2047
        %v2064 = vunpack.c.l.bf16 %v2048
        %v2065 = vunpack.c.l.bf16 %v2049
        %v2066 = vunpack.c.l.bf16 %v2050
        %v2067 = vunpack.c.l.bf16 %v2051
        %v2068 = vunpack.c.l.bf16 %v2052
        %v2069 = vunpack.c.l.bf16 %v2053
        %v2070 = vunpack.c.l.bf16 %v2054
        %v2071 = vunpack.c.l.bf16 %v2055
        %v2072 = vunpack.c.l.bf16 %v2056
        %v2073 = vunpack.c.l.bf16 %v2057
        %v2074 = vunpack.c.l.bf16 %v2058
        %v2075 = vadd.f32 %v1977, %v2059
        %v2076 = vadd.f32 %v1980, %v2060
        %v2077 = vadd.f32 %v1985, %v2061
        %v2078 = vadd.f32 %v1988, %v2062
        %v2079 = vadd.f32 %v1993, %v2063
        %v2080 = vadd.f32 %v1996, %v2064
        %v2081 = vadd.f32 %v2001, %v2065
        %v2082 = vadd.f32 %v2004, %v2066
        %v2083 = vadd.f32 %v2009, %v2067
        %v2084 = vadd.f32 %v2012, %v2068
        %v2085 = vadd.f32 %v2017, %v2069
        %v2086 = vadd.f32 %v2020, %v2070
        %v2087 = vadd.f32 %v2025, %v2071
        %v2088 = vadd.f32 %v2028, %v2072
        %v2089 = vadd.f32 %v2033, %v2073
        %v2090 = vadd.f32 %v2036, %v2074
        %v2091 = vmax.f32 %v2075, 0.0
        %v2092 = vmax.f32 %v2076, 0.0
        %v2093 = vmax.f32 %v2077, 0.0
        %v2094 = vmax.f32 %v2078, 0.0
        %v2095 = vmax.f32 %v2079, 0.0
        %v2096 = vmax.f32 %v2080, 0.0
        %v2097 = vmax.f32 %v2081, 0.0
        %v2098 = vmax.f32 %v2082, 0.0
        %v2099 = vmax.f32 %v2083, 0.0
        %v2100 = vmax.f32 %v2084, 0.0
        %v2101 = vmax.f32 %v2085, 0.0
        %v2102 = vmax.f32 %v2086, 0.0
        %v2103 = vmax.f32 %v2087, 0.0
        %v2104 = vmax.f32 %v2088, 0.0
        %v2105 = vmax.f32 %v2089, 0.0
        %v2106 = vmax.f32 %v2090, 0.0
        %2107 = vst.msk [vmem:[%s285] sm:$0xff] %vm382, %v2091
        %2108 = vst.msk [vmem:[%s285 + $0x8] sm:$0xff] %vm382, %v2092
        %2109 = vst.msk [vmem:[%s285 + $0x10] sm:$0xff] %vm382, %v2093
        %2110 = vst.msk [vmem:[%s285 + $0x18] sm:$0xff] %vm382, %v2094
        %2111 = vst.msk [vmem:[%s285 + $0x20] sm:$0xff] %vm382, %v2095
        %2112 = vst.msk [vmem:[%s285 + $0x28] sm:$0xff] %vm382, %v2096
        %2113 = vst.msk [vmem:[%s285 + $0x30] sm:$0xff] %vm382, %v2097
        %2114 = vst.msk [vmem:[%s285 + $0x38] sm:$0xff] %vm382, %v2098
        %2115 = vst.msk [vmem:[%s285 + $0x40] sm:$0xff] %vm382, %v2099
        %2116 = vst.msk [vmem:[%s285 + $0x48] sm:$0xff] %vm382, %v2100
        %2117 = vst.msk [vmem:[%s285 + $0x50] sm:$0xff] %vm382, %v2101
        %2118 = vst.msk [vmem:[%s285 + $0x58] sm:$0xff] %vm382, %v2102
        %2119 = vst.msk [vmem:[%s285 + $0x60] sm:$0xff] %vm382, %v2103
        %2120 = vst.msk [vmem:[%s285 + $0x68] sm:$0xff] %vm382, %v2104
        %2121 = vst.msk [vmem:[%s285 + $0x70] sm:$0xff] %vm382, %v2105
        %2122 = vst.msk [vmem:[%s285 + $0x78] sm:$0xff] %vm382, %v2106
        %s2123 = sand.u32 %s195, 1
        %s2124 = scalar_lea.sflag [#allocation4], %s2123
        %s2125 = sand.u32 %s195, 1
        %s2126 = smul.addr %s2125, 128
        %s2127 = scalar_lea.vmem [#allocation3], %s2126
        // Predicated region
        $region57: #{tpu_custom_call.1} parent=47 // pred_check
          %p2128 = pneg %p205
        $region58: #{tpu_custom_call.1} parent=47 // pred_check_branch
          %2130 = sbr.rel (%p2128) target = $region60
        $region59: #{tpu_custom_call.1} parent=47 // pred_region
          %s2131 = smul.u32 8, %s26
          %s2133 = ssub.s32 2048, 2048
          %2134 = vsyncadd %s2124, %s2133
          %s2135 = smul.addr %s2131, 2
          %s2136 = smul.addr %s25, 32
          %s2137 = sadd.s32 %s2135, %s2136
          %s2138 = smul.addr %s2137, 128
          %s2139 = scalar_lea.hbm %s7, %s2138
          %s2140 = sshll.u32 %s2127, 4
          %s2141 = int_to_ptr.vmem [resolvable:$true] %s2140
          %2146 = dma.vmem_to_hbm [thread:$0]  %s2141, 2048, %s2139, %s2124, 128, 128, 8
        $region60: #{tpu_custom_call.1} parent=47 // pred_fallthru
          _
      $region48: #{tpu_custom_call.1} parent=5 // pred_fallthru
        _
      %p2147 = scmp.le.s32.totalorder 2, %s16
      // Predicated region
      $region61: #{tpu_custom_call.1} parent=5 // pred_check
        %p2148 = pneg %p2147
      $region62: #{tpu_custom_call.1} parent=5 // pred_check_branch
        %2150 = sbr.rel (%p2148) target = $region64
      $region63: #{tpu_custom_call.1} parent=5 // pred_region
        %s2151 = ssub.s32 %s16, 2
        // Predicated region
        $region65: #{tpu_custom_call.1} parent=63 // pred_check
          %p2152 = pneg %p211
        $region66: #{tpu_custom_call.1} parent=63 // pred_check_branch
          %2154 = sbr.rel (%p2152) target = $region68
        $region67: #{tpu_custom_call.1} parent=63 // pred_region
          %s2155 = sand.u32 %s196, 1
          %s2156 = scalar_lea.sflag [#allocation4], %s2155
          %s2157 = sand.u32 %s196, 1
          %s2158 = smul.addr %s2157, 128
          %s2159 = scalar_lea.vmem [#allocation3], %s2158
          %2160 = dma.done %s2156, 2048
        $region68: #{tpu_custom_call.1} parent=63 // pred_fallthru
          _
      $region64: #{tpu_custom_call.1} parent=5 // pred_fallthru
        _
    $region6: #{tpu_custom_call.1} parent=1 // loop_footer
      %s20 = sadd.s32 1, %s16
    $region7: #{tpu_custom_call.1} parent=1 // loop_footer_branch
      %15 = sbr.rel target = $region3
    $region8: #{tpu_custom_call.1} parent=1 // loop_exit
      _
    %2161 = vsyncpa [#allocation4], 1
    %s2162 = scalar_lea.sflag [#allocation4], 1
    %2163 = vsyncpa %s2162, 1

</llo_original>
